<compile_context>
chip_gen: v7x
topology: tpu7x:2x2x1
jax: 0.10.0
libtpu: 0.0.40
codegen_flags: <defaults>
</compile_context>

<pallas_src>
import math
import functools

import jax
import jax.numpy as jnp
from jax.experimental import pallas as pl
from jax.experimental.pallas import tpu as pltpu

D_MODEL = 48
NHEAD = 4
HEAD_DIM = D_MODEL // NHEAD        # 12
NUM_LAYERS = 2
T2V_DIM = 8
ACCEL_DIM = 3
FEAT_DIM = ACCEL_DIM + T2V_DIM     # 11 (= feat_dim in the PyTorch module)
DIM_FF = 128
NUM_CLASSES = 2
LN_EPS = 1e-5                      # nn.LayerNorm default eps

PACK_W = 8                         # packed input lanes: [accel(3) | time(1) | pad(4)]
COL_TIME = ACCEL_DIM               # 3

# rows inside the "misc" parameter blob (MISC_ROWS, D_MODEL)
MISC_ROWS = 16
R_T2V_W, R_T2V_B = 0, 1
R_WPA = 2                          # 3 rows
R_WPT = 5                          # 8 rows
R_BP, R_LN0G, R_LN0B = 13, 14, 15

# rows inside the per-layer "vecs" blob (NUM_LAYERS, 8, DIM_FF)
V_BO, V_LN1G, V_LN1B, V_B1, V_B2, V_LN2G, V_LN2B = 0, 1, 2, 3, 4, 5, 6


def _layernorm(x, g, b):
    mu = jnp.mean(x, axis=-1, keepdims=True)
    xc = x - mu
    var = jnp.mean(xc * xc, axis=-1, keepdims=True)
    return xc * jax.lax.rsqrt(var + LN_EPS) * g + b


# ----------------------------------------------------------------------------
# Pallas kernel: one grid step == a block of `bb` batch elements (bb*T rows).
# ----------------------------------------------------------------------------
def _fall_kernel(x_ref, kb_ref, misc_ref, wqkv_ref, bqkv_ref, wo_ref,
                 w1_ref, w2_ref, vecs_ref,
                 out_seq_ref, out_mean_ref, *, bb, seq_len):
    n = bb * seq_len
    bf16 = jnp.bfloat16
    f32 = jnp.float32

    packed = x_ref[...]                                   # (bb, T, PACK_W) f32
    flat = packed.reshape(n, PACK_W)                      # layout-preserving (T % 8 == 0)
    tcol = flat[:, COL_TIME:COL_TIME + 1]                 # (n, 1)

    misc = misc_ref[...]                                  # (16, 48) f32
    t2v_w = misc[R_T2V_W:R_T2V_W + 1, 0:T2V_DIM]          # (1, 8)
    t2v_b = misc[R_T2V_B:R_T2V_B + 1, 0:T2V_DIM]          # (1, 8)
    wpa = misc[R_WPA:R_WPA + ACCEL_DIM, :]                # (3, 48)
    wpt = misc[R_WPT:R_WPT + T2V_DIM, :]                  # (8, 48)
    bp = misc[R_BP:R_BP + 1, :]
    ln0g = misc[R_LN0G:R_LN0G + 1, :]
    ln0b = misc[R_LN0B:R_LN0B + 1, :]

    # ---- Time2Vec: [w0*t + b0, sin(w_i*t + b_i)] -> (n, T2V_DIM)
    lin = tcol * t2v_w + t2v_b
    col = jax.lax.broadcasted_iota(jnp.int32, lin.shape, 1)
    t2v = jnp.where(col == 0, lin, jnp.sin(lin))          # (n, 8)

    # ---- input projection as 11 VPU broadcast-FMAs (avoids K=3/K=8 f32 MXU passes)
    x = bp + flat[:, 0:1] * wpa[0:1, :]                   # (n, 48)
    for i in range(1, ACCEL_DIM):
        x = x + flat[:, i:i + 1] * wpa[i:i + 1, :]
    for j in range(T2V_DIM):
        x = x + t2v[:, j:j + 1] * wpt[j:j + 1, :]
    x = _layernorm(x, ln0g, ln0b)

    kb = kb_ref[...]                                      # (bb, 1, T): 0 valid / -1e9 padded

    for l in range(NUM_LAYERS):
        wqkv_l = wqkv_ref[l]                              # (48, 144) bf16 (Wq pre-scaled)
        bqkv_l = bqkv_ref[l]                              # (1, 144) f32  (bq pre-scaled)
        wo_l = wo_ref[l]                                  # (48, 48) bf16
        w1_l = w1_ref[l]                                  # (48, 128) bf16
        w2_l = w2_ref[l]                                  # (128, 48) bf16
        vec = vecs_ref[l]                                 # (8, 128) f32
        bo = vec[V_BO:V_BO + 1, 0:D_MODEL]
        ln1g = vec[V_LN1G:V_LN1G + 1, 0:D_MODEL]
        ln1b = vec[V_LN1B:V_LN1B + 1, 0:D_MODEL]
        b1 = vec[V_B1:V_B1 + 1, :]
        b2 = vec[V_B2:V_B2 + 1, 0:D_MODEL]
        ln2g = vec[V_LN2G:V_LN2G + 1, 0:D_MODEL]
        ln2b = vec[V_LN2B:V_LN2B + 1, 0:D_MODEL]

        # ---- fused QKV projection over all bb*T rows (bf16 x bf16 -> f32)
        qkv = jnp.dot(x.astype(bf16), wqkv_l, preferred_element_type=f32) + bqkv_l  # (n, 3D)
        q = qkv[:, 0:D_MODEL].reshape(bb, seq_len, D_MODEL).astype(bf16)
        k = qkv[:, D_MODEL:2 * D_MODEL].reshape(bb, seq_len, D_MODEL).astype(bf16)
        v = qkv[:, 2 * D_MODEL:3 * D_MODEL].reshape(bb, seq_len, D_MODEL).astype(bf16)

        # ---- per-head attention batched over bb; head concat folded into Wo
        attn = jnp.zeros((n, D_MODEL), f32)
        for h in range(NHEAD):
            sl = slice(h * HEAD_DIM, (h + 1) * HEAD_DIM)
            qh, kh, vh = q[..., sl], k[..., sl], v[..., sl]          # bf16
            s = jnp.einsum('bqd,bkd->bqk', qh, kh,
                           preferred_element_type=f32) + kb          # (bb, T, T) f32
            s = s - jnp.max(s, axis=-1, keepdims=True)
            p = jnp.exp(s)
            p = p * pl.reciprocal(jnp.sum(p, axis=-1, keepdims=True), approx=True)
            ctx_h = jnp.einsum('bqk,bkd->bqd', p.astype(bf16), vh,
                               preferred_element_type=f32)           # (bb, T, hd) f32
            attn = attn + jnp.dot(ctx_h.reshape(n, HEAD_DIM).astype(bf16),
                                  wo_l[sl, :], preferred_element_type=f32)

        # ---- output projection bias + post-norm residual (dropout = identity in eval)
        x = _layernorm(x + attn + bo, ln1g, ln1b)

        # ---- feed forward (ReLU)
        h1 = jnp.maximum(
            jnp.dot(x.astype(bf16), w1_l, preferred_element_type=f32) + b1, 0.0)
        ff = jnp.dot(h1.astype(bf16), w2_l, preferred_element_type=f32) + b2
        x = _layernorm(x + ff, ln2g, ln2b)

    x3 = x.reshape(bb, seq_len, D_MODEL)
    out_seq_ref[...] = x3.astype(out_seq_ref.dtype)

    # ---- masked mean pooling: valid mask derived from key_bias; single MXU einsum.
    # Fully-padded filler rows (batch padding) get a uniform softmax above and a
    # clamped count here; they are sliced off in the wrapper, so this is benign.
    valid_row = (kb == 0.0).astype(f32)                               # (bb, 1, T)
    counts = jnp.maximum(jnp.sum(valid_row, axis=-1, keepdims=True), 1e-6)  # (bb,1,1)
    pooled = jnp.einsum('bqt,btd->bqd', valid_row.astype(bf16), x3.astype(bf16),
                        preferred_element_type=f32)                   # (bb, 1, D)
    out_mean_ref[...] = (pooled * pl.reciprocal(counts, approx=True)
                         ).astype(out_mean_ref.dtype)


def _zero_map(b, n):
    return (0,) * n


# ----------------------------------------------------------------------------
# Input preparation / parameter packing (plain XLA, runs once).
# ----------------------------------------------------------------------------
def _prepare_inputs(accel_seq, accel_time, accel_mask):
    B, T, _ = accel_seq.shape
    if accel_time is None:
        accel_time = jnp.broadcast_to(jnp.arange(T, dtype=jnp.float32)[None, :], (B, T))
    if accel_mask is None:
        valid = jnp.ones((B, T), jnp.float32)
    else:
        valid = jnp.logical_not(accel_mask).astype(jnp.float32)
    return accel_seq.astype(jnp.float32), accel_time.astype(jnp.float32), valid


def pack_params(p):
    """Pack the 'natural' parameter dict into a few kernel blobs (bf16 matmul weights)."""
    f32, bf16 = jnp.float32, jnp.bfloat16

    misc = jnp.zeros((MISC_ROWS, D_MODEL), f32)
    misc = misc.at[R_T2V_W, :T2V_DIM].set(p["t2v_w"][0])
    misc = misc.at[R_T2V_B, :T2V_DIM].set(p["t2v_b"][0])
    misc = misc.at[R_WPA:R_WPA + ACCEL_DIM].set(p["wpa"])
    misc = misc.at[R_WPT:R_WPT + T2V_DIM].set(p["wpt"])
    misc = misc.at[R_BP].set(p["bp"][0])
    misc = misc.at[R_LN0G].set(p["ln0g"][0])
    misc = misc.at[R_LN0B].set(p["ln0b"][0])

    scale = 1.0 / math.sqrt(HEAD_DIM)          # fold softmax scale into Wq / bq
    wqkv = jnp.concatenate([p["wq"] * scale, p["wk"], p["wv"]], axis=-1)   # (L, D, 3D)
    bqkv = jnp.concatenate([p["bq"] * scale, p["bk"], p["bv"]], axis=-1)   # (L, 1, 3D)

    vecs = jnp.zeros((NUM_LAYERS, 8, DIM_FF), f32)
    vecs = vecs.at[:, V_BO, :D_MODEL].set(p["bo"][:, 0])
    vecs = vecs.at[:, V_LN1G, :D_MODEL].set(p["ln1g"][:, 0])
    vecs = vecs.at[:, V_LN1B, :D_MODEL].set(p["ln1b"][:, 0])
    vecs = vecs.at[:, V_B1, :].set(p["b1"][:, 0])
    vecs = vecs.at[:, V_B2, :D_MODEL].set(p["b2"][:, 0])
    vecs = vecs.at[:, V_LN2G, :D_MODEL].set(p["ln2g"][:, 0])
    vecs = vecs.at[:, V_LN2B, :D_MODEL].set(p["ln2b"][:, 0])

    return {
        "misc": misc,
        "wqkv": wqkv.astype(bf16),
        "bqkv": bqkv.astype(f32),
        "wo": p["wo"].astype(bf16),
        "w1": p["w1"].astype(bf16),
        "w2": p["w2"].astype(bf16),
        "vecs": vecs,
    }


def _choose_block_batch(B, T, target_rows=4096, score_budget_bytes=8 << 20):
    """Pick the batch block so each grid step sees ~target_rows (bb*T) rows,
    keeps the per-head (bb,T,T) f32 score tile within budget (v7x: 64 MiB VMEM),
    and leaves >= 2 grid blocks so the 'parallel' axis spans both TCs on v7x."""
    bb = max(1, min(B, target_rows // max(T, 1)))
    while bb > 1 and bb * T * T * 4 > score_budget_bytes:
        bb //= 2
    if B >= 2:
        bb = min(bb, -(-B // 2))
    return max(1, bb)


# ----------------------------------------------------------------------------
# Wrapper: pallas_call with a batch-block grid.
# ----------------------------------------------------------------------------
def fall_time2vec_transformer(params, accel_seq, accel_time=None, accel_mask=None,
                              block_batch=None, target_rows=4096):
    """Forward pass; returns the same dict structure as the PyTorch module."""
    B, T, _ = accel_seq.shape
    accel, time_, valid = _prepare_inputs(accel_seq, accel_time, accel_mask)

    # Pad T to a sublane multiple (8) so (bb,T,*) <-> (bb*T,*) reshapes are
    # layout-preserving; pad tokens are fully masked so results are unchanged.
    T_pad = -(-T // 8) * 8
    t_extra = T_pad - T
    if t_extra:
        accel = jnp.pad(accel, ((0, 0), (0, t_extra), (0, 0)))
        time_ = jnp.pad(time_, ((0, 0), (0, t_extra)))
        valid = jnp.pad(valid, ((0, 0), (0, t_extra)))

    bb = block_batch or _choose_block_batch(B, T_pad, target_rows)
    n_blocks = -(-B // bb)
    b_pad = n_blocks * bb
    pad = b_pad - B
    if pad:
        accel = jnp.pad(accel, ((0, pad), (0, 0), (0, 0)))
        time_ = jnp.pad(time_, ((0, pad), (0, 0)))
        valid = jnp.pad(valid, ((0, pad), (0, 0)))        # padded sequences fully masked

    packed = jnp.concatenate(
        [accel, time_[..., None],
         jnp.zeros((b_pad, T_pad, PACK_W - ACCEL_DIM - 1), jnp.float32)],
        axis=-1)                                                                  # (Bp,Tp,8)
    key_bias = ((1.0 - valid) * (-1e9))[:, None, :]                               # (Bp,1,Tp)

    kp = pack_params(params)
    blob_names = ["misc", "wqkv", "bqkv", "wo", "w1", "w2", "vecs"]
    blobs = [kp[n] for n in blob_names]

    data_specs = [
        pl.BlockSpec((bb, T_pad, PACK_W), lambda b: (b, 0, 0)),
        pl.BlockSpec((bb, 1, T_pad), lambda b: (b, 0, 0)),
    ]
    param_specs = [pl.BlockSpec(a.shape, functools.partial(_zero_map, n=a.ndim))
                   for a in blobs]

    out_shape = (
        jax.ShapeDtypeStruct((b_pad, T_pad, D_MODEL), jnp.float32),   # encoder output
        jax.ShapeDtypeStruct((b_pad, 1, D_MODEL), jnp.float32),       # masked mean pool
    )
    out_specs = [
        pl.BlockSpec((bb, T_pad, D_MODEL), lambda b: (b, 0, 0)),
        pl.BlockSpec((bb, 1, D_MODEL), lambda b: (b, 0, 0)),
    ]

    kernel = functools.partial(_fall_kernel, bb=bb, seq_len=T_pad)
    out_seq, out_mean = pl.pallas_call(
        kernel,
        out_shape=out_shape,
        grid_spec=pltpu.PrefetchScalarGridSpec(
            num_scalar_prefetch=0,
            grid=(n_blocks,),
            in_specs=data_specs + param_specs,
            out_specs=out_specs,
        ),
        compiler_params=pltpu.CompilerParams(
            dimension_semantics=("parallel",),             # batch blocks are independent
            vmem_limit_bytes=48 * 1024 * 1024,             # > 16/32 MiB scoped defaults,
        ),                                                 # < v7x 64 MiB physical
    )(packed, key_bias, *blobs)

    out_seq = out_seq[:B, :T]
    fusion = out_mean[:B, 0, :]
    # Tiny (48 x 2) classifier left to plain XLA (negligible work, lane-sparse in-kernel).
    logits = fusion @ params["fcw"] + params["fcb"][0]
    return {"logits": logits, "features": {"accel_seq": out_seq, "fusion": fusion}}


# ----------------------------------------------------------------------------
# Deterministic parameter init (natural layout; shapes implied by the module __init__).
# ----------------------------------------------------------------------------
def init_params(key, scale=0.1):
    names_shapes = [
        ("t2v_w", (1, T2V_DIM)), ("t2v_b", (1, T2V_DIM)),
        ("wpa", (ACCEL_DIM, D_MODEL)), ("wpt", (T2V_DIM, D_MODEL)), ("bp", (1, D_MODEL)),
        ("ln0g", (1, D_MODEL)), ("ln0b", (1, D_MODEL)),
        ("wq", (NUM_LAYERS, D_MODEL, D_MODEL)), ("bq", (NUM_LAYERS, 1, D_MODEL)),
        ("wk", (NUM_LAYERS, D_MODEL, D_MODEL)), ("bk", (NUM_LAYERS, 1, D_MODEL)),
        ("wv", (NUM_LAYERS, D_MODEL, D_MODEL)), ("bv", (NUM_LAYERS, 1, D_MODEL)),
        ("wo", (NUM_LAYERS, D_MODEL, D_MODEL)), ("bo", (NUM_LAYERS, 1, D_MODEL)),
        ("ln1g", (NUM_LAYERS, 1, D_MODEL)), ("ln1b", (NUM_LAYERS, 1, D_MODEL)),
        ("w1", (NUM_LAYERS, D_MODEL, DIM_FF)), ("b1", (NUM_LAYERS, 1, DIM_FF)),
        ("w2", (NUM_LAYERS, DIM_FF, D_MODEL)), ("b2", (NUM_LAYERS, 1, D_MODEL)),
        ("ln2g", (NUM_LAYERS, 1, D_MODEL)), ("ln2b", (NUM_LAYERS, 1, D_MODEL)),
        ("fcw", (D_MODEL, NUM_CLASSES)), ("fcb", (1, NUM_CLASSES)),
    ]
    keys = jax.random.split(key, len(names_shapes))
    params = {}
    for (name, shape), k in zip(names_shapes, keys):
        if name.startswith("ln") and name.endswith("g"):
            params[name] = jnp.ones(shape, jnp.float32)
        elif name.startswith("ln") and name.endswith("b"):
            params[name] = jnp.zeros(shape, jnp.float32)
        else:
            params[name] = scale * jax.random.normal(k, shape, jnp.float32)
    return params


# ----------------------------------------------------------------------------
# Pure-JAX f32 reference (same math, vmapped over batch) for a correctness check.
# ----------------------------------------------------------------------------
def reference_forward(params, accel_seq, accel_time=None, accel_mask=None):
    accel, time_, valid = _prepare_inputs(accel_seq, accel_time, accel_mask)
    scale = 1.0 / math.sqrt(HEAD_DIM)

    def single(a, t, msk):
        lin = t[:, None] * params["t2v_w"] + params["t2v_b"]
        t2v = jnp.concatenate([lin[:, :1], jnp.sin(lin[:, 1:])], axis=-1)
        x = a @ params["wpa"] + t2v @ params["wpt"] + params["bp"]
        x = _layernorm(x, params["ln0g"], params["ln0b"])
        key_bias = ((1.0 - msk) * (-1e9))[None, :]
        for l in range(NUM_LAYERS):
            q = x @ params["wq"][l] + params["bq"][l]
            k = x @ params["wk"][l] + params["bk"][l]
            v = x @ params["wv"][l] + params["bv"][l]
            heads = []
            for h in range(NHEAD):
                sl = slice(h * HEAD_DIM, (h + 1) * HEAD_DIM)
                s = (q[:, sl] @ k[:, sl].T) * scale + key_bias
                p = jax.nn.softmax(s, axis=-1)
                heads.append(p @ v[:, sl])
            ctx = jnp.concatenate(heads, axis=-1)
            attn = ctx @ params["wo"][l] + params["bo"][l]
            x = _layernorm(x + attn, params["ln1g"][l], params["ln1b"][l])
            h1 = jax.nn.relu(x @ params["w1"][l] + params["b1"][l])
            x = _layernorm(x + h1 @ params["w2"][l] + params["b2"][l],
                           params["ln2g"][l], params["ln2b"][l])
        count = jnp.maximum(jnp.sum(msk), 1e-6)
        pooled = jnp.sum(x * msk[:, None], axis=0) / count
        logits = pooled @ params["fcw"] + params["fcb"][0]
        return x, pooled, logits

    out_seq, fusion, logits = jax.vmap(single)(accel, time_, valid)
    return {"logits": logits, "features": {"accel_seq": out_seq, "fusion": fusion}}


if __name__ == "__main__":
    B, T = 2, 8
    key = jax.random.PRNGKey(0)
    k_param, k_accel = jax.random.split(key)

    params = init_params(k_param)
    accel_seq = jax.random.normal(k_accel, (B, T, ACCEL_DIM), jnp.float32)
    # Boolean padding mask (True == padded): pad last two timesteps of example 1.
    accel_mask = jnp.zeros((B, T), dtype=bool).at[1, T - 2:].set(True)

    out = fall_time2vec_transformer(params, accel_seq, accel_time=None, accel_mask=accel_mask)
    jax.block_until_ready(out)

    ref = reference_forward(params, accel_seq, accel_time=None, accel_mask=accel_mask)
    pairs = [
        (out["logits"], ref["logits"]),
        (out["features"]["accel_seq"], ref["features"]["accel_seq"]),
        (out["features"]["fusion"], ref["features"]["fusion"]),
    ]
    for got, want in pairs:
        assert got.shape == want.shape, (got.shape, want.shape)
        assert jnp.allclose(got, want, atol=2e-2, rtol=2e-2), \
            float(jnp.max(jnp.abs(got - want)))

    assert out["logits"].shape == (B, NUM_CLASSES)
    assert out["features"]["accel_seq"].shape == (B, T, D_MODEL)
    assert out["features"]["fusion"].shape == (B, D_MODEL)
    print("KERNEL_OK")
</pallas_src>

<mosaic_0001>
module attributes {stable_mosaic.version = 11 : i64} {
  func.func @_fall_kernel(%arg0: i32, %arg1: memref<1x8x8xf32, #tpu.memory_space<vmem>>, %arg2: memref<1x1x8xf32, #tpu.memory_space<vmem>>, %arg3: memref<16x48xf32, #tpu.memory_space<vmem>>, %arg4: memref<2x48x144xbf16, #tpu.memory_space<vmem>>, %arg5: memref<2x1x144xf32, #tpu.memory_space<vmem>>, %arg6: memref<2x48x48xbf16, #tpu.memory_space<vmem>>, %arg7: memref<2x48x128xbf16, #tpu.memory_space<vmem>>, %arg8: memref<2x128x48xbf16, #tpu.memory_space<vmem>>, %arg9: memref<2x8x128xf32, #tpu.memory_space<vmem>>, %arg10: memref<1x8x48xf32, #tpu.memory_space<vmem>>, %arg11: memref<1x1x48xf32, #tpu.memory_space<vmem>>) attributes {dimension_semantics = [#tpu.dimension_semantics<parallel>], iteration_bounds = array<i64: 2>, scalar_prefetch = 0 : i64, scratch_operands = 0 : i64, tpu.core_type = #tpu.core_type<tc>, window_params = [{transform_indices = @transform_0, window_bounds = array<i64: 1, 8, 8>}, {transform_indices = @transform_1, window_bounds = array<i64: 1, 1, 8>}, {pipeline_mode = #tpu.pipeline_mode<synchronous>, transform_indices = @transform_2, window_bounds = array<i64: 16, 48>}, {pipeline_mode = #tpu.pipeline_mode<synchronous>, transform_indices = @transform_3, window_bounds = array<i64: 2, 48, 144>}, {pipeline_mode = #tpu.pipeline_mode<synchronous>, transform_indices = @transform_4, window_bounds = array<i64: 2, 1, 144>}, {pipeline_mode = #tpu.pipeline_mode<synchronous>, transform_indices = @transform_5, window_bounds = array<i64: 2, 48, 48>}, {pipeline_mode = #tpu.pipeline_mode<synchronous>, transform_indices = @transform_6, window_bounds = array<i64: 2, 48, 128>}, {pipeline_mode = #tpu.pipeline_mode<synchronous>, transform_indices = @transform_7, window_bounds = array<i64: 2, 128, 48>}, {pipeline_mode = #tpu.pipeline_mode<synchronous>, transform_indices = @transform_8, window_bounds = array<i64: 2, 8, 128>}, {transform_indices = @transform_9, window_bounds = array<i64: 1, 8, 48>}, {transform_indices = @transform_10, window_bounds = array<i64: 1, 1, 48>}]} {
    %c0 = arith.constant 0 : index
    %c0_0 = arith.constant 0 : index
    %c0_1 = arith.constant 0 : index
    %0 = vector.load %arg1[%c0, %c0_0, %c0_1] : memref<1x8x8xf32, #tpu.memory_space<vmem>>, vector<1x8x8xf32>
    %1 = vector.shape_cast %0 : vector<1x8x8xf32> to vector<8x8xf32>
    %2 = vector.extract_strided_slice %1 {offsets = [0, 3], sizes = [8, 1], strides = [1, 1]} : vector<8x8xf32> to vector<8x1xf32>
    %c0_2 = arith.constant 0 : index
    %c0_3 = arith.constant 0 : index
    %3 = vector.load %arg3[%c0_2, %c0_3] : memref<16x48xf32, #tpu.memory_space<vmem>>, vector<16x48xf32>
    %4 = vector.extract_strided_slice %3 {offsets = [0, 0], sizes = [1, 8], strides = [1, 1]} : vector<16x48xf32> to vector<1x8xf32>
    %5 = vector.extract_strided_slice %3 {offsets = [1, 0], sizes = [1, 8], strides = [1, 1]} : vector<16x48xf32> to vector<1x8xf32>
    %6 = vector.extract_strided_slice %3 {offsets = [2, 0], sizes = [3, 48], strides = [1, 1]} : vector<16x48xf32> to vector<3x48xf32>
    %7 = vector.extract_strided_slice %3 {offsets = [5, 0], sizes = [8, 48], strides = [1, 1]} : vector<16x48xf32> to vector<8x48xf32>
    %8 = vector.extract_strided_slice %3 {offsets = [13, 0], sizes = [1, 48], strides = [1, 1]} : vector<16x48xf32> to vector<1x48xf32>
    %9 = vector.extract_strided_slice %3 {offsets = [14, 0], sizes = [1, 48], strides = [1, 1]} : vector<16x48xf32> to vector<1x48xf32>
    %10 = vector.extract_strided_slice %3 {offsets = [15, 0], sizes = [1, 48], strides = [1, 1]} : vector<16x48xf32> to vector<1x48xf32>
    %11 = vector.broadcast %2 : vector<8x1xf32> to vector<8x8xf32>
    %12 = vector.broadcast %4 : vector<1x8xf32> to vector<8x8xf32>
    %13 = arith.mulf %11, %12 : vector<8x8xf32>
    %14 = vector.broadcast %5 : vector<1x8xf32> to vector<8x8xf32>
    %15 = arith.addf %13, %14 : vector<8x8xf32>
    %16 = tpu.iota {dimensions = array<i32: 1>} : vector<8x8xi32>
    %c0_i32 = arith.constant 0 : i32
    %17 = vector.broadcast %c0_i32 : i32 to vector<8x8xi32>
    %18 = arith.cmpi eq, %16, %17 : vector<8x8xi32>
    %19 = math.sin %15 : vector<8x8xf32>
    %20 = arith.select %18, %15, %19 : vector<8x8xi1>, vector<8x8xf32>
    %21 = vector.extract_strided_slice %1 {offsets = [0, 0], sizes = [8, 1], strides = [1, 1]} : vector<8x8xf32> to vector<8x1xf32>
    %22 = vector.extract_strided_slice %6 {offsets = [0, 0], sizes = [1, 48], strides = [1, 1]} : vector<3x48xf32> to vector<1x48xf32>
    %23 = vector.broadcast %21 : vector<8x1xf32> to vector<8x48xf32>
    %24 = vector.broadcast %22 : vector<1x48xf32> to vector<8x48xf32>
    %25 = arith.mulf %23, %24 : vector<8x48xf32>
    %26 = vector.broadcast %8 : vector<1x48xf32> to vector<8x48xf32>
    %27 = arith.addf %26, %25 : vector<8x48xf32>
    %28 = vector.extract_strided_slice %1 {offsets = [0, 1], sizes = [8, 1], strides = [1, 1]} : vector<8x8xf32> to vector<8x1xf32>
    %29 = vector.extract_strided_slice %6 {offsets = [1, 0], sizes = [1, 48], strides = [1, 1]} : vector<3x48xf32> to vector<1x48xf32>
    %30 = vector.broadcast %28 : vector<8x1xf32> to vector<8x48xf32>
    %31 = vector.broadcast %29 : vector<1x48xf32> to vector<8x48xf32>
    %32 = arith.mulf %30, %31 : vector<8x48xf32>
    %33 = arith.addf %27, %32 : vector<8x48xf32>
    %34 = vector.extract_strided_slice %1 {offsets = [0, 2], sizes = [8, 1], strides = [1, 1]} : vector<8x8xf32> to vector<8x1xf32>
    %35 = vector.extract_strided_slice %6 {offsets = [2, 0], sizes = [1, 48], strides = [1, 1]} : vector<3x48xf32> to vector<1x48xf32>
    %36 = vector.broadcast %34 : vector<8x1xf32> to vector<8x48xf32>
    %37 = vector.broadcast %35 : vector<1x48xf32> to vector<8x48xf32>
    %38 = arith.mulf %36, %37 : vector<8x48xf32>
    %39 = arith.addf %33, %38 : vector<8x48xf32>
    %40 = vector.extract_strided_slice %20 {offsets = [0, 0], sizes = [8, 1], strides = [1, 1]} : vector<8x8xf32> to vector<8x1xf32>
    %41 = vector.extract_strided_slice %7 {offsets = [0, 0], sizes = [1, 48], strides = [1, 1]} : vector<8x48xf32> to vector<1x48xf32>
    %42 = vector.broadcast %40 : vector<8x1xf32> to vector<8x48xf32>
    %43 = vector.broadcast %41 : vector<1x48xf32> to vector<8x48xf32>
    %44 = arith.mulf %42, %43 : vector<8x48xf32>
    %45 = arith.addf %39, %44 : vector<8x48xf32>
    %46 = vector.extract_strided_slice %20 {offsets = [0, 1], sizes = [8, 1], strides = [1, 1]} : vector<8x8xf32> to vector<8x1xf32>
    %47 = vector.extract_strided_slice %7 {offsets = [1, 0], sizes = [1, 48], strides = [1, 1]} : vector<8x48xf32> to vector<1x48xf32>
    %48 = vector.broadcast %46 : vector<8x1xf32> to vector<8x48xf32>
    %49 = vector.broadcast %47 : vector<1x48xf32> to vector<8x48xf32>
    %50 = arith.mulf %48, %49 : vector<8x48xf32>
    %51 = arith.addf %45, %50 : vector<8x48xf32>
    %52 = vector.extract_strided_slice %20 {offsets = [0, 2], sizes = [8, 1], strides = [1, 1]} : vector<8x8xf32> to vector<8x1xf32>
    %53 = vector.extract_strided_slice %7 {offsets = [2, 0], sizes = [1, 48], strides = [1, 1]} : vector<8x48xf32> to vector<1x48xf32>
    %54 = vector.broadcast %52 : vector<8x1xf32> to vector<8x48xf32>
    %55 = vector.broadcast %53 : vector<1x48xf32> to vector<8x48xf32>
    %56 = arith.mulf %54, %55 : vector<8x48xf32>
    %57 = arith.addf %51, %56 : vector<8x48xf32>
    %58 = vector.extract_strided_slice %20 {offsets = [0, 3], sizes = [8, 1], strides = [1, 1]} : vector<8x8xf32> to vector<8x1xf32>
    %59 = vector.extract_strided_slice %7 {offsets = [3, 0], sizes = [1, 48], strides = [1, 1]} : vector<8x48xf32> to vector<1x48xf32>
    %60 = vector.broadcast %58 : vector<8x1xf32> to vector<8x48xf32>
    %61 = vector.broadcast %59 : vector<1x48xf32> to vector<8x48xf32>
    %62 = arith.mulf %60, %61 : vector<8x48xf32>
    %63 = arith.addf %57, %62 : vector<8x48xf32>
    %64 = vector.extract_strided_slice %20 {offsets = [0, 4], sizes = [8, 1], strides = [1, 1]} : vector<8x8xf32> to vector<8x1xf32>
    %65 = vector.extract_strided_slice %7 {offsets = [4, 0], sizes = [1, 48], strides = [1, 1]} : vector<8x48xf32> to vector<1x48xf32>
    %66 = vector.broadcast %64 : vector<8x1xf32> to vector<8x48xf32>
    %67 = vector.broadcast %65 : vector<1x48xf32> to vector<8x48xf32>
    %68 = arith.mulf %66, %67 : vector<8x48xf32>
    %69 = arith.addf %63, %68 : vector<8x48xf32>
    %70 = vector.extract_strided_slice %20 {offsets = [0, 5], sizes = [8, 1], strides = [1, 1]} : vector<8x8xf32> to vector<8x1xf32>
    %71 = vector.extract_strided_slice %7 {offsets = [5, 0], sizes = [1, 48], strides = [1, 1]} : vector<8x48xf32> to vector<1x48xf32>
    %72 = vector.broadcast %70 : vector<8x1xf32> to vector<8x48xf32>
    %73 = vector.broadcast %71 : vector<1x48xf32> to vector<8x48xf32>
    %74 = arith.mulf %72, %73 : vector<8x48xf32>
    %75 = arith.addf %69, %74 : vector<8x48xf32>
    %76 = vector.extract_strided_slice %20 {offsets = [0, 6], sizes = [8, 1], strides = [1, 1]} : vector<8x8xf32> to vector<8x1xf32>
    %77 = vector.extract_strided_slice %7 {offsets = [6, 0], sizes = [1, 48], strides = [1, 1]} : vector<8x48xf32> to vector<1x48xf32>
    %78 = vector.broadcast %76 : vector<8x1xf32> to vector<8x48xf32>
    %79 = vector.broadcast %77 : vector<1x48xf32> to vector<8x48xf32>
    %80 = arith.mulf %78, %79 : vector<8x48xf32>
    %81 = arith.addf %75, %80 : vector<8x48xf32>
    %82 = vector.extract_strided_slice %20 {offsets = [0, 7], sizes = [8, 1], strides = [1, 1]} : vector<8x8xf32> to vector<8x1xf32>
    %83 = vector.extract_strided_slice %7 {offsets = [7, 0], sizes = [1, 48], strides = [1, 1]} : vector<8x48xf32> to vector<1x48xf32>
    %84 = vector.broadcast %82 : vector<8x1xf32> to vector<8x48xf32>
    %85 = vector.broadcast %83 : vector<1x48xf32> to vector<8x48xf32>
    %86 = arith.mulf %84, %85 : vector<8x48xf32>
    %87 = arith.addf %81, %86 : vector<8x48xf32>
    %cst = arith.constant dense<0.000000e+00> : vector<8xf32>
    %88 = vector.multi_reduction <add>, %87, %cst [1] : vector<8x48xf32> to vector<8xf32>
    %89 = vector.shape_cast %88 : vector<8xf32> to vector<8x1xf32>
    %cst_4 = arith.constant 4.800000e+01 : f32
    %90 = vector.broadcast %cst_4 : f32 to vector<8x1xf32>
    %91 = arith.divf %89, %90 : vector<8x1xf32>
    %92 = vector.broadcast %91 : vector<8x1xf32> to vector<8x48xf32>
    %93 = arith.subf %87, %92 : vector<8x48xf32>
    %94 = arith.mulf %93, %93 : vector<8x48xf32>
    %cst_5 = arith.constant dense<0.000000e+00> : vector<8xf32>
    %95 = vector.multi_reduction <add>, %94, %cst_5 [1] : vector<8x48xf32> to vector<8xf32>
    %96 = vector.shape_cast %95 : vector<8xf32> to vector<8x1xf32>
    %cst_6 = arith.constant 4.800000e+01 : f32
    %97 = vector.broadcast %cst_6 : f32 to vector<8x1xf32>
    %98 = arith.divf %96, %97 : vector<8x1xf32>
    %cst_7 = arith.constant 9.99999974E-6 : f32
    %99 = vector.broadcast %cst_7 : f32 to vector<8x1xf32>
    %100 = arith.addf %98, %99 : vector<8x1xf32>
    %101 = math.rsqrt %100 : vector<8x1xf32>
    %102 = vector.broadcast %101 : vector<8x1xf32> to vector<8x48xf32>
    %103 = arith.mulf %93, %102 : vector<8x48xf32>
    %104 = vector.broadcast %9 : vector<1x48xf32> to vector<8x48xf32>
    %105 = arith.mulf %103, %104 : vector<8x48xf32>
    %106 = vector.broadcast %10 : vector<1x48xf32> to vector<8x48xf32>
    %107 = arith.addf %105, %106 : vector<8x48xf32>
    %c0_8 = arith.constant 0 : index
    %c0_9 = arith.constant 0 : index
    %c0_10 = arith.constant 0 : index
    %108 = vector.load %arg2[%c0_8, %c0_9, %c0_10] : memref<1x1x8xf32, #tpu.memory_space<vmem>>, vector<1x1x8xf32>
    %c0_11 = arith.constant 0 : index
    %c0_12 = arith.constant 0 : index
    %c0_13 = arith.constant 0 : index
    %109 = vector.load %arg4[%c0_11, %c0_12, %c0_13] : memref<2x48x144xbf16, #tpu.memory_space<vmem>>, vector<1x48x144xbf16>
    %110 = vector.shape_cast %109 : vector<1x48x144xbf16> to vector<48x144xbf16>
    %c0_14 = arith.constant 0 : index
    %c0_15 = arith.constant 0 : index
    %c0_16 = arith.constant 0 : index
    %111 = vector.load %arg5[%c0_14, %c0_15, %c0_16] : memref<2x1x144xf32, #tpu.memory_space<vmem>>, vector<1x1x144xf32>
    %112 = vector.shape_cast %111 : vector<1x1x144xf32> to vector<1x144xf32>
    %c0_17 = arith.constant 0 : index
    %c0_18 = arith.constant 0 : index
    %c0_19 = arith.constant 0 : index
    %113 = vector.load %arg6[%c0_17, %c0_18, %c0_19] : memref<2x48x48xbf16, #tpu.memory_space<vmem>>, vector<1x48x48xbf16>
    %114 = vector.shape_cast %113 : vector<1x48x48xbf16> to vector<48x48xbf16>
    %c0_20 = arith.constant 0 : index
    %c0_21 = arith.constant 0 : index
    %c0_22 = arith.constant 0 : index
    %115 = vector.load %arg7[%c0_20, %c0_21, %c0_22] : memref<2x48x128xbf16, #tpu.memory_space<vmem>>, vector<1x48x128xbf16>
    %116 = vector.shape_cast %115 : vector<1x48x128xbf16> to vector<48x128xbf16>
    %c0_23 = arith.constant 0 : index
    %c0_24 = arith.constant 0 : index
    %c0_25 = arith.constant 0 : index
    %117 = vector.load %arg8[%c0_23, %c0_24, %c0_25] : memref<2x128x48xbf16, #tpu.memory_space<vmem>>, vector<1x128x48xbf16>
    %118 = vector.shape_cast %117 : vector<1x128x48xbf16> to vector<128x48xbf16>
    %c0_26 = arith.constant 0 : index
    %c0_27 = arith.constant 0 : index
    %c0_28 = arith.constant 0 : index
    %119 = vector.load %arg9[%c0_26, %c0_27, %c0_28] : memref<2x8x128xf32, #tpu.memory_space<vmem>>, vector<1x8x128xf32>
    %120 = vector.shape_cast %119 : vector<1x8x128xf32> to vector<8x128xf32>
    %121 = vector.extract_strided_slice %120 {offsets = [0, 0], sizes = [1, 48], strides = [1, 1]} : vector<8x128xf32> to vector<1x48xf32>
    %122 = vector.extract_strided_slice %120 {offsets = [1, 0], sizes = [1, 48], strides = [1, 1]} : vector<8x128xf32> to vector<1x48xf32>
    %123 = vector.extract_strided_slice %120 {offsets = [2, 0], sizes = [1, 48], strides = [1, 1]} : vector<8x128xf32> to vector<1x48xf32>
    %124 = vector.extract_strided_slice %120 {offsets = [3, 0], sizes = [1, 128], strides = [1, 1]} : vector<8x128xf32> to vector<1x128xf32>
    %125 = vector.extract_strided_slice %120 {offsets = [4, 0], sizes = [1, 48], strides = [1, 1]} : vector<8x128xf32> to vector<1x48xf32>
    %126 = vector.extract_strided_slice %120 {offsets = [5, 0], sizes = [1, 48], strides = [1, 1]} : vector<8x128xf32> to vector<1x48xf32>
    %127 = vector.extract_strided_slice %120 {offsets = [6, 0], sizes = [1, 48], strides = [1, 1]} : vector<8x128xf32> to vector<1x48xf32>
    %128 = arith.truncf %107 : vector<8x48xf32> to vector<8x48xbf16>
    %cst_29 = arith.constant dense<0.000000e+00> : vector<8x144xf32>
    %129 = tpu.matmul %128, %110, %cst_29 {dimension_numbers = #tpu.dot_dimension_numbers<[1], [0], [0], [1], [0, 0, 1, 1], [], []>} : vector<8x48xbf16>, vector<48x144xbf16>, vector<8x144xf32> -> vector<8x144xf32>
    %130 = vector.broadcast %112 : vector<1x144xf32> to vector<8x144xf32>
    %131 = arith.addf %129, %130 : vector<8x144xf32>
    %132 = vector.extract_strided_slice %131 {offsets = [0, 0], sizes = [8, 48], strides = [1, 1]} : vector<8x144xf32> to vector<8x48xf32>
    %133 = vector.shape_cast %132 : vector<8x48xf32> to vector<1x8x48xf32>
    %134 = arith.truncf %133 : vector<1x8x48xf32> to vector<1x8x48xbf16>
    %135 = vector.extract_strided_slice %131 {offsets = [0, 48], sizes = [8, 48], strides = [1, 1]} : vector<8x144xf32> to vector<8x48xf32>
    %136 = vector.shape_cast %135 : vector<8x48xf32> to vector<1x8x48xf32>
    %137 = arith.truncf %136 : vector<1x8x48xf32> to vector<1x8x48xbf16>
    %138 = vector.extract_strided_slice %131 {offsets = [0, 96], sizes = [8, 48], strides = [1, 1]} : vector<8x144xf32> to vector<8x48xf32>
    %139 = vector.shape_cast %138 : vector<8x48xf32> to vector<1x8x48xf32>
    %140 = arith.truncf %139 : vector<1x8x48xf32> to vector<1x8x48xbf16>
    %cst_30 = arith.constant 0.000000e+00 : f32
    %141 = vector.broadcast %cst_30 : f32 to vector<8x48xf32>
    %142 = vector.extract_strided_slice %134 {offsets = [0, 0, 0], sizes = [1, 8, 12], strides = [1, 1, 1]} : vector<1x8x48xbf16> to vector<1x8x12xbf16>
    %143 = vector.extract_strided_slice %137 {offsets = [0, 0, 0], sizes = [1, 8, 12], strides = [1, 1, 1]} : vector<1x8x48xbf16> to vector<1x8x12xbf16>
    %144 = vector.extract_strided_slice %140 {offsets = [0, 0, 0], sizes = [1, 8, 12], strides = [1, 1, 1]} : vector<1x8x48xbf16> to vector<1x8x12xbf16>
    "tpu.trace_start"() <{level = 10 : i32, message = "bqd,bkd->bqk"}> : () -> ()
    %cst_31 = arith.constant dense<0.000000e+00> : vector<1x8x8xf32>
    %145 = tpu.matmul %142, %143, %cst_31 {dimension_numbers = #tpu.dot_dimension_numbers<[2], [2], [1], [1], [0, 0, 0, 1, 1, 1], [0], [0]>} : vector<1x8x12xbf16>, vector<1x8x12xbf16>, vector<1x8x8xf32> -> vector<1x8x8xf32>
    "tpu.trace_stop"() : () -> ()
    %146 = vector.broadcast %108 : vector<1x1x8xf32> to vector<1x8x8xf32>
    %147 = arith.addf %145, %146 : vector<1x8x8xf32>
    %cst_32 = arith.constant dense<0xFF800000> : vector<1x8xf32>
    %148 = vector.multi_reduction <maximumf>, %147, %cst_32 [2] : vector<1x8x8xf32> to vector<1x8xf32>
    %149 = vector.shape_cast %148 : vector<1x8xf32> to vector<1x8x1xf32>
    %150 = vector.broadcast %149 : vector<1x8x1xf32> to vector<1x8x8xf32>
    %151 = arith.subf %147, %150 : vector<1x8x8xf32>
    %152 = math.exp %151 : vector<1x8x8xf32>
    %cst_33 = arith.constant dense<0.000000e+00> : vector<1x8xf32>
    %153 = vector.multi_reduction <add>, %152, %cst_33 [2] : vector<1x8x8xf32> to vector<1x8xf32>
    %154 = vector.shape_cast %153 : vector<1x8xf32> to vector<1x8x1xf32>
    %155 = tpu.reciprocal %154 {approx = true} : vector<1x8x1xf32> -> vector<1x8x1xf32>
    %156 = vector.broadcast %155 : vector<1x8x1xf32> to vector<1x8x8xf32>
    %157 = arith.mulf %152, %156 : vector<1x8x8xf32>
    %158 = arith.truncf %157 : vector<1x8x8xf32> to vector<1x8x8xbf16>
    "tpu.trace_start"() <{level = 10 : i32, message = "bqk,bkd->bqd"}> : () -> ()
    %cst_34 = arith.constant dense<0.000000e+00> : vector<1x8x12xf32>
    %159 = tpu.matmul %158, %144, %cst_34 {dimension_numbers = #tpu.dot_dimension_numbers<[2], [1], [1], [2], [0, 0, 0, 1, 1, 2], [0], [0]>} : vector<1x8x8xbf16>, vector<1x8x12xbf16>, vector<1x8x12xf32> -> vector<1x8x12xf32>
    "tpu.trace_stop"() : () -> ()
    %160 = vector.shape_cast %159 : vector<1x8x12xf32> to vector<8x12xf32>
    %161 = arith.truncf %160 : vector<8x12xf32> to vector<8x12xbf16>
    %162 = vector.extract_strided_slice %114 {offsets = [0, 0], sizes = [12, 48], strides = [1, 1]} : vector<48x48xbf16> to vector<12x48xbf16>
    %cst_35 = arith.constant dense<0.000000e+00> : vector<8x48xf32>
    %163 = tpu.matmul %161, %162, %cst_35 {dimension_numbers = #tpu.dot_dimension_numbers<[1], [0], [0], [1], [0, 0, 1, 1], [], []>} : vector<8x12xbf16>, vector<12x48xbf16>, vector<8x48xf32> -> vector<8x48xf32>
    %164 = arith.addf %141, %163 : vector<8x48xf32>
    %165 = vector.extract_strided_slice %134 {offsets = [0, 0, 12], sizes = [1, 8, 12], strides = [1, 1, 1]} : vector<1x8x48xbf16> to vector<1x8x12xbf16>
    %166 = vector.extract_strided_slice %137 {offsets = [0, 0, 12], sizes = [1, 8, 12], strides = [1, 1, 1]} : vector<1x8x48xbf16> to vector<1x8x12xbf16>
    %167 = vector.extract_strided_slice %140 {offsets = [0, 0, 12], sizes = [1, 8, 12], strides = [1, 1, 1]} : vector<1x8x48xbf16> to vector<1x8x12xbf16>
    "tpu.trace_start"() <{level = 10 : i32, message = "bqd,bkd->bqk"}> : () -> ()
    %cst_36 = arith.constant dense<0.000000e+00> : vector<1x8x8xf32>
    %168 = tpu.matmul %165, %166, %cst_36 {dimension_numbers = #tpu.dot_dimension_numbers<[2], [2], [1], [1], [0, 0, 0, 1, 1, 1], [0], [0]>} : vector<1x8x12xbf16>, vector<1x8x12xbf16>, vector<1x8x8xf32> -> vector<1x8x8xf32>
    "tpu.trace_stop"() : () -> ()
    %169 = vector.broadcast %108 : vector<1x1x8xf32> to vector<1x8x8xf32>
    %170 = arith.addf %168, %169 : vector<1x8x8xf32>
    %cst_37 = arith.constant dense<0xFF800000> : vector<1x8xf32>
    %171 = vector.multi_reduction <maximumf>, %170, %cst_37 [2] : vector<1x8x8xf32> to vector<1x8xf32>
    %172 = vector.shape_cast %171 : vector<1x8xf32> to vector<1x8x1xf32>
    %173 = vector.broadcast %172 : vector<1x8x1xf32> to vector<1x8x8xf32>
    %174 = arith.subf %170, %173 : vector<1x8x8xf32>
    %175 = math.exp %174 : vector<1x8x8xf32>
    %cst_38 = arith.constant dense<0.000000e+00> : vector<1x8xf32>
    %176 = vector.multi_reduction <add>, %175, %cst_38 [2] : vector<1x8x8xf32> to vector<1x8xf32>
    %177 = vector.shape_cast %176 : vector<1x8xf32> to vector<1x8x1xf32>
    %178 = tpu.reciprocal %177 {approx = true} : vector<1x8x1xf32> -> vector<1x8x1xf32>
    %179 = vector.broadcast %178 : vector<1x8x1xf32> to vector<1x8x8xf32>
    %180 = arith.mulf %175, %179 : vector<1x8x8xf32>
    %181 = arith.truncf %180 : vector<1x8x8xf32> to vector<1x8x8xbf16>
    "tpu.trace_start"() <{level = 10 : i32, message = "bqk,bkd->bqd"}> : () -> ()
    %cst_39 = arith.constant dense<0.000000e+00> : vector<1x8x12xf32>
    %182 = tpu.matmul %181, %167, %cst_39 {dimension_numbers = #tpu.dot_dimension_numbers<[2], [1], [1], [2], [0, 0, 0, 1, 1, 2], [0], [0]>} : vector<1x8x8xbf16>, vector<1x8x12xbf16>, vector<1x8x12xf32> -> vector<1x8x12xf32>
    "tpu.trace_stop"() : () -> ()
    %183 = vector.shape_cast %182 : vector<1x8x12xf32> to vector<8x12xf32>
    %184 = arith.truncf %183 : vector<8x12xf32> to vector<8x12xbf16>
    %185 = vector.extract_strided_slice %114 {offsets = [12, 0], sizes = [12, 48], strides = [1, 1]} : vector<48x48xbf16> to vector<12x48xbf16>
    %cst_40 = arith.constant dense<0.000000e+00> : vector<8x48xf32>
    %186 = tpu.matmul %184, %185, %cst_40 {dimension_numbers = #tpu.dot_dimension_numbers<[1], [0], [0], [1], [0, 0, 1, 1], [], []>} : vector<8x12xbf16>, vector<12x48xbf16>, vector<8x48xf32> -> vector<8x48xf32>
    %187 = arith.addf %164, %186 : vector<8x48xf32>
    %188 = vector.extract_strided_slice %134 {offsets = [0, 0, 24], sizes = [1, 8, 12], strides = [1, 1, 1]} : vector<1x8x48xbf16> to vector<1x8x12xbf16>
    %189 = vector.extract_strided_slice %137 {offsets = [0, 0, 24], sizes = [1, 8, 12], strides = [1, 1, 1]} : vector<1x8x48xbf16> to vector<1x8x12xbf16>
    %190 = vector.extract_strided_slice %140 {offsets = [0, 0, 24], sizes = [1, 8, 12], strides = [1, 1, 1]} : vector<1x8x48xbf16> to vector<1x8x12xbf16>
    "tpu.trace_start"() <{level = 10 : i32, message = "bqd,bkd->bqk"}> : () -> ()
    %cst_41 = arith.constant dense<0.000000e+00> : vector<1x8x8xf32>
    %191 = tpu.matmul %188, %189, %cst_41 {dimension_numbers = #tpu.dot_dimension_numbers<[2], [2], [1], [1], [0, 0, 0, 1, 1, 1], [0], [0]>} : vector<1x8x12xbf16>, vector<1x8x12xbf16>, vector<1x8x8xf32> -> vector<1x8x8xf32>
    "tpu.trace_stop"() : () -> ()
    %192 = vector.broadcast %108 : vector<1x1x8xf32> to vector<1x8x8xf32>
    %193 = arith.addf %191, %192 : vector<1x8x8xf32>
    %cst_42 = arith.constant dense<0xFF800000> : vector<1x8xf32>
    %194 = vector.multi_reduction <maximumf>, %193, %cst_42 [2] : vector<1x8x8xf32> to vector<1x8xf32>
    %195 = vector.shape_cast %194 : vector<1x8xf32> to vector<1x8x1xf32>
    %196 = vector.broadcast %195 : vector<1x8x1xf32> to vector<1x8x8xf32>
    %197 = arith.subf %193, %196 : vector<1x8x8xf32>
    %198 = math.exp %197 : vector<1x8x8xf32>
    %cst_43 = arith.constant dense<0.000000e+00> : vector<1x8xf32>
    %199 = vector.multi_reduction <add>, %198, %cst_43 [2] : vector<1x8x8xf32> to vector<1x8xf32>
    %200 = vector.shape_cast %199 : vector<1x8xf32> to vector<1x8x1xf32>
    %201 = tpu.reciprocal %200 {approx = true} : vector<1x8x1xf32> -> vector<1x8x1xf32>
    %202 = vector.broadcast %201 : vector<1x8x1xf32> to vector<1x8x8xf32>
    %203 = arith.mulf %198, %202 : vector<1x8x8xf32>
    %204 = arith.truncf %203 : vector<1x8x8xf32> to vector<1x8x8xbf16>
    "tpu.trace_start"() <{level = 10 : i32, message = "bqk,bkd->bqd"}> : () -> ()
    %cst_44 = arith.constant dense<0.000000e+00> : vector<1x8x12xf32>
    %205 = tpu.matmul %204, %190, %cst_44 {dimension_numbers = #tpu.dot_dimension_numbers<[2], [1], [1], [2], [0, 0, 0, 1, 1, 2], [0], [0]>} : vector<1x8x8xbf16>, vector<1x8x12xbf16>, vector<1x8x12xf32> -> vector<1x8x12xf32>
    "tpu.trace_stop"() : () -> ()
    %206 = vector.shape_cast %205 : vector<1x8x12xf32> to vector<8x12xf32>
    %207 = arith.truncf %206 : vector<8x12xf32> to vector<8x12xbf16>
    %208 = vector.extract_strided_slice %114 {offsets = [24, 0], sizes = [12, 48], strides = [1, 1]} : vector<48x48xbf16> to vector<12x48xbf16>
    %cst_45 = arith.constant dense<0.000000e+00> : vector<8x48xf32>
    %209 = tpu.matmul %207, %208, %cst_45 {dimension_numbers = #tpu.dot_dimension_numbers<[1], [0], [0], [1], [0, 0, 1, 1], [], []>} : vector<8x12xbf16>, vector<12x48xbf16>, vector<8x48xf32> -> vector<8x48xf32>
    %210 = arith.addf %187, %209 : vector<8x48xf32>
    %211 = vector.extract_strided_slice %134 {offsets = [0, 0, 36], sizes = [1, 8, 12], strides = [1, 1, 1]} : vector<1x8x48xbf16> to vector<1x8x12xbf16>
    %212 = vector.extract_strided_slice %137 {offsets = [0, 0, 36], sizes = [1, 8, 12], strides = [1, 1, 1]} : vector<1x8x48xbf16> to vector<1x8x12xbf16>
    %213 = vector.extract_strided_slice %140 {offsets = [0, 0, 36], sizes = [1, 8, 12], strides = [1, 1, 1]} : vector<1x8x48xbf16> to vector<1x8x12xbf16>
    "tpu.trace_start"() <{level = 10 : i32, message = "bqd,bkd->bqk"}> : () -> ()
    %cst_46 = arith.constant dense<0.000000e+00> : vector<1x8x8xf32>
    %214 = tpu.matmul %211, %212, %cst_46 {dimension_numbers = #tpu.dot_dimension_numbers<[2], [2], [1], [1], [0, 0, 0, 1, 1, 1], [0], [0]>} : vector<1x8x12xbf16>, vector<1x8x12xbf16>, vector<1x8x8xf32> -> vector<1x8x8xf32>
    "tpu.trace_stop"() : () -> ()
    %215 = vector.broadcast %108 : vector<1x1x8xf32> to vector<1x8x8xf32>
    %216 = arith.addf %214, %215 : vector<1x8x8xf32>
    %cst_47 = arith.constant dense<0xFF800000> : vector<1x8xf32>
    %217 = vector.multi_reduction <maximumf>, %216, %cst_47 [2] : vector<1x8x8xf32> to vector<1x8xf32>
    %218 = vector.shape_cast %217 : vector<1x8xf32> to vector<1x8x1xf32>
    %219 = vector.broadcast %218 : vector<1x8x1xf32> to vector<1x8x8xf32>
    %220 = arith.subf %216, %219 : vector<1x8x8xf32>
    %221 = math.exp %220 : vector<1x8x8xf32>
    %cst_48 = arith.constant dense<0.000000e+00> : vector<1x8xf32>
    %222 = vector.multi_reduction <add>, %221, %cst_48 [2] : vector<1x8x8xf32> to vector<1x8xf32>
    %223 = vector.shape_cast %222 : vector<1x8xf32> to vector<1x8x1xf32>
    %224 = tpu.reciprocal %223 {approx = true} : vector<1x8x1xf32> -> vector<1x8x1xf32>
    %225 = vector.broadcast %224 : vector<1x8x1xf32> to vector<1x8x8xf32>
    %226 = arith.mulf %221, %225 : vector<1x8x8xf32>
    %227 = arith.truncf %226 : vector<1x8x8xf32> to vector<1x8x8xbf16>
    "tpu.trace_start"() <{level = 10 : i32, message = "bqk,bkd->bqd"}> : () -> ()
    %cst_49 = arith.constant dense<0.000000e+00> : vector<1x8x12xf32>
    %228 = tpu.matmul %227, %213, %cst_49 {dimension_numbers = #tpu.dot_dimension_numbers<[2], [1], [1], [2], [0, 0, 0, 1, 1, 2], [0], [0]>} : vector<1x8x8xbf16>, vector<1x8x12xbf16>, vector<1x8x12xf32> -> vector<1x8x12xf32>
    "tpu.trace_stop"() : () -> ()
    %229 = vector.shape_cast %228 : vector<1x8x12xf32> to vector<8x12xf32>
    %230 = arith.truncf %229 : vector<8x12xf32> to vector<8x12xbf16>
    %231 = vector.extract_strided_slice %114 {offsets = [36, 0], sizes = [12, 48], strides = [1, 1]} : vector<48x48xbf16> to vector<12x48xbf16>
    %cst_50 = arith.constant dense<0.000000e+00> : vector<8x48xf32>
    %232 = tpu.matmul %230, %231, %cst_50 {dimension_numbers = #tpu.dot_dimension_numbers<[1], [0], [0], [1], [0, 0, 1, 1], [], []>} : vector<8x12xbf16>, vector<12x48xbf16>, vector<8x48xf32> -> vector<8x48xf32>
    %233 = arith.addf %210, %232 : vector<8x48xf32>
    %234 = arith.addf %107, %233 : vector<8x48xf32>
    %235 = vector.broadcast %121 : vector<1x48xf32> to vector<8x48xf32>
    %236 = arith.addf %234, %235 : vector<8x48xf32>
    %cst_51 = arith.constant dense<0.000000e+00> : vector<8xf32>
    %237 = vector.multi_reduction <add>, %236, %cst_51 [1] : vector<8x48xf32> to vector<8xf32>
    %238 = vector.shape_cast %237 : vector<8xf32> to vector<8x1xf32>
    %cst_52 = arith.constant 4.800000e+01 : f32
    %239 = vector.broadcast %cst_52 : f32 to vector<8x1xf32>
    %240 = arith.divf %238, %239 : vector<8x1xf32>
    %241 = vector.broadcast %240 : vector<8x1xf32> to vector<8x48xf32>
    %242 = arith.subf %236, %241 : vector<8x48xf32>
    %243 = arith.mulf %242, %242 : vector<8x48xf32>
    %cst_53 = arith.constant dense<0.000000e+00> : vector<8xf32>
    %244 = vector.multi_reduction <add>, %243, %cst_53 [1] : vector<8x48xf32> to vector<8xf32>
    %245 = vector.shape_cast %244 : vector<8xf32> to vector<8x1xf32>
    %cst_54 = arith.constant 4.800000e+01 : f32
    %246 = vector.broadcast %cst_54 : f32 to vector<8x1xf32>
    %247 = arith.divf %245, %246 : vector<8x1xf32>
    %cst_55 = arith.constant 9.99999974E-6 : f32
    %248 = vector.broadcast %cst_55 : f32 to vector<8x1xf32>
    %249 = arith.addf %247, %248 : vector<8x1xf32>
    %250 = math.rsqrt %249 : vector<8x1xf32>
    %251 = vector.broadcast %250 : vector<8x1xf32> to vector<8x48xf32>
    %252 = arith.mulf %242, %251 : vector<8x48xf32>
    %253 = vector.broadcast %122 : vector<1x48xf32> to vector<8x48xf32>
    %254 = arith.mulf %252, %253 : vector<8x48xf32>
    %255 = vector.broadcast %123 : vector<1x48xf32> to vector<8x48xf32>
    %256 = arith.addf %254, %255 : vector<8x48xf32>
    %257 = arith.truncf %256 : vector<8x48xf32> to vector<8x48xbf16>
    %cst_56 = arith.constant dense<0.000000e+00> : vector<8x128xf32>
    %258 = tpu.matmul %257, %116, %cst_56 {dimension_numbers = #tpu.dot_dimension_numbers<[1], [0], [0], [1], [0, 0, 1, 1], [], []>} : vector<8x48xbf16>, vector<48x128xbf16>, vector<8x128xf32> -> vector<8x128xf32>
    %259 = vector.broadcast %124 : vector<1x128xf32> to vector<8x128xf32>
    %260 = arith.addf %258, %259 : vector<8x128xf32>
    %cst_57 = arith.constant 0.000000e+00 : f32
    %261 = vector.broadcast %cst_57 : f32 to vector<8x128xf32>
    %262 = arith.maximumf %260, %261 : vector<8x128xf32>
    %263 = arith.truncf %262 : vector<8x128xf32> to vector<8x128xbf16>
    %cst_58 = arith.constant dense<0.000000e+00> : vector<8x48xf32>
    %264 = tpu.matmul %263, %118, %cst_58 {dimension_numbers = #tpu.dot_dimension_numbers<[1], [0], [0], [1], [0, 0, 1, 1], [], []>} : vector<8x128xbf16>, vector<128x48xbf16>, vector<8x48xf32> -> vector<8x48xf32>
    %265 = vector.broadcast %125 : vector<1x48xf32> to vector<8x48xf32>
    %266 = arith.addf %264, %265 : vector<8x48xf32>
    %267 = arith.addf %256, %266 : vector<8x48xf32>
    %cst_59 = arith.constant dense<0.000000e+00> : vector<8xf32>
    %268 = vector.multi_reduction <add>, %267, %cst_59 [1] : vector<8x48xf32> to vector<8xf32>
    %269 = vector.shape_cast %268 : vector<8xf32> to vector<8x1xf32>
    %cst_60 = arith.constant 4.800000e+01 : f32
    %270 = vector.broadcast %cst_60 : f32 to vector<8x1xf32>
    %271 = arith.divf %269, %270 : vector<8x1xf32>
    %272 = vector.broadcast %271 : vector<8x1xf32> to vector<8x48xf32>
    %273 = arith.subf %267, %272 : vector<8x48xf32>
    %274 = arith.mulf %273, %273 : vector<8x48xf32>
    %cst_61 = arith.constant dense<0.000000e+00> : vector<8xf32>
    %275 = vector.multi_reduction <add>, %274, %cst_61 [1] : vector<8x48xf32> to vector<8xf32>
    %276 = vector.shape_cast %275 : vector<8xf32> to vector<8x1xf32>
    %cst_62 = arith.constant 4.800000e+01 : f32
    %277 = vector.broadcast %cst_62 : f32 to vector<8x1xf32>
    %278 = arith.divf %276, %277 : vector<8x1xf32>
    %cst_63 = arith.constant 9.99999974E-6 : f32
    %279 = vector.broadcast %cst_63 : f32 to vector<8x1xf32>
    %280 = arith.addf %278, %279 : vector<8x1xf32>
    %281 = math.rsqrt %280 : vector<8x1xf32>
    %282 = vector.broadcast %281 : vector<8x1xf32> to vector<8x48xf32>
    %283 = arith.mulf %273, %282 : vector<8x48xf32>
    %284 = vector.broadcast %126 : vector<1x48xf32> to vector<8x48xf32>
    %285 = arith.mulf %283, %284 : vector<8x48xf32>
    %286 = vector.broadcast %127 : vector<1x48xf32> to vector<8x48xf32>
    %287 = arith.addf %285, %286 : vector<8x48xf32>
    %c1 = arith.constant 1 : index
    %c0_64 = arith.constant 0 : index
    %c0_65 = arith.constant 0 : index
    %288 = vector.load %arg4[%c1, %c0_64, %c0_65] : memref<2x48x144xbf16, #tpu.memory_space<vmem>>, vector<1x48x144xbf16>
    %289 = vector.shape_cast %288 : vector<1x48x144xbf16> to vector<48x144xbf16>
    %c1_66 = arith.constant 1 : index
    %c0_67 = arith.constant 0 : index
    %c0_68 = arith.constant 0 : index
    %290 = vector.load %arg5[%c1_66, %c0_67, %c0_68] : memref<2x1x144xf32, #tpu.memory_space<vmem>>, vector<1x1x144xf32>
    %291 = vector.shape_cast %290 : vector<1x1x144xf32> to vector<1x144xf32>
    %c1_69 = arith.constant 1 : index
    %c0_70 = arith.constant 0 : index
    %c0_71 = arith.constant 0 : index
    %292 = vector.load %arg6[%c1_69, %c0_70, %c0_71] : memref<2x48x48xbf16, #tpu.memory_space<vmem>>, vector<1x48x48xbf16>
    %293 = vector.shape_cast %292 : vector<1x48x48xbf16> to vector<48x48xbf16>
    %c1_72 = arith.constant 1 : index
    %c0_73 = arith.constant 0 : index
    %c0_74 = arith.constant 0 : index
    %294 = vector.load %arg7[%c1_72, %c0_73, %c0_74] : memref<2x48x128xbf16, #tpu.memory_space<vmem>>, vector<1x48x128xbf16>
    %295 = vector.shape_cast %294 : vector<1x48x128xbf16> to vector<48x128xbf16>
    %c1_75 = arith.constant 1 : index
    %c0_76 = arith.constant 0 : index
    %c0_77 = arith.constant 0 : index
    %296 = vector.load %arg8[%c1_75, %c0_76, %c0_77] : memref<2x128x48xbf16, #tpu.memory_space<vmem>>, vector<1x128x48xbf16>
    %297 = vector.shape_cast %296 : vector<1x128x48xbf16> to vector<128x48xbf16>
    %c1_78 = arith.constant 1 : index
    %c0_79 = arith.constant 0 : index
    %c0_80 = arith.constant 0 : index
    %298 = vector.load %arg9[%c1_78, %c0_79, %c0_80] : memref<2x8x128xf32, #tpu.memory_space<vmem>>, vector<1x8x128xf32>
    %299 = vector.shape_cast %298 : vector<1x8x128xf32> to vector<8x128xf32>
    %300 = vector.extract_strided_slice %299 {offsets = [0, 0], sizes = [1, 48], strides = [1, 1]} : vector<8x128xf32> to vector<1x48xf32>
    %301 = vector.extract_strided_slice %299 {offsets = [1, 0], sizes = [1, 48], strides = [1, 1]} : vector<8x128xf32> to vector<1x48xf32>
    %302 = vector.extract_strided_slice %299 {offsets = [2, 0], sizes = [1, 48], strides = [1, 1]} : vector<8x128xf32> to vector<1x48xf32>
    %303 = vector.extract_strided_slice %299 {offsets = [3, 0], sizes = [1, 128], strides = [1, 1]} : vector<8x128xf32> to vector<1x128xf32>
    %304 = vector.extract_strided_slice %299 {offsets = [4, 0], sizes = [1, 48], strides = [1, 1]} : vector<8x128xf32> to vector<1x48xf32>
    %305 = vector.extract_strided_slice %299 {offsets = [5, 0], sizes = [1, 48], strides = [1, 1]} : vector<8x128xf32> to vector<1x48xf32>
    %306 = vector.extract_strided_slice %299 {offsets = [6, 0], sizes = [1, 48], strides = [1, 1]} : vector<8x128xf32> to vector<1x48xf32>
    %307 = arith.truncf %287 : vector<8x48xf32> to vector<8x48xbf16>
    %cst_81 = arith.constant dense<0.000000e+00> : vector<8x144xf32>
    %308 = tpu.matmul %307, %289, %cst_81 {dimension_numbers = #tpu.dot_dimension_numbers<[1], [0], [0], [1], [0, 0, 1, 1], [], []>} : vector<8x48xbf16>, vector<48x144xbf16>, vector<8x144xf32> -> vector<8x144xf32>
    %309 = vector.broadcast %291 : vector<1x144xf32> to vector<8x144xf32>
    %310 = arith.addf %308, %309 : vector<8x144xf32>
    %311 = vector.extract_strided_slice %310 {offsets = [0, 0], sizes = [8, 48], strides = [1, 1]} : vector<8x144xf32> to vector<8x48xf32>
    %312 = vector.shape_cast %311 : vector<8x48xf32> to vector<1x8x48xf32>
    %313 = arith.truncf %312 : vector<1x8x48xf32> to vector<1x8x48xbf16>
    %314 = vector.extract_strided_slice %310 {offsets = [0, 48], sizes = [8, 48], strides = [1, 1]} : vector<8x144xf32> to vector<8x48xf32>
    %315 = vector.shape_cast %314 : vector<8x48xf32> to vector<1x8x48xf32>
    %316 = arith.truncf %315 : vector<1x8x48xf32> to vector<1x8x48xbf16>
    %317 = vector.extract_strided_slice %310 {offsets = [0, 96], sizes = [8, 48], strides = [1, 1]} : vector<8x144xf32> to vector<8x48xf32>
    %318 = vector.shape_cast %317 : vector<8x48xf32> to vector<1x8x48xf32>
    %319 = arith.truncf %318 : vector<1x8x48xf32> to vector<1x8x48xbf16>
    %cst_82 = arith.constant 0.000000e+00 : f32
    %320 = vector.broadcast %cst_82 : f32 to vector<8x48xf32>
    %321 = vector.extract_strided_slice %313 {offsets = [0, 0, 0], sizes = [1, 8, 12], strides = [1, 1, 1]} : vector<1x8x48xbf16> to vector<1x8x12xbf16>
    %322 = vector.extract_strided_slice %316 {offsets = [0, 0, 0], sizes = [1, 8, 12], strides = [1, 1, 1]} : vector<1x8x48xbf16> to vector<1x8x12xbf16>
    %323 = vector.extract_strided_slice %319 {offsets = [0, 0, 0], sizes = [1, 8, 12], strides = [1, 1, 1]} : vector<1x8x48xbf16> to vector<1x8x12xbf16>
    "tpu.trace_start"() <{level = 10 : i32, message = "bqd,bkd->bqk"}> : () -> ()
    %cst_83 = arith.constant dense<0.000000e+00> : vector<1x8x8xf32>
    %324 = tpu.matmul %321, %322, %cst_83 {dimension_numbers = #tpu.dot_dimension_numbers<[2], [2], [1], [1], [0, 0, 0, 1, 1, 1], [0], [0]>} : vector<1x8x12xbf16>, vector<1x8x12xbf16>, vector<1x8x8xf32> -> vector<1x8x8xf32>
    "tpu.trace_stop"() : () -> ()
    %325 = vector.broadcast %108 : vector<1x1x8xf32> to vector<1x8x8xf32>
    %326 = arith.addf %324, %325 : vector<1x8x8xf32>
    %cst_84 = arith.constant dense<0xFF800000> : vector<1x8xf32>
    %327 = vector.multi_reduction <maximumf>, %326, %cst_84 [2] : vector<1x8x8xf32> to vector<1x8xf32>
    %328 = vector.shape_cast %327 : vector<1x8xf32> to vector<1x8x1xf32>
    %329 = vector.broadcast %328 : vector<1x8x1xf32> to vector<1x8x8xf32>
    %330 = arith.subf %326, %329 : vector<1x8x8xf32>
    %331 = math.exp %330 : vector<1x8x8xf32>
    %cst_85 = arith.constant dense<0.000000e+00> : vector<1x8xf32>
    %332 = vector.multi_reduction <add>, %331, %cst_85 [2] : vector<1x8x8xf32> to vector<1x8xf32>
    %333 = vector.shape_cast %332 : vector<1x8xf32> to vector<1x8x1xf32>
    %334 = tpu.reciprocal %333 {approx = true} : vector<1x8x1xf32> -> vector<1x8x1xf32>
    %335 = vector.broadcast %334 : vector<1x8x1xf32> to vector<1x8x8xf32>
    %336 = arith.mulf %331, %335 : vector<1x8x8xf32>
    %337 = arith.truncf %336 : vector<1x8x8xf32> to vector<1x8x8xbf16>
    "tpu.trace_start"() <{level = 10 : i32, message = "bqk,bkd->bqd"}> : () -> ()
    %cst_86 = arith.constant dense<0.000000e+00> : vector<1x8x12xf32>
    %338 = tpu.matmul %337, %323, %cst_86 {dimension_numbers = #tpu.dot_dimension_numbers<[2], [1], [1], [2], [0, 0, 0, 1, 1, 2], [0], [0]>} : vector<1x8x8xbf16>, vector<1x8x12xbf16>, vector<1x8x12xf32> -> vector<1x8x12xf32>
    "tpu.trace_stop"() : () -> ()
    %339 = vector.shape_cast %338 : vector<1x8x12xf32> to vector<8x12xf32>
    %340 = arith.truncf %339 : vector<8x12xf32> to vector<8x12xbf16>
    %341 = vector.extract_strided_slice %293 {offsets = [0, 0], sizes = [12, 48], strides = [1, 1]} : vector<48x48xbf16> to vector<12x48xbf16>
    %cst_87 = arith.constant dense<0.000000e+00> : vector<8x48xf32>
    %342 = tpu.matmul %340, %341, %cst_87 {dimension_numbers = #tpu.dot_dimension_numbers<[1], [0], [0], [1], [0, 0, 1, 1], [], []>} : vector<8x12xbf16>, vector<12x48xbf16>, vector<8x48xf32> -> vector<8x48xf32>
    %343 = arith.addf %320, %342 : vector<8x48xf32>
    %344 = vector.extract_strided_slice %313 {offsets = [0, 0, 12], sizes = [1, 8, 12], strides = [1, 1, 1]} : vector<1x8x48xbf16> to vector<1x8x12xbf16>
    %345 = vector.extract_strided_slice %316 {offsets = [0, 0, 12], sizes = [1, 8, 12], strides = [1, 1, 1]} : vector<1x8x48xbf16> to vector<1x8x12xbf16>
    %346 = vector.extract_strided_slice %319 {offsets = [0, 0, 12], sizes = [1, 8, 12], strides = [1, 1, 1]} : vector<1x8x48xbf16> to vector<1x8x12xbf16>
    "tpu.trace_start"() <{level = 10 : i32, message = "bqd,bkd->bqk"}> : () -> ()
    %cst_88 = arith.constant dense<0.000000e+00> : vector<1x8x8xf32>
    %347 = tpu.matmul %344, %345, %cst_88 {dimension_numbers = #tpu.dot_dimension_numbers<[2], [2], [1], [1], [0, 0, 0, 1, 1, 1], [0], [0]>} : vector<1x8x12xbf16>, vector<1x8x12xbf16>, vector<1x8x8xf32> -> vector<1x8x8xf32>
    "tpu.trace_stop"() : () -> ()
    %348 = vector.broadcast %108 : vector<1x1x8xf32> to vector<1x8x8xf32>
    %349 = arith.addf %347, %348 : vector<1x8x8xf32>
    %cst_89 = arith.constant dense<0xFF800000> : vector<1x8xf32>
    %350 = vector.multi_reduction <maximumf>, %349, %cst_89 [2] : vector<1x8x8xf32> to vector<1x8xf32>
    %351 = vector.shape_cast %350 : vector<1x8xf32> to vector<1x8x1xf32>
    %352 = vector.broadcast %351 : vector<1x8x1xf32> to vector<1x8x8xf32>
    %353 = arith.subf %349, %352 : vector<1x8x8xf32>
    %354 = math.exp %353 : vector<1x8x8xf32>
    %cst_90 = arith.constant dense<0.000000e+00> : vector<1x8xf32>
    %355 = vector.multi_reduction <add>, %354, %cst_90 [2] : vector<1x8x8xf32> to vector<1x8xf32>
    %356 = vector.shape_cast %355 : vector<1x8xf32> to vector<1x8x1xf32>
    %357 = tpu.reciprocal %356 {approx = true} : vector<1x8x1xf32> -> vector<1x8x1xf32>
    %358 = vector.broadcast %357 : vector<1x8x1xf32> to vector<1x8x8xf32>
    %359 = arith.mulf %354, %358 : vector<1x8x8xf32>
    %360 = arith.truncf %359 : vector<1x8x8xf32> to vector<1x8x8xbf16>
    "tpu.trace_start"() <{level = 10 : i32, message = "bqk,bkd->bqd"}> : () -> ()
    %cst_91 = arith.constant dense<0.000000e+00> : vector<1x8x12xf32>
    %361 = tpu.matmul %360, %346, %cst_91 {dimension_numbers = #tpu.dot_dimension_numbers<[2], [1], [1], [2], [0, 0, 0, 1, 1, 2], [0], [0]>} : vector<1x8x8xbf16>, vector<1x8x12xbf16>, vector<1x8x12xf32> -> vector<1x8x12xf32>
    "tpu.trace_stop"() : () -> ()
    %362 = vector.shape_cast %361 : vector<1x8x12xf32> to vector<8x12xf32>
    %363 = arith.truncf %362 : vector<8x12xf32> to vector<8x12xbf16>
    %364 = vector.extract_strided_slice %293 {offsets = [12, 0], sizes = [12, 48], strides = [1, 1]} : vector<48x48xbf16> to vector<12x48xbf16>
    %cst_92 = arith.constant dense<0.000000e+00> : vector<8x48xf32>
    %365 = tpu.matmul %363, %364, %cst_92 {dimension_numbers = #tpu.dot_dimension_numbers<[1], [0], [0], [1], [0, 0, 1, 1], [], []>} : vector<8x12xbf16>, vector<12x48xbf16>, vector<8x48xf32> -> vector<8x48xf32>
    %366 = arith.addf %343, %365 : vector<8x48xf32>
    %367 = vector.extract_strided_slice %313 {offsets = [0, 0, 24], sizes = [1, 8, 12], strides = [1, 1, 1]} : vector<1x8x48xbf16> to vector<1x8x12xbf16>
    %368 = vector.extract_strided_slice %316 {offsets = [0, 0, 24], sizes = [1, 8, 12], strides = [1, 1, 1]} : vector<1x8x48xbf16> to vector<1x8x12xbf16>
    %369 = vector.extract_strided_slice %319 {offsets = [0, 0, 24], sizes = [1, 8, 12], strides = [1, 1, 1]} : vector<1x8x48xbf16> to vector<1x8x12xbf16>
    "tpu.trace_start"() <{level = 10 : i32, message = "bqd,bkd->bqk"}> : () -> ()
    %cst_93 = arith.constant dense<0.000000e+00> : vector<1x8x8xf32>
    %370 = tpu.matmul %367, %368, %cst_93 {dimension_numbers = #tpu.dot_dimension_numbers<[2], [2], [1], [1], [0, 0, 0, 1, 1, 1], [0], [0]>} : vector<1x8x12xbf16>, vector<1x8x12xbf16>, vector<1x8x8xf32> -> vector<1x8x8xf32>
    "tpu.trace_stop"() : () -> ()
    %371 = vector.broadcast %108 : vector<1x1x8xf32> to vector<1x8x8xf32>
    %372 = arith.addf %370, %371 : vector<1x8x8xf32>
    %cst_94 = arith.constant dense<0xFF800000> : vector<1x8xf32>
    %373 = vector.multi_reduction <maximumf>, %372, %cst_94 [2] : vector<1x8x8xf32> to vector<1x8xf32>
    %374 = vector.shape_cast %373 : vector<1x8xf32> to vector<1x8x1xf32>
    %375 = vector.broadcast %374 : vector<1x8x1xf32> to vector<1x8x8xf32>
    %376 = arith.subf %372, %375 : vector<1x8x8xf32>
    %377 = math.exp %376 : vector<1x8x8xf32>
    %cst_95 = arith.constant dense<0.000000e+00> : vector<1x8xf32>
    %378 = vector.multi_reduction <add>, %377, %cst_95 [2] : vector<1x8x8xf32> to vector<1x8xf32>
    %379 = vector.shape_cast %378 : vector<1x8xf32> to vector<1x8x1xf32>
    %380 = tpu.reciprocal %379 {approx = true} : vector<1x8x1xf32> -> vector<1x8x1xf32>
    %381 = vector.broadcast %380 : vector<1x8x1xf32> to vector<1x8x8xf32>
    %382 = arith.mulf %377, %381 : vector<1x8x8xf32>
    %383 = arith.truncf %382 : vector<1x8x8xf32> to vector<1x8x8xbf16>
    "tpu.trace_start"() <{level = 10 : i32, message = "bqk,bkd->bqd"}> : () -> ()
    %cst_96 = arith.constant dense<0.000000e+00> : vector<1x8x12xf32>
    %384 = tpu.matmul %383, %369, %cst_96 {dimension_numbers = #tpu.dot_dimension_numbers<[2], [1], [1], [2], [0, 0, 0, 1, 1, 2], [0], [0]>} : vector<1x8x8xbf16>, vector<1x8x12xbf16>, vector<1x8x12xf32> -> vector<1x8x12xf32>
    "tpu.trace_stop"() : () -> ()
    %385 = vector.shape_cast %384 : vector<1x8x12xf32> to vector<8x12xf32>
    %386 = arith.truncf %385 : vector<8x12xf32> to vector<8x12xbf16>
    %387 = vector.extract_strided_slice %293 {offsets = [24, 0], sizes = [12, 48], strides = [1, 1]} : vector<48x48xbf16> to vector<12x48xbf16>
    %cst_97 = arith.constant dense<0.000000e+00> : vector<8x48xf32>
    %388 = tpu.matmul %386, %387, %cst_97 {dimension_numbers = #tpu.dot_dimension_numbers<[1], [0], [0], [1], [0, 0, 1, 1], [], []>} : vector<8x12xbf16>, vector<12x48xbf16>, vector<8x48xf32> -> vector<8x48xf32>
    %389 = arith.addf %366, %388 : vector<8x48xf32>
    %390 = vector.extract_strided_slice %313 {offsets = [0, 0, 36], sizes = [1, 8, 12], strides = [1, 1, 1]} : vector<1x8x48xbf16> to vector<1x8x12xbf16>
    %391 = vector.extract_strided_slice %316 {offsets = [0, 0, 36], sizes = [1, 8, 12], strides = [1, 1, 1]} : vector<1x8x48xbf16> to vector<1x8x12xbf16>
    %392 = vector.extract_strided_slice %319 {offsets = [0, 0, 36], sizes = [1, 8, 12], strides = [1, 1, 1]} : vector<1x8x48xbf16> to vector<1x8x12xbf16>
    "tpu.trace_start"() <{level = 10 : i32, message = "bqd,bkd->bqk"}> : () -> ()
    %cst_98 = arith.constant dense<0.000000e+00> : vector<1x8x8xf32>
    %393 = tpu.matmul %390, %391, %cst_98 {dimension_numbers = #tpu.dot_dimension_numbers<[2], [2], [1], [1], [0, 0, 0, 1, 1, 1], [0], [0]>} : vector<1x8x12xbf16>, vector<1x8x12xbf16>, vector<1x8x8xf32> -> vector<1x8x8xf32>
    "tpu.trace_stop"() : () -> ()
    %394 = vector.broadcast %108 : vector<1x1x8xf32> to vector<1x8x8xf32>
    %395 = arith.addf %393, %394 : vector<1x8x8xf32>
    %cst_99 = arith.constant dense<0xFF800000> : vector<1x8xf32>
    %396 = vector.multi_reduction <maximumf>, %395, %cst_99 [2] : vector<1x8x8xf32> to vector<1x8xf32>
    %397 = vector.shape_cast %396 : vector<1x8xf32> to vector<1x8x1xf32>
    %398 = vector.broadcast %397 : vector<1x8x1xf32> to vector<1x8x8xf32>
    %399 = arith.subf %395, %398 : vector<1x8x8xf32>
    %400 = math.exp %399 : vector<1x8x8xf32>
    %cst_100 = arith.constant dense<0.000000e+00> : vector<1x8xf32>
    %401 = vector.multi_reduction <add>, %400, %cst_100 [2] : vector<1x8x8xf32> to vector<1x8xf32>
    %402 = vector.shape_cast %401 : vector<1x8xf32> to vector<1x8x1xf32>
    %403 = tpu.reciprocal %402 {approx = true} : vector<1x8x1xf32> -> vector<1x8x1xf32>
    %404 = vector.broadcast %403 : vector<1x8x1xf32> to vector<1x8x8xf32>
    %405 = arith.mulf %400, %404 : vector<1x8x8xf32>
    %406 = arith.truncf %405 : vector<1x8x8xf32> to vector<1x8x8xbf16>
    "tpu.trace_start"() <{level = 10 : i32, message = "bqk,bkd->bqd"}> : () -> ()
    %cst_101 = arith.constant dense<0.000000e+00> : vector<1x8x12xf32>
    %407 = tpu.matmul %406, %392, %cst_101 {dimension_numbers = #tpu.dot_dimension_numbers<[2], [1], [1], [2], [0, 0, 0, 1, 1, 2], [0], [0]>} : vector<1x8x8xbf16>, vector<1x8x12xbf16>, vector<1x8x12xf32> -> vector<1x8x12xf32>
    "tpu.trace_stop"() : () -> ()
    %408 = vector.shape_cast %407 : vector<1x8x12xf32> to vector<8x12xf32>
    %409 = arith.truncf %408 : vector<8x12xf32> to vector<8x12xbf16>
    %410 = vector.extract_strided_slice %293 {offsets = [36, 0], sizes = [12, 48], strides = [1, 1]} : vector<48x48xbf16> to vector<12x48xbf16>
    %cst_102 = arith.constant dense<0.000000e+00> : vector<8x48xf32>
    %411 = tpu.matmul %409, %410, %cst_102 {dimension_numbers = #tpu.dot_dimension_numbers<[1], [0], [0], [1], [0, 0, 1, 1], [], []>} : vector<8x12xbf16>, vector<12x48xbf16>, vector<8x48xf32> -> vector<8x48xf32>
    %412 = arith.addf %389, %411 : vector<8x48xf32>
    %413 = arith.addf %287, %412 : vector<8x48xf32>
    %414 = vector.broadcast %300 : vector<1x48xf32> to vector<8x48xf32>
    %415 = arith.addf %413, %414 : vector<8x48xf32>
    %cst_103 = arith.constant dense<0.000000e+00> : vector<8xf32>
    %416 = vector.multi_reduction <add>, %415, %cst_103 [1] : vector<8x48xf32> to vector<8xf32>
    %417 = vector.shape_cast %416 : vector<8xf32> to vector<8x1xf32>
    %cst_104 = arith.constant 4.800000e+01 : f32
    %418 = vector.broadcast %cst_104 : f32 to vector<8x1xf32>
    %419 = arith.divf %417, %418 : vector<8x1xf32>
    %420 = vector.broadcast %419 : vector<8x1xf32> to vector<8x48xf32>
    %421 = arith.subf %415, %420 : vector<8x48xf32>
    %422 = arith.mulf %421, %421 : vector<8x48xf32>
    %cst_105 = arith.constant dense<0.000000e+00> : vector<8xf32>
    %423 = vector.multi_reduction <add>, %422, %cst_105 [1] : vector<8x48xf32> to vector<8xf32>
    %424 = vector.shape_cast %423 : vector<8xf32> to vector<8x1xf32>
    %cst_106 = arith.constant 4.800000e+01 : f32
    %425 = vector.broadcast %cst_106 : f32 to vector<8x1xf32>
    %426 = arith.divf %424, %425 : vector<8x1xf32>
    %cst_107 = arith.constant 9.99999974E-6 : f32
    %427 = vector.broadcast %cst_107 : f32 to vector<8x1xf32>
    %428 = arith.addf %426, %427 : vector<8x1xf32>
    %429 = math.rsqrt %428 : vector<8x1xf32>
    %430 = vector.broadcast %429 : vector<8x1xf32> to vector<8x48xf32>
    %431 = arith.mulf %421, %430 : vector<8x48xf32>
    %432 = vector.broadcast %301 : vector<1x48xf32> to vector<8x48xf32>
    %433 = arith.mulf %431, %432 : vector<8x48xf32>
    %434 = vector.broadcast %302 : vector<1x48xf32> to vector<8x48xf32>
    %435 = arith.addf %433, %434 : vector<8x48xf32>
    %436 = arith.truncf %435 : vector<8x48xf32> to vector<8x48xbf16>
    %cst_108 = arith.constant dense<0.000000e+00> : vector<8x128xf32>
    %437 = tpu.matmul %436, %295, %cst_108 {dimension_numbers = #tpu.dot_dimension_numbers<[1], [0], [0], [1], [0, 0, 1, 1], [], []>} : vector<8x48xbf16>, vector<48x128xbf16>, vector<8x128xf32> -> vector<8x128xf32>
    %438 = vector.broadcast %303 : vector<1x128xf32> to vector<8x128xf32>
    %439 = arith.addf %437, %438 : vector<8x128xf32>
    %cst_109 = arith.constant 0.000000e+00 : f32
    %440 = vector.broadcast %cst_109 : f32 to vector<8x128xf32>
    %441 = arith.maximumf %439, %440 : vector<8x128xf32>
    %442 = arith.truncf %441 : vector<8x128xf32> to vector<8x128xbf16>
    %cst_110 = arith.constant dense<0.000000e+00> : vector<8x48xf32>
    %443 = tpu.matmul %442, %297, %cst_110 {dimension_numbers = #tpu.dot_dimension_numbers<[1], [0], [0], [1], [0, 0, 1, 1], [], []>} : vector<8x128xbf16>, vector<128x48xbf16>, vector<8x48xf32> -> vector<8x48xf32>
    %444 = vector.broadcast %304 : vector<1x48xf32> to vector<8x48xf32>
    %445 = arith.addf %443, %444 : vector<8x48xf32>
    %446 = arith.addf %435, %445 : vector<8x48xf32>
    %cst_111 = arith.constant dense<0.000000e+00> : vector<8xf32>
    %447 = vector.multi_reduction <add>, %446, %cst_111 [1] : vector<8x48xf32> to vector<8xf32>
    %448 = vector.shape_cast %447 : vector<8xf32> to vector<8x1xf32>
    %cst_112 = arith.constant 4.800000e+01 : f32
    %449 = vector.broadcast %cst_112 : f32 to vector<8x1xf32>
    %450 = arith.divf %448, %449 : vector<8x1xf32>
    %451 = vector.broadcast %450 : vector<8x1xf32> to vector<8x48xf32>
    %452 = arith.subf %446, %451 : vector<8x48xf32>
    %453 = arith.mulf %452, %452 : vector<8x48xf32>
    %cst_113 = arith.constant dense<0.000000e+00> : vector<8xf32>
    %454 = vector.multi_reduction <add>, %453, %cst_113 [1] : vector<8x48xf32> to vector<8xf32>
    %455 = vector.shape_cast %454 : vector<8xf32> to vector<8x1xf32>
    %cst_114 = arith.constant 4.800000e+01 : f32
    %456 = vector.broadcast %cst_114 : f32 to vector<8x1xf32>
    %457 = arith.divf %455, %456 : vector<8x1xf32>
    %cst_115 = arith.constant 9.99999974E-6 : f32
    %458 = vector.broadcast %cst_115 : f32 to vector<8x1xf32>
    %459 = arith.addf %457, %458 : vector<8x1xf32>
    %460 = math.rsqrt %459 : vector<8x1xf32>
    %461 = vector.broadcast %460 : vector<8x1xf32> to vector<8x48xf32>
    %462 = arith.mulf %452, %461 : vector<8x48xf32>
    %463 = vector.broadcast %305 : vector<1x48xf32> to vector<8x48xf32>
    %464 = arith.mulf %462, %463 : vector<8x48xf32>
    %465 = vector.broadcast %306 : vector<1x48xf32> to vector<8x48xf32>
    %466 = arith.addf %464, %465 : vector<8x48xf32>
    %467 = vector.shape_cast %466 : vector<8x48xf32> to vector<1x8x48xf32>
    %c0_116 = arith.constant 0 : index
    %c0_117 = arith.constant 0 : index
    %c0_118 = arith.constant 0 : index
    %468 = vector.load %arg10[%c0_116, %c0_117, %c0_118] : memref<1x8x48xf32, #tpu.memory_space<vmem>>, vector<1x8x48xf32>
    tpu.vector_store %arg10[%c0_116, %c0_117, %c0_118], %467 {strides = array<i32>} : memref<1x8x48xf32, #tpu.memory_space<vmem>>, vector<1x8x48xf32>,
    %cst_119 = arith.constant 0.000000e+00 : f32
    %469 = vector.broadcast %cst_119 : f32 to vector<1x1x8xf32>
    %470 = arith.cmpf oeq, %108, %469 : vector<1x1x8xf32>
    %471 = arith.extui %470 : vector<1x1x8xi1> to vector<1x1x8xi32>
    %472 = arith.sitofp %471 : vector<1x1x8xi32> to vector<1x1x8xf32>
    %cst_120 = arith.constant dense<0.000000e+00> : vector<1x1xf32>
    %473 = vector.multi_reduction <add>, %472, %cst_120 [2] : vector<1x1x8xf32> to vector<1x1xf32>
    %474 = vector.shape_cast %473 : vector<1x1xf32> to vector<1x1x1xf32>
    %cst_121 = arith.constant 9.99999997E-7 : f32
    %475 = vector.broadcast %cst_121 : f32 to vector<1x1x1xf32>
    %476 = arith.maximumf %474, %475 : vector<1x1x1xf32>
    %477 = arith.truncf %472 : vector<1x1x8xf32> to vector<1x1x8xbf16>
    %478 = arith.truncf %467 : vector<1x8x48xf32> to vector<1x8x48xbf16>
    "tpu.trace_start"() <{level = 10 : i32, message = "bqt,btd->bqd"}> : () -> ()
    %cst_122 = arith.constant dense<0.000000e+00> : vector<1x1x48xf32>
    %479 = tpu.matmul %477, %478, %cst_122 {dimension_numbers = #tpu.dot_dimension_numbers<[2], [1], [1], [2], [0, 0, 0, 1, 1, 2], [0], [0]>} : vector<1x1x8xbf16>, vector<1x8x48xbf16>, vector<1x1x48xf32> -> vector<1x1x48xf32>
    "tpu.trace_stop"() : () -> ()
    %480 = tpu.reciprocal %476 {approx = true} : vector<1x1x1xf32> -> vector<1x1x1xf32>
    %481 = vector.broadcast %480 : vector<1x1x1xf32> to vector<1x1x48xf32>
    %482 = arith.mulf %479, %481 : vector<1x1x48xf32>
    %c0_123 = arith.constant 0 : index
    %c0_124 = arith.constant 0 : index
    %c0_125 = arith.constant 0 : index
    %483 = vector.load %arg11[%c0_123, %c0_124, %c0_125] : memref<1x1x48xf32, #tpu.memory_space<vmem>>, vector<1x1x48xf32>
    tpu.vector_store %arg11[%c0_123, %c0_124, %c0_125], %482 {strides = array<i32>} : memref<1x1x48xf32, #tpu.memory_space<vmem>>, vector<1x1x48xf32>,
    return
  }
  func.func @transform_0(%arg0: i32) -> (i32, i32, i32) {
    %c0_i32 = arith.constant 0 : i32
    %c0_i32_0 = arith.constant 0 : i32
    %c0_i32_1 = arith.constant 0 : i32
    return %arg0, %c0_i32, %c0_i32_0 : i32, i32, i32
  }
  func.func @transform_1(%arg0: i32) -> (i32, i32, i32) {
    %c0_i32 = arith.constant 0 : i32
    %c0_i32_0 = arith.constant 0 : i32
    %c0_i32_1 = arith.constant 0 : i32
    return %arg0, %c0_i32, %c0_i32_0 : i32, i32, i32
  }
  func.func @transform_2(%arg0: i32) -> (i32, i32) {
    %c0_i32 = arith.constant 0 : i32
    %c0_i32_0 = arith.constant 0 : i32
    %c0_i32_1 = arith.constant 0 : i32
    return %c0_i32, %c0_i32_0 : i32, i32
  }
  func.func @transform_3(%arg0: i32) -> (i32, i32, i32) {
    %c0_i32 = arith.constant 0 : i32
    %c0_i32_0 = arith.constant 0 : i32
    %c0_i32_1 = arith.constant 0 : i32
    %c0_i32_2 = arith.constant 0 : i32
    return %c0_i32, %c0_i32_0, %c0_i32_1 : i32, i32, i32
  }
  func.func @transform_4(%arg0: i32) -> (i32, i32, i32) {
    %c0_i32 = arith.constant 0 : i32
    %c0_i32_0 = arith.constant 0 : i32
    %c0_i32_1 = arith.constant 0 : i32
    %c0_i32_2 = arith.constant 0 : i32
    return %c0_i32, %c0_i32_0, %c0_i32_1 : i32, i32, i32
  }
  func.func @transform_5(%arg0: i32) -> (i32, i32, i32) {
    %c0_i32 = arith.constant 0 : i32
    %c0_i32_0 = arith.constant 0 : i32
    %c0_i32_1 = arith.constant 0 : i32
    %c0_i32_2 = arith.constant 0 : i32
    return %c0_i32, %c0_i32_0, %c0_i32_1 : i32, i32, i32
  }
  func.func @transform_6(%arg0: i32) -> (i32, i32, i32) {
    %c0_i32 = arith.constant 0 : i32
    %c0_i32_0 = arith.constant 0 : i32
    %c0_i32_1 = arith.constant 0 : i32
    %c0_i32_2 = arith.constant 0 : i32
    return %c0_i32, %c0_i32_0, %c0_i32_1 : i32, i32, i32
  }
  func.func @transform_7(%arg0: i32) -> (i32, i32, i32) {
    %c0_i32 = arith.constant 0 : i32
    %c0_i32_0 = arith.constant 0 : i32
    %c0_i32_1 = arith.constant 0 : i32
    %c0_i32_2 = arith.constant 0 : i32
    return %c0_i32, %c0_i32_0, %c0_i32_1 : i32, i32, i32
  }
  func.func @transform_8(%arg0: i32) -> (i32, i32, i32) {
    %c0_i32 = arith.constant 0 : i32
    %c0_i32_0 = arith.constant 0 : i32
    %c0_i32_1 = arith.constant 0 : i32
    %c0_i32_2 = arith.constant 0 : i32
    return %c0_i32, %c0_i32_0, %c0_i32_1 : i32, i32, i32
  }
  func.func @transform_9(%arg0: i32) -> (i32, i32, i32) {
    %c0_i32 = arith.constant 0 : i32
    %c0_i32_0 = arith.constant 0 : i32
    %c0_i32_1 = arith.constant 0 : i32
    return %arg0, %c0_i32, %c0_i32_0 : i32, i32, i32
  }
  func.func @transform_10(%arg0: i32) -> (i32, i32, i32) {
    %c0_i32 = arith.constant 0 : i32
    %c0_i32_0 = arith.constant 0 : i32
    %c0_i32_1 = arith.constant 0 : i32
    return %arg0, %c0_i32, %c0_i32_0 : i32, i32, i32
  }
}

</mosaic_0001>

<llo_original>
// kernel: tpu_custom_call.1
$region0: #{tpu_custom_call.1}
  #allocation0 [shape = 'u32[]', space=smem, size = 0x4, offset = 0x4, fixed_abs, tag = 'smem constant byte address 0x4 - core index']
  #allocation1 [shape = 'u32[144,128]{1,0:T(1,128)}', space=vmem, size = 0x12000, scoped, tag = 'internal scratch']
  %s0 = inlined_call_operand.hbm [shape: f32[2,8,8], index: 0, kind: input, shape index: {}]
  %s1 = inlined_call_operand.vmem [shape: f32[2,1,8], index: 1, kind: input, shape index: {}]
  %s2 = inlined_call_operand.hbm [shape: f32[16,48], index: 2, kind: input, shape index: {}]
  %s3 = inlined_call_operand.vmem [shape: bf16[2,48,144], index: 3, kind: input, shape index: {}]
  %s4 = inlined_call_operand.hbm [shape: f32[2,1,144], index: 4, kind: input, shape index: {}]
  %s5 = inlined_call_operand.vmem [shape: bf16[2,48,48], index: 5, kind: input, shape index: {}]
  %s6 = inlined_call_operand.vmem [shape: bf16[2,48,128], index: 6, kind: input, shape index: {}]
  %s7 = inlined_call_operand.vmem [shape: bf16[2,128,48], index: 7, kind: input, shape index: {}]
  %s8 = inlined_call_operand.hbm [shape: f32[2,8,128], index: 8, kind: input, shape index: {}]
  %s9 = inlined_call_operand.hbm [shape: f32[2,8,48], index: 9, kind: output, shape index: {0}]
  %s10 = inlined_call_operand.hbm [shape: f32[2,1,48], index: 10, kind: output, shape index: {1}]
  %11 = xla_tuple %s9, %s10
  %s12 = sld [smem:[#allocation0]]
  $region93: #{tpu_custom_call.1} parent=0
    _
  %s14 = ssub.s32 1, %s12
  %s15 = scalar_select 0, %s14, %s12
  $region1: #{tpu_custom_call.1} parent=0
    #allocation2 [shape = 'u8[8192]{0}', space=vmem, size = 0x2000, scoped, tag = 'input window, operand 0']
    #allocation3 [shape = 's32[2]{0}', space=sflag, size = 0x8, scoped, tag = 'scoped memory for tpu_custom_call.1']
    #allocation4 [shape = 's32[2]{0}', space=sflag, size = 0x8, scoped, tag = 'scoped memory for tpu_custom_call.1']
    #allocation5 [shape = 'u8[8192]{0}', space=vmem, size = 0x2000, scoped, tag = 'input window, operand 2, single buffered']
    #allocation6 [shape = 's32[1]{0}', space=sflag, size = 0x4, scoped, tag = 'scoped memory for tpu_custom_call.1']
    #allocation7 [shape = 'u8[2048]{0}', space=vmem, size = 0x800, scoped, tag = 'input window, operand 4, single buffered']
    #allocation8 [shape = 'u8[8192]{0}', space=vmem, size = 0x2000, scoped, tag = 'input window, operand 8, single buffered']
    #allocation9 [shape = 's32[1]{0}', space=sflag, size = 0x4, scoped, tag = 'scoped memory for tpu_custom_call.1']
    #allocation10 [shape = 'u8[8192]{0}', space=vmem, size = 0x2000, scoped, tag = 'output window, operand 0']
    #allocation11 [shape = 'u8[1024]{0}', space=vmem, size = 0x400, scoped, tag = 'output window, operand 1']
    #allocation12 [shape = 's32[2]{0}', space=sflag, size = 0x8, scoped, tag = 'scoped memory for tpu_custom_call.1']
    %16 = vsyncpa [#allocation3], 0
    %s17 = scalar_lea.sflag [#allocation3], 1
    %18 = vsyncpa %s17, 0
    %19 = vsyncpa [#allocation6], 0
    %20 = vsyncpa [#allocation9], 0
    %21 = vsyncpa [#allocation4], 0
    %s22 = scalar_lea.sflag [#allocation4], 1
    %23 = vsyncpa %s22, 0
    %24 = vsyncpa [#allocation12], 0
    %s25 = scalar_lea.sflag [#allocation12], 1
    %26 = vsyncpa %s25, 0
    loop: start=0, step=1, limit=4
    $region2: #{tpu_custom_call.1} parent=1 // loop_pre_header
      _
    $region3: #{tpu_custom_call.1} parent=1 // loop_header
      %s28 = sphi 0, %s32
      %p29 = scmp.ge.s32.totalorder %s28, 4
      %s38 = sphi 0, %s40
      %s41 = sphi 0, %s38
      %s42 = sphi 0, %s41
      %s58 = sphi 0, %s42
      %s64 = sphi 0, %s66
      %s67 = sphi 0, %s64
      %s68 = sphi 0, %s67
      %s84 = sphi 0, %s68
      %s88 = sphi 0, %s88
      %s90 = sphi 0, %s88
      %s91 = sphi 0, %s90
      %s105 = sphi 0, %s91
      %s109 = sphi 0, %s109
      %s111 = sphi 0, %s109
      %s112 = sphi 0, %s111
      %s126 = sphi 0, %s112
      %s130 = sphi 0, %s130
      %s132 = sphi 0, %s130
      %s133 = sphi 0, %s132
      %s147 = sphi 0, %s133
      %s151 = sphi 0, %s151
      %s153 = sphi 0, %s151
      %s154 = sphi 0, %s153
      %s168 = sphi 0, %s154
      %s172 = sphi 0, %s172
      %s174 = sphi 0, %s172
      %s175 = sphi 0, %s174
      %s189 = sphi 0, %s175
      %s193 = sphi 0, %s193
      %s195 = sphi 0, %s193
      %s196 = sphi 0, %s195
      %s210 = sphi 0, %s196
      %s214 = sphi 0, %s214
      %s216 = sphi 0, %s214
      %s217 = sphi 0, %s216
      %s231 = sphi 0, %s217
      %s237 = sphi 0, %s239
      %s240 = sphi 0, %s237
      %s241 = sphi 0, %s240
      %s257 = sphi 0, %s241
      %s263 = sphi 0, %s265
      %s266 = sphi 0, %s263
      %s267 = sphi 0, %s266
      %s283 = sphi 0, %s267
    $region4: #{tpu_custom_call.1} parent=1 // loop_header_branch
      %31 = sbr.rel (%p29) target = $region8
    $region5: #{tpu_custom_call.1} parent=1 // loop_body
      %s33 = ssub.s32 %s28, 1
      %s34 = ssub.s32 %s28, 2
      %s35 = sadd.s32 %s28, 1
      %s36 = ssub.s32 %s28, %s35
      %p37 = scmp.eq.s32.totalorder %s36, 0
      %s39 = sadd.s32 %s38, 1
      %s40 = scalar_select %p37, %s38, %s39
      %p43 = pneg %p37
      %p44 = scmp.eq.s32.totalorder %s28, 1
      %p45 = por %p43, %p44
      %p46 = scmp.ne.s32.totalorder %s38, %s41
      %p47 = scmp.eq.s32.totalorder %s28, 0
      %p48 = por %p46, %p47
      %p49 = scmp.ne.s32.totalorder %s38, %s41
      %p50 = scmp.eq.s32.totalorder %s33, 1
      %p51 = por %p49, %p50
      %p52 = scmp.ne.s32.totalorder %s41, %s42
      %p53 = scmp.eq.s32.totalorder %s33, 0
      %p54 = por %p52, %p53
      %p55 = scmp.ne.s32.totalorder %s41, %s42
      %p56 = scmp.eq.s32.totalorder %s34, 1
      %p57 = por %p55, %p56
      %p59 = scmp.ne.s32.totalorder %s42, %s58
      %p60 = scmp.eq.s32.totalorder %s34, 0
      %p61 = por %p59, %p60
      %s62 = ssub.s32 %s28, %s35
      %p63 = scmp.eq.s32.totalorder %s62, 0
      %s65 = sadd.s32 %s64, 1
      %s66 = scalar_select %p63, %s64, %s65
      %p69 = pneg %p63
      %p70 = scmp.eq.s32.totalorder %s28, 1
      %p71 = por %p69, %p70
      %p72 = scmp.ne.s32.totalorder %s64, %s67
      %p73 = scmp.eq.s32.totalorder %s28, 0
      %p74 = por %p72, %p73
      %p75 = scmp.ne.s32.totalorder %s64, %s67
      %p76 = scmp.eq.s32.totalorder %s33, 1
      %p77 = por %p75, %p76
      %p78 = scmp.ne.s32.totalorder %s67, %s68
      %p79 = scmp.eq.s32.totalorder %s33, 0
      %p80 = por %p78, %p79
      %p81 = scmp.ne.s32.totalorder %s67, %s68
      %p82 = scmp.eq.s32.totalorder %s34, 1
      %p83 = por %p81, %p82
      %p85 = scmp.ne.s32.totalorder %s68, %s84
      %p86 = scmp.eq.s32.totalorder %s34, 0
      %p87 = por %p85, %p86
      %s89 = sadd.s32 %s88, 1
      %p92 = scmp.eq.s32.totalorder %s28, 1
      %p93 = scmp.ne.s32.totalorder %s88, %s90
      %p94 = scmp.eq.s32.totalorder %s28, 0
      %p95 = por %p93, %p94
      %p96 = scmp.ne.s32.totalorder %s88, %s90
      %p97 = scmp.eq.s32.totalorder %s33, 1
      %p98 = por %p96, %p97
      %p99 = scmp.ne.s32.totalorder %s90, %s91
      %p100 = scmp.eq.s32.totalorder %s33, 0
      %p101 = por %p99, %p100
      %p102 = scmp.ne.s32.totalorder %s90, %s91
      %p103 = scmp.eq.s32.totalorder %s34, 1
      %p104 = por %p102, %p103
      %p106 = scmp.ne.s32.totalorder %s91, %s105
      %p107 = scmp.eq.s32.totalorder %s34, 0
      %p108 = por %p106, %p107
      %s110 = sadd.s32 %s109, 1
      %p113 = scmp.eq.s32.totalorder %s28, 1
      %p114 = scmp.ne.s32.totalorder %s109, %s111
      %p115 = scmp.eq.s32.totalorder %s28, 0
      %p116 = por %p114, %p115
      %p117 = scmp.ne.s32.totalorder %s109, %s111
      %p118 = scmp.eq.s32.totalorder %s33, 1
      %p119 = por %p117, %p118
      %p120 = scmp.ne.s32.totalorder %s111, %s112
      %p121 = scmp.eq.s32.totalorder %s33, 0
      %p122 = por %p120, %p121
      %p123 = scmp.ne.s32.totalorder %s111, %s112
      %p124 = scmp.eq.s32.totalorder %s34, 1
      %p125 = por %p123, %p124
      %p127 = scmp.ne.s32.totalorder %s112, %s126
      %p128 = scmp.eq.s32.totalorder %s34, 0
      %p129 = por %p127, %p128
      %s131 = sadd.s32 %s130, 1
      %p134 = scmp.eq.s32.totalorder %s28, 1
      %p135 = scmp.ne.s32.totalorder %s130, %s132
      %p136 = scmp.eq.s32.totalorder %s28, 0
      %p137 = por %p135, %p136
      %p138 = scmp.ne.s32.totalorder %s130, %s132
      %p139 = scmp.eq.s32.totalorder %s33, 1
      %p140 = por %p138, %p139
      %p141 = scmp.ne.s32.totalorder %s132, %s133
      %p142 = scmp.eq.s32.totalorder %s33, 0
      %p143 = por %p141, %p142
      %p144 = scmp.ne.s32.totalorder %s132, %s133
      %p145 = scmp.eq.s32.totalorder %s34, 1
      %p146 = por %p144, %p145
      %p148 = scmp.ne.s32.totalorder %s133, %s147
      %p149 = scmp.eq.s32.totalorder %s34, 0
      %p150 = por %p148, %p149
      %s152 = sadd.s32 %s151, 1
      %p155 = scmp.eq.s32.totalorder %s28, 1
      %p156 = scmp.ne.s32.totalorder %s151, %s153
      %p157 = scmp.eq.s32.totalorder %s28, 0
      %p158 = por %p156, %p157
      %p159 = scmp.ne.s32.totalorder %s151, %s153
      %p160 = scmp.eq.s32.totalorder %s33, 1
      %p161 = por %p159, %p160
      %p162 = scmp.ne.s32.totalorder %s153, %s154
      %p163 = scmp.eq.s32.totalorder %s33, 0
      %p164 = por %p162, %p163
      %p165 = scmp.ne.s32.totalorder %s153, %s154
      %p166 = scmp.eq.s32.totalorder %s34, 1
      %p167 = por %p165, %p166
      %p169 = scmp.ne.s32.totalorder %s154, %s168
      %p170 = scmp.eq.s32.totalorder %s34, 0
      %p171 = por %p169, %p170
      %s173 = sadd.s32 %s172, 1
      %p176 = scmp.eq.s32.totalorder %s28, 1
      %p177 = scmp.ne.s32.totalorder %s172, %s174
      %p178 = scmp.eq.s32.totalorder %s28, 0
      %p179 = por %p177, %p178
      %p180 = scmp.ne.s32.totalorder %s172, %s174
      %p181 = scmp.eq.s32.totalorder %s33, 1
      %p182 = por %p180, %p181
      %p183 = scmp.ne.s32.totalorder %s174, %s175
      %p184 = scmp.eq.s32.totalorder %s33, 0
      %p185 = por %p183, %p184
      %p186 = scmp.ne.s32.totalorder %s174, %s175
      %p187 = scmp.eq.s32.totalorder %s34, 1
      %p188 = por %p186, %p187
      %p190 = scmp.ne.s32.totalorder %s175, %s189
      %p191 = scmp.eq.s32.totalorder %s34, 0
      %p192 = por %p190, %p191
      %s194 = sadd.s32 %s193, 1
      %p197 = scmp.eq.s32.totalorder %s28, 1
      %p198 = scmp.ne.s32.totalorder %s193, %s195
      %p199 = scmp.eq.s32.totalorder %s28, 0
      %p200 = por %p198, %p199
      %p201 = scmp.ne.s32.totalorder %s193, %s195
      %p202 = scmp.eq.s32.totalorder %s33, 1
      %p203 = por %p201, %p202
      %p204 = scmp.ne.s32.totalorder %s195, %s196
      %p205 = scmp.eq.s32.totalorder %s33, 0
      %p206 = por %p204, %p205
      %p207 = scmp.ne.s32.totalorder %s195, %s196
      %p208 = scmp.eq.s32.totalorder %s34, 1
      %p209 = por %p207, %p208
      %p211 = scmp.ne.s32.totalorder %s196, %s210
      %p212 = scmp.eq.s32.totalorder %s34, 0
      %p213 = por %p211, %p212
      %s215 = sadd.s32 %s214, 1
      %p218 = scmp.eq.s32.totalorder %s28, 1
      %p219 = scmp.ne.s32.totalorder %s214, %s216
      %p220 = scmp.eq.s32.totalorder %s28, 0
      %p221 = por %p219, %p220
      %p222 = scmp.ne.s32.totalorder %s214, %s216
      %p223 = scmp.eq.s32.totalorder %s33, 1
      %p224 = por %p222, %p223
      %p225 = scmp.ne.s32.totalorder %s216, %s217
      %p226 = scmp.eq.s32.totalorder %s33, 0
      %p227 = por %p225, %p226
      %p228 = scmp.ne.s32.totalorder %s216, %s217
      %p229 = scmp.eq.s32.totalorder %s34, 1
      %p230 = por %p228, %p229
      %p232 = scmp.ne.s32.totalorder %s217, %s231
      %p233 = scmp.eq.s32.totalorder %s34, 0
      %p234 = por %p232, %p233
      %s235 = ssub.s32 %s28, %s35
      %p236 = scmp.eq.s32.totalorder %s235, 0
      %s238 = sadd.s32 %s237, 1
      %s239 = scalar_select %p236, %s237, %s238
      %p242 = pneg %p236
      %p243 = scmp.eq.s32.totalorder %s28, 1
      %p244 = por %p242, %p243
      %p245 = scmp.ne.s32.totalorder %s237, %s240
      %p246 = scmp.eq.s32.totalorder %s28, 0
      %p247 = por %p245, %p246
      %p248 = scmp.ne.s32.totalorder %s237, %s240
      %p249 = scmp.eq.s32.totalorder %s33, 1
      %p250 = por %p248, %p249
      %p251 = scmp.ne.s32.totalorder %s240, %s241
      %p252 = scmp.eq.s32.totalorder %s33, 0
      %p253 = por %p251, %p252
      %p254 = scmp.ne.s32.totalorder %s240, %s241
      %p255 = scmp.eq.s32.totalorder %s34, 1
      %p256 = por %p254, %p255
      %p258 = scmp.ne.s32.totalorder %s241, %s257
      %p259 = scmp.eq.s32.totalorder %s34, 0
      %p260 = por %p258, %p259
      %s261 = ssub.s32 %s28, %s35
      %p262 = scmp.eq.s32.totalorder %s261, 0
      %s264 = sadd.s32 %s263, 1
      %s265 = scalar_select %p262, %s263, %s264
      %p268 = pneg %p262
      %p269 = scmp.eq.s32.totalorder %s28, 1
      %p270 = por %p268, %p269
      %p271 = scmp.ne.s32.totalorder %s263, %s266
      %p272 = scmp.eq.s32.totalorder %s28, 0
      %p273 = por %p271, %p272
      %p274 = scmp.ne.s32.totalorder %s263, %s266
      %p275 = scmp.eq.s32.totalorder %s33, 1
      %p276 = por %p274, %p275
      %p277 = scmp.ne.s32.totalorder %s266, %s267
      %p278 = scmp.eq.s32.totalorder %s33, 0
      %p279 = por %p277, %p278
      %p280 = scmp.ne.s32.totalorder %s266, %s267
      %p281 = scmp.eq.s32.totalorder %s34, 1
      %p282 = por %p280, %p281
      %p284 = scmp.ne.s32.totalorder %s267, %s283
      %p285 = scmp.eq.s32.totalorder %s34, 0
      %p286 = por %p284, %p285
      %p287 = scmp.le.s32.totalorder 1, %s28
      %p288 = scmp.lt.s32.totalorder %s28, 3
      %p289 = pnand %p287, %p288
      %p290 = pneg %p289
      // Predicated region
      $region9: #{tpu_custom_call.1} parent=5 // pred_check
        _
      $region10: #{tpu_custom_call.1} parent=5 // pred_check_branch
        %292 = sbr.rel (%p289) target = $region12
      $region11: #{tpu_custom_call.1} parent=5 // pred_region
        %s293 = ssub.s32 %s28, 1
        // Predicated region
        $region13: #{tpu_custom_call.1} parent=11 // pred_check
          %p294 = pneg %p101
        $region14: #{tpu_custom_call.1} parent=11 // pred_check_branch
          %296 = sbr.rel (%p294) target = $region16
        $region15: #{tpu_custom_call.1} parent=11 // pred_region
          %s298 = ssub.s32 256, 256
          %299 = vsyncadd [#allocation6], %s298
          %s300 = sshll.u32 [#allocation5], 4
          %s301 = int_to_ptr.vmem [resolvable:$true] %s300
          %306 = dma.hbm_to_vmem [thread:$0]  %s2, 256, %s301, [#allocation6], 128, 128, 8
        $region16: #{tpu_custom_call.1} parent=11 // pred_fallthru
          _
        // Predicated region
        $region17: #{tpu_custom_call.1} parent=11 // pred_check
          %p307 = pneg %p122
        $region18: #{tpu_custom_call.1} parent=11 // pred_check_branch
          %309 = sbr.rel (%p307) target = $region20
        $region19: #{tpu_custom_call.1} parent=11 // pred_region
          _
        $region20: #{tpu_custom_call.1} parent=11 // pred_fallthru
          _
        // Predicated region
        $region21: #{tpu_custom_call.1} parent=11 // pred_check
          %p310 = pneg %p143
        $region22: #{tpu_custom_call.1} parent=11 // pred_check_branch
          %312 = sbr.rel (%p310) target = $region24
        $region23: #{tpu_custom_call.1} parent=11 // pred_region
          %s314 = ssub.s32 64, 64
          %315 = vsyncadd [#allocation6], %s314
          %s316 = sshll.u32 [#allocation7], 4
          %s317 = int_to_ptr.vmem [resolvable:$true] %s316
          %322 = dma.hbm_to_vmem [thread:$0]  %s4, 64, %s317, [#allocation6], 32, 32, 2
        $region24: #{tpu_custom_call.1} parent=11 // pred_fallthru
          _
        // Predicated region
        $region25: #{tpu_custom_call.1} parent=11 // pred_check
          %p323 = pneg %p164
        $region26: #{tpu_custom_call.1} parent=11 // pred_check_branch
          %325 = sbr.rel (%p323) target = $region28
        $region27: #{tpu_custom_call.1} parent=11 // pred_region
          _
        $region28: #{tpu_custom_call.1} parent=11 // pred_fallthru
          _
        // Predicated region
        $region29: #{tpu_custom_call.1} parent=11 // pred_check
          %p326 = pneg %p185
        $region30: #{tpu_custom_call.1} parent=11 // pred_check_branch
          %328 = sbr.rel (%p326) target = $region32
        $region31: #{tpu_custom_call.1} parent=11 // pred_region
          _
        $region32: #{tpu_custom_call.1} parent=11 // pred_fallthru
          _
        // Predicated region
        $region33: #{tpu_custom_call.1} parent=11 // pred_check
          %p329 = pneg %p206
        $region34: #{tpu_custom_call.1} parent=11 // pred_check_branch
          %331 = sbr.rel (%p329) target = $region36
        $region35: #{tpu_custom_call.1} parent=11 // pred_region
          _
        $region36: #{tpu_custom_call.1} parent=11 // pred_fallthru
          _
        // Predicated region
        $region37: #{tpu_custom_call.1} parent=11 // pred_check
          %p332 = pneg %p227
        $region38: #{tpu_custom_call.1} parent=11 // pred_check_branch
          %334 = sbr.rel (%p332) target = $region40
        $region39: #{tpu_custom_call.1} parent=11 // pred_region
          %s336 = ssub.s32 256, 256
          %337 = vsyncadd [#allocation9], %s336
          %s338 = sshll.u32 [#allocation8], 4
          %s339 = int_to_ptr.vmem [resolvable:$true] %s338
          %344 = dma.hbm_to_vmem [thread:$0]  %s8, 256, %s339, [#allocation9], 128, 128, 8
        $region40: #{tpu_custom_call.1} parent=11 // pred_fallthru
          _
      $region12: #{tpu_custom_call.1} parent=5 // pred_fallthru
        _
      %p345 = scmp.lt.s32.totalorder %s28, 2
      // Predicated region
      $region41: #{tpu_custom_call.1} parent=5 // pred_check
        %p346 = pneg %p345
      $region42: #{tpu_custom_call.1} parent=5 // pred_check_branch
        %348 = sbr.rel (%p346) target = $region44
      $region43: #{tpu_custom_call.1} parent=5 // pred_region
        // Predicated region
        $region45: #{tpu_custom_call.1} parent=43 // pred_check
          %p349 = pneg %p48
        $region46: #{tpu_custom_call.1} parent=43 // pred_check_branch
          %351 = sbr.rel (%p349) target = $region48
        $region47: #{tpu_custom_call.1} parent=43 // pred_region
          %s352 = sand.u32 %s38, 1
          %s353 = scalar_lea.sflag [#allocation3], %s352
          %s354 = sand.u32 %s38, 1
          %s355 = smul.addr %s354, 8
          %s356 = scalar_lea.vmem [#allocation2], %s355
          %s358 = ssub.s32 128, 128
          %359 = vsyncadd %s353, %s358
          %s360 = smul.addr %s28, 128
          %s361 = scalar_lea.hbm %s0, %s360
          %s363 = sshll.u32 %s356, 4
          %s364 = int_to_ptr.vmem [resolvable:$true] %s363
          %366 = dma.hbm_to_vmem [thread:$0]  %s361, 128, %s364, %s353
        $region48: #{tpu_custom_call.1} parent=43 // pred_fallthru
          _
        // Predicated region
        $region49: #{tpu_custom_call.1} parent=43 // pred_check
          %p367 = pneg %p74
        $region50: #{tpu_custom_call.1} parent=43 // pred_check_branch
          %369 = sbr.rel (%p367) target = $region52
        $region51: #{tpu_custom_call.1} parent=43 // pred_region
          %p370 = scmp.lt.s32.totalorder %s28, 1
          %s371 = scalar_select %p370, %s28, 1
          %s372 = scalar_lea.vmem %s1, %s371
        $region52: #{tpu_custom_call.1} parent=43 // pred_fallthru
          _
      $region44: #{tpu_custom_call.1} parent=5 // pred_fallthru
        _
      %p373 = scmp.le.s32.totalorder 1, %s28
      %p374 = scmp.lt.s32.totalorder %s28, 3
      %p375 = pnand %p373, %p374
      %p376 = pneg %p375
      // Predicated region
      $region53: #{tpu_custom_call.1} parent=5 // pred_check
        _
      $region54: #{tpu_custom_call.1} parent=5 // pred_check_branch
        %378 = sbr.rel (%p375) target = $region56
      $region55: #{tpu_custom_call.1} parent=5 // pred_region
        %s379 = ssub.s32 %s28, 1
        %s380 = sand.u32 %s41, 1
        %s381 = scalar_lea.sflag [#allocation3], %s380
        %s382 = sand.u32 %s41, 1
        %s383 = smul.addr %s382, 8
        %s384 = scalar_lea.vmem [#allocation2], %s383
        // Predicated region
        $region57: #{tpu_custom_call.1} parent=55 // pred_check
          %p385 = pneg %p54
        $region58: #{tpu_custom_call.1} parent=55 // pred_check_branch
          %387 = sbr.rel (%p385) target = $region60
        $region59: #{tpu_custom_call.1} parent=55 // pred_region
          %388 = dma.done %s381, 128
        $region60: #{tpu_custom_call.1} parent=55 // pred_fallthru
          _
        // Predicated region
        $region61: #{tpu_custom_call.1} parent=55 // pred_check
          %p389 = pneg %p101
        $region62: #{tpu_custom_call.1} parent=55 // pred_check_branch
          %391 = sbr.rel (%p389) target = $region64
        $region63: #{tpu_custom_call.1} parent=55 // pred_region
          %392 = dma.done [#allocation6], 256
        $region64: #{tpu_custom_call.1} parent=55 // pred_fallthru
          _
        // Predicated region
        $region65: #{tpu_custom_call.1} parent=55 // pred_check
          %p393 = pneg %p143
        $region66: #{tpu_custom_call.1} parent=55 // pred_check_branch
          %395 = sbr.rel (%p393) target = $region68
        $region67: #{tpu_custom_call.1} parent=55 // pred_region
          %396 = dma.done [#allocation6], 64
        $region68: #{tpu_custom_call.1} parent=55 // pred_fallthru
          _
        // Predicated region
        $region69: #{tpu_custom_call.1} parent=55 // pred_check
          %p397 = pneg %p227
        $region70: #{tpu_custom_call.1} parent=55 // pred_check_branch
          %399 = sbr.rel (%p397) target = $region72
        $region71: #{tpu_custom_call.1} parent=55 // pred_region
          %400 = dma.done [#allocation9], 256
        $region72: #{tpu_custom_call.1} parent=55 // pred_fallthru
          _
        %s401 = sand.u32 %s41, 1
        %s402 = scalar_lea.sflag [#allocation3], %s401
        %s403 = sand.u32 %s41, 1
        %s404 = smul.addr %s403, 8
        %s405 = scalar_lea.vmem [#allocation2], %s404
        %p406 = pneg %p54
        %p407 = pneg %p51
        %p408 = scmp.lt.s32.totalorder %s33, 1
        %s409 = scalar_select %p408, %s33, 1
        %s410 = scalar_lea.vmem %s1, %s409
        %p411 = pneg %p80
        %p412 = pneg %p77
        %p413 = pneg %p101
        %p414 = pneg %p98
        %p415 = pneg %p122
        %p416 = pneg %p119
        %p417 = pneg %p143
        %p418 = pneg %p140
        %p419 = pneg %p164
        %p420 = pneg %p161
        %p421 = pneg %p185
        %p422 = pneg %p182
        %p423 = pneg %p206
        %p424 = pneg %p203
        %p425 = pneg %p227
        %p426 = pneg %p224
        %p427 = pneg %p253
        %p428 = pneg %p250
        %s429 = sand.u32 %s240, 1
        %s430 = scalar_lea.sflag [#allocation4], %s429
        %s431 = sand.u32 %s240, 1
        %s432 = smul.addr %s431, 8
        %s433 = scalar_lea.vmem [#allocation10], %s432
        %p434 = pneg %p279
        %p435 = pneg %p276
        %s436 = sand.u32 %s266, 1
        %s437 = scalar_lea.sflag [#allocation12], %s436
        %s438 = sand.u32 %s266, 1
        %s439 = scalar_lea.vmem [#allocation11], %s438
        %p440 = scmp.lt.s32.totalorder %s33, 1
        %s441 = scalar_select %p440, %s33, 1
        %s442 = scalar_lea.vmem %s1, %s441
        %v444 = vld [vmem:[%s384] sm:$0xff]
        %v445 = vld [vmem:[#allocation5] sm:$0xff]
        %v446 = vld [vmem:[#allocation5 + $0x8] sm:$0xff]
        %448 = vset.pattern.permute.xlu0 3
        %449 = vperm.xlu0 %448, %v444
        %v450 = vpop.permute.xlu0 %449
        %v452 = vlaneseq
        %v453 = vshrl.u32 %v452, 7
        %v454 = vsub.s32 0, %v453
        %v455 = vrot.slane %v445, %v454
        %v456 = vmul.f32 %v450, %v455
        %v457 = vlaneseq
        %v458 = vshrl.u32 %v457, 7
        %v459 = vsub.s32 1, %v458
        %v460 = vrot.slane %v445, %v459
        %v461 = vadd.f32 %v456, %v460
        %v462 = vlaneseq
        %v463 = vand.u32 %v462, 127
        %vm464 = vcmp.eq.s32.totalorder %v463, 0
        %v465 = vand.u32 2147483647, %v461
        %vm466 = vcmp.le.f32.partialorder %v465, 0.7853982
        %vm467 = vcmp.lt.s32.totalorder %v461, 0
        %v468 = vand.u32 %v461, 2139095040
        %v469 = vshrl.u32 %v468, 23
        %v470 = vsub.s32 %v469, 127
        %v471 = vand.u32 2147483647, %v461
        %v472 = vand.u32 %v471, 8388607
        %v473 = vor.u32 %v472, 8388608
        %v474 = vsub.s32 0, %v473
        %v475 = vadd.s32 %v470, 1
        %vm476 = vcmp.gt.s32.totalorder %v475, 0
        %v477 = vsel %vm476, %v475, 0
        %v478 = vshrl.u32 %v477, 5
        %v479 = vand.u32 %v477, 31
        %v480 = vsub.s32 32, %v479
        %v481 = vshrl.u32 683565275, %v480
        %v482 = vshll.u32 683565275, %v479
        %v483 = vshrl.u32 2475754826, %v480
        %v484 = vor.u32 %v482, %v483
        %v485 = vshll.u32 2475754826, %v479
        %v486 = vshrl.u32 2131351028, %v480
        %v487 = vor.u32 %v485, %v486
        %v488 = vshll.u32 2131351028, %v479
        %v489 = vshrl.u32 2102212464, %v480
        %v490 = vor.u32 %v488, %v489
        %v491 = vshll.u32 2102212464, %v479
        %v492 = vshrl.u32 920167782, %v480
        %v493 = vor.u32 %v491, %v492
        %v494 = vshll.u32 920167782, %v479
        %v495 = vshrl.u32 1326507024, %v480
        %v496 = vor.u32 %v494, %v495
        %vm497 = vcmp.lt.s32.totalorder %v478, 1
        %vm498 = vcmp.lt.s32.totalorder %v478, 2
        %vm499 = vcmp.lt.s32.totalorder %v478, 3
        %vm500 = vcmp.lt.s32.totalorder %v478, 4
        %v501 = vsel %vm497, %v481, %v484
        %v502 = vsel %vm500, %v490, 2102212464
        %v503 = vsel %vm499, %v487, %v502
        %v504 = vsel %vm498, %v501, %v503
        %v505 = vsel %vm497, %v484, %v487
        %v506 = vsel %vm500, %v493, 920167782
        %v507 = vsel %vm499, %v490, %v506
        %v508 = vsel %vm498, %v505, %v507
        %v509 = vsel %vm497, %v487, %v490
        %v510 = vsel %vm500, %v496, 1326507024
        %v511 = vsel %vm499, %v493, %v510
        %v512 = vsel %vm498, %v509, %v511
        %v513 = vshll.u32 %v473, 8
        %v514 = vmul.u32.u64.compose %v513, %v512
        %v515 = vextract.low.u32 %v514
        %v516 = vextract.high.u32 %v514
        %v517 = vmul.u32.u64.compose %v513, %v508
        %v518 = vextract.low.u32 %v517
        %v519 = vextract.high.u32 %v517
        %v520 = vmul.u32 %v513, %v504
        %v521 = vadd.s32 %v516, %v518
        %vm522 = vc.u32 %v516, %v518
        %v523 = vadd.s32 %v519, 1
        %v524 = vsel %vm522, %v523, %v519
        %v525 = vadd.s32 %v520, %v524
        %v526 = vadd.s32 %v525, 536870912
        %v527 = vshrl.u32 %v526, 30
        %v528 = vshll.u32 %v527, 30
        %v529 = vsub.s32 %v525, %v528
        %vm530 = vcmp.lt.s32.totalorder %v529, 0
        %v531 = vsub.s32 0, %v529
        %v532 = vsel %vm530, %v531, %v529
        %v533 = vclz %v532
        %v534 = vsub.s32 %v533, 2
        %vm535 = vcmp.gt.s32.totalorder 0, %v534
        %v536 = vsel %vm535, 0, %v534
        %v537 = vsub.s32 32, %v536
        %v538 = vshll.u32 %v529, %v536
        %v539 = vshrl.u32 %v521, %v537
        %v540 = vor.u32 %v538, %v539
        %v541 = vsub.s32 4294967266, %v536
        %v542 = vadd.s32 %v541, 127
        %v543 = vshll.u32 %v542, 23
        %v544 = vor.u32 4788187, %v543
        %v545 = vand.u32 2147483647, %v544
        %v547 = vcvt.s32.f32 %v540
        %v548 = vmul.f32 %v547, %v545
        %v549 = vxor.u32 %v548, 2147483648
        %v550 = vsel %vm467, %v549, %v548
        %v551 = vsub.s32 4, %v527
        %v552 = vsel %vm467, %v551, %v527
        %v553 = vsel %vm466, %v461, %v550
        %v554 = vsel %vm466, 0, %v552
        %v555 = vcosq.f32.pop %v553
        %v556 = vsinq.f32.pop %v553
        %vm557 = vweird.f32 %v461
        %v558 = vadd.s32 %v554, 3
        %v559 = vand.u32 %v558, 3
        %vm560 = vcmp.lt.s32.totalorder %v559, 2
        %vm561 = vcmp.eq.s32.totalorder %v559, 0
        %v562 = vxor.u32 %v556, 2147483648
        %v563 = vsel %vm561, %v555, %v562
        %vm564 = vcmp.eq.s32.totalorder %v559, 2
        %v565 = vxor.u32 %v555, 2147483648
        %v566 = vsel %vm564, %v565, %v556
        %v567 = vsel %vm560, %v563, %v566
        %v568 = vsel %vm557, nan, %v567
        %v569 = vsel %vm464, %v461, %v568
        %570 = vset.pattern.permute.xlu0 0
        %571 = vperm.xlu0 %570, %v444
        %v572 = vpop.permute.xlu0 %571
        %v574 = vlaneseq
        %v575 = vshrl.u32 %v574, 7
        %v576 = vsub.s32 2, %v575
        %v577 = vrot.slane %v445, %v576
        %v578 = vmul.f32 %v572, %v577
        %v579 = vlaneseq
        %v580 = vshrl.u32 %v579, 7
        %v581 = vsub.s32 5, %v580
        %v582 = vrot.slane %v446, %v581
        %v583 = vadd.f32 %v582, %v578
        %584 = vset.pattern.permute.xlu0 1
        %585 = vperm.xlu0 %584, %v444
        %v586 = vpop.permute.xlu0 %585
        %v588 = vlaneseq
        %v589 = vshrl.u32 %v588, 7
        %v590 = vsub.s32 3, %v589
        %v591 = vrot.slane %v445, %v590
        %v592 = vmul.f32 %v586, %v591
        %v593 = vadd.f32 %v583, %v592
        %594 = vset.pattern.permute.xlu0 2
        %595 = vperm.xlu0 %594, %v444
        %v596 = vpop.permute.xlu0 %595
        %v598 = vlaneseq
        %v599 = vshrl.u32 %v598, 7
        %v600 = vsub.s32 4, %v599
        %v601 = vrot.slane %v445, %v600
        %v602 = vmul.f32 %v596, %v601
        %v603 = vadd.f32 %v593, %v602
        %605 = vset.pattern.permute.xlu0 0
        %606 = vperm.xlu0 %605, %v569
        %v607 = vpop.permute.xlu0 %606
        %v609 = vlaneseq
        %v610 = vshrl.u32 %v609, 7
        %v611 = vsub.s32 5, %v610
        %v612 = vrot.slane %v445, %v611
        %v613 = vmul.f32 %v607, %v612
        %v614 = vadd.f32 %v603, %v613
        %615 = vset.pattern.permute.xlu0 1
        %616 = vperm.xlu0 %615, %v569
        %v617 = vpop.permute.xlu0 %616
        %v619 = vlaneseq
        %v620 = vshrl.u32 %v619, 7
        %v621 = vsub.s32 6, %v620
        %v622 = vrot.slane %v445, %v621
        %v623 = vmul.f32 %v617, %v622
        %v624 = vadd.f32 %v614, %v623
        %625 = vset.pattern.permute.xlu0 2
        %626 = vperm.xlu0 %625, %v569
        %v627 = vpop.permute.xlu0 %626
        %v629 = vlaneseq
        %v630 = vshrl.u32 %v629, 7
        %v631 = vsub.s32 7, %v630
        %v632 = vrot.slane %v445, %v631
        %v633 = vmul.f32 %v627, %v632
        %v634 = vadd.f32 %v624, %v633
        %635 = vset.pattern.permute.xlu0 3
        %636 = vperm.xlu0 %635, %v569
        %v637 = vpop.permute.xlu0 %636
        %v639 = vlaneseq
        %v640 = vshrl.u32 %v639, 7
        %v641 = vsub.s32 0, %v640
        %v642 = vrot.slane %v446, %v641
        %v643 = vmul.f32 %v637, %v642
        %v644 = vadd.f32 %v634, %v643
        %645 = vset.pattern.permute.xlu0 4
        %646 = vperm.xlu0 %645, %v569
        %v647 = vpop.permute.xlu0 %646
        %v649 = vlaneseq
        %v650 = vshrl.u32 %v649, 7
        %v651 = vsub.s32 1, %v650
        %v652 = vrot.slane %v446, %v651
        %v653 = vmul.f32 %v647, %v652
        %v654 = vadd.f32 %v644, %v653
        %655 = vset.pattern.permute.xlu0 5
        %656 = vperm.xlu0 %655, %v569
        %v657 = vpop.permute.xlu0 %656
        %v659 = vlaneseq
        %v660 = vshrl.u32 %v659, 7
        %v661 = vsub.s32 2, %v660
        %v662 = vrot.slane %v446, %v661
        %v663 = vmul.f32 %v657, %v662
        %v664 = vadd.f32 %v654, %v663
        %665 = vset.pattern.permute.xlu0 6
        %666 = vperm.xlu0 %665, %v569
        %v667 = vpop.permute.xlu0 %666
        %v669 = vlaneseq
        %v670 = vshrl.u32 %v669, 7
        %v671 = vsub.s32 3, %v670
        %v672 = vrot.slane %v446, %v671
        %v673 = vmul.f32 %v667, %v672
        %v674 = vadd.f32 %v664, %v673
        %675 = vset.pattern.permute.xlu0 7
        %676 = vperm.xlu0 %675, %v569
        %v677 = vpop.permute.xlu0 %676
        %v679 = vlaneseq
        %v680 = vshrl.u32 %v679, 7
        %v681 = vsub.s32 4, %v680
        %v682 = vrot.slane %v446, %v681
        %v683 = vmul.f32 %v677, %v682
        %v684 = vadd.f32 %v674, %v683
        %vm685 = vcmask 392192
        %v686 = vsel %vm685, %v684, 0.0
        %687 = vadd.xlane.f32.xlu0 %v686
        %v688 = vpop.xlane.xlu0 %687
        %v689 = vrcp.pop 48.0
        %v690 = vmul.f32 %v688, %v689
        %v691 = vsub.f32 %v684, %v690
        %v692 = vmul.f32 %v691, %v691
        %v693 = vsel %vm685, %v692, 0.0
        %694 = vadd.xlane.f32.xlu0 %v693
        %v695 = vpop.xlane.xlu0 %694
        %v696 = vmul.f32 %v695, %v689
        %v697 = vadd.f32 %v696, 1e-05
        %v698 = vrsqrt.pop %v697
        %v699 = vmul.f32 %v691, %v698
        %v700 = vlaneseq
        %v701 = vshrl.u32 %v700, 7
        %v702 = vsub.s32 6, %v701
        %v703 = vrot.slane %v446, %v702
        %v704 = vmul.f32 %v699, %v703
        %v705 = vlaneseq
        %v706 = vshrl.u32 %v705, 7
        %v707 = vsub.s32 7, %v706
        %v708 = vrot.slane %v446, %v707
        %v709 = vadd.f32 %v704, %v708
        %v710 = vld [vmem:[%s442] sm:$0x1]
        %v711 = vld [vmem:[%s3] sm:$0xff]
        %v712 = vld [vmem:[%s3 + $0x8] sm:$0xff]
        %v713 = vld [vmem:[%s3 + $0x10] sm:$0xff]
        %v714 = vld [vmem:[%s3 + $0x18] sm:$0xff]
        %v715 = vld [vmem:[%s3 + $0x20] sm:$0xff]
        %v716 = vld [vmem:[%s3 + $0x28] sm:$0xff]
        %v717 = vld [vmem:[#allocation7] sm:$0x3]
        %v718 = vld [vmem:[%s5] sm:$0xf]
        %v719 = vld [vmem:[%s5 + $0x4] sm:$0xf]
        %v720 = vld [vmem:[%s5 + $0x8] sm:$0xf]
        %v721 = vld [vmem:[%s5 + $0xc] sm:$0xf]
        %v722 = vld [vmem:[%s5 + $0x10] sm:$0xf]
        %v723 = vld [vmem:[%s5 + $0x14] sm:$0xf]
        %v724 = vld [vmem:[%s6] sm:$0xf]
        %v725 = vld [vmem:[%s6 + $0x4] sm:$0xf]
        %v726 = vld [vmem:[%s6 + $0x8] sm:$0xf]
        %v727 = vld [vmem:[%s6 + $0xc] sm:$0xf]
        %v728 = vld [vmem:[%s6 + $0x10] sm:$0xf]
        %v729 = vld [vmem:[%s6 + $0x14] sm:$0xf]
        %v730 = vld [vmem:[%s7] sm:$0xf]
        %v731 = vld [vmem:[%s7 + $0x4] sm:$0xf]
        %v732 = vld [vmem:[%s7 + $0x8] sm:$0xf]
        %v733 = vld [vmem:[%s7 + $0xc] sm:$0xf]
        %v734 = vld [vmem:[%s7 + $0x10] sm:$0xf]
        %v735 = vld [vmem:[%s7 + $0x14] sm:$0xf]
        %v736 = vld [vmem:[%s7 + $0x18] sm:$0xf]
        %v737 = vld [vmem:[%s7 + $0x1c] sm:$0xf]
        %v738 = vld [vmem:[%s7 + $0x20] sm:$0xf]
        %v739 = vld [vmem:[%s7 + $0x24] sm:$0xf]
        %v740 = vld [vmem:[%s7 + $0x28] sm:$0xf]
        %v741 = vld [vmem:[%s7 + $0x2c] sm:$0xf]
        %v742 = vld [vmem:[%s7 + $0x30] sm:$0xf]
        %v743 = vld [vmem:[%s7 + $0x34] sm:$0xf]
        %v744 = vld [vmem:[%s7 + $0x38] sm:$0xf]
        %v745 = vld [vmem:[%s7 + $0x3c] sm:$0xf]
        %v746 = vld [vmem:[#allocation8] sm:$0xff]
        %v747 = vpack.c.bf16 %v709, %v709
        %v749 = vlaneseq
        %v750 = vshrl.u32 %v749, 7
        %v751 = vsub.s32 0, %v750
        %v752 = vrot.slane %v717, %v751
        %v753 = vlaneseq
        %v754 = vshrl.u32 %v753, 7
        %v755 = vsub.s32 1, %v754
        %v756 = vrot.slane %v717, %v755
        %v765 = vunpack.c.l.b16 %v711
        %v766 = vunpack.c.h.b16 %v711
        %v767 = vunpack.c.l.b16 %v712
        %v768 = vunpack.c.h.b16 %v712
        %v769 = vunpack.c.l.b16 %v713
        %v770 = vunpack.c.h.b16 %v713
        %v771 = vunpack.c.l.b16 %v714
        %v772 = vunpack.c.h.b16 %v714
        %v773 = vunpack.c.l.b16 %v715
        %v774 = vunpack.c.h.b16 %v715
        %v775 = vunpack.c.l.b16 %v716
        %v776 = vunpack.c.h.b16 %v716
        %v777 = vpack.c.b16 %v767, %v765
        %v778 = vpack.c.b16 %v768, %v766
        %v779 = vpack.c.b16 %v771, %v769
        %v780 = vpack.c.b16 %v772, %v770
        %v781 = vpack.c.b16 %v775, %v773
        %v782 = vpack.c.b16 %v776, %v774
        %v790 = vsel %vm685, %v747, 0
        %792 = vmatprep.subr.bf16.mxu0 %v778
        %793 = vmatpush1.bf16.msra.mxu0 %v777
        %794 = vmatprep.subr.bf16.mxu0 %v780
        %795 = vmatpush1.bf16.msra.mxu0 %v779
        %796 = vmatprep.subr.bf16.mxu0 %v782
        %797 = vmatpush1.bf16.msra.mxu0 %v781
        %798 = vmatprep.subr.bf16.mxu0 0
        %799 = vmatpush1.bf16.msra.mxu0 0
        %800 = vmatprep.subr.bf16.mxu0 0
        %801 = vmatpush1.bf16.msra.mxu0 0
        %802 = vmatprep.subr.bf16.mxu0 0
        %803 = vmatpush1.bf16.msra.mxu0 0
        %804 = vmatprep.subr.bf16.mxu0 0
        %805 = vmatpush1.bf16.msra.mxu0 0
        %806 = vmatprep.subr.bf16.mxu0 0
        %807 = vmatpush1.bf16.msra.mxu0 0
        %808 = vmatprep.subr.bf16.mxu0 0
        %809 = vmatpush1.bf16.msra.mxu0 0
        %810 = vmatprep.subr.bf16.mxu0 0
        %811 = vmatpush1.bf16.msra.mxu0 0
        %812 = vmatprep.subr.bf16.mxu0 0
        %813 = vmatpush1.bf16.msra.mxu0 0
        %814 = vmatprep.subr.bf16.mxu0 0
        %815 = vmatpush1.bf16.msra.mxu0 0
        %816 = vmatprep.subr.bf16.mxu0 0
        %817 = vmatpush1.bf16.msra.mxu0 0
        %818 = vmatprep.subr.bf16.mxu0 0
        %819 = vmatpush1.bf16.msra.mxu0 0
        %820 = vmatprep.subr.bf16.mxu0 0
        %821 = vmatpush1.bf16.msra.mxu0 0
        %822 = vmatprep.subr.bf16.mxu0 0
        %823 = vmatpush1.bf16.msra.mxu0 0
        %824 = vmatprep.mubr.bf16.mxu0 0
        %825 = vmatmul.mubr.bf16.gmra.mrb[0].mxu0 %v790
        %v826 = vpop.f32.mrb[0].mxu0
        %v827 = vadd.f32 %v752, %v826
        %v828 = vpop.f32.mrb[0].mxu0
        %v829 = vadd.f32 %v756, %v828
        %v830 = vpop.f32.mrb[0].mxu0
        %v831 = vpop.f32.mrb[0].mxu0
        %832 = vdwg.mxu0
        %v833 = vpack.c.bf16 %v827, %v827
        %v834 = vpack.c.bf16 %v829, %v829
        %v836 = vlaneseq
        %v837 = vshrl.u32 %v836, 7
        %v838 = vsub.s32 0, %v837
        %v839 = vrot.slane %v710, %v838
        %842 = vrot.lane.b32.xlu0 %v833, 80
        %v843 = vpop.permute.xlu0 %842
        %vm844 = vcmask 97280
        %v846 = vsel %vm844, %v833, 0
        %v849 = vsel %vm844, %v843, 0
        %851 = vmatprep.subr.bf16.mxu0 0
        %852 = vmatpush1.bf16.xpose.msra.mxu0 %v849
        %853 = vmatprep.subr.bf16.mxu0 0
        %854 = vmatpush1.bf16.xpose.msra.mxu0 0
        %855 = vmatprep.subr.bf16.mxu0 0
        %856 = vmatpush1.bf16.xpose.msra.mxu0 0
        %857 = vmatprep.subr.bf16.mxu0 0
        %858 = vmatpush1.bf16.xpose.msra.mxu0 0
        %859 = vmatprep.subr.bf16.mxu0 0
        %860 = vmatpush1.bf16.xpose.msra.mxu0 0
        %861 = vmatprep.subr.bf16.mxu0 0
        %862 = vmatpush1.bf16.xpose.msra.mxu0 0
        %863 = vmatprep.subr.bf16.mxu0 0
        %864 = vmatpush1.bf16.xpose.msra.mxu0 0
        %865 = vmatprep.subr.bf16.mxu0 0
        %866 = vmatpush1.bf16.xpose.msra.mxu0 0
        %867 = vmatprep.subr.bf16.mxu0 0
        %868 = vmatpush1.bf16.xpose.msra.mxu0 0
        %869 = vmatprep.subr.bf16.mxu0 0
        %870 = vmatpush1.bf16.xpose.msra.mxu0 0
        %871 = vmatprep.subr.bf16.mxu0 0
        %872 = vmatpush1.bf16.xpose.msra.mxu0 0
        %873 = vmatprep.subr.bf16.mxu0 0
        %874 = vmatpush1.bf16.xpose.msra.mxu0 0
        %875 = vmatprep.subr.bf16.mxu0 0
        %876 = vmatpush1.bf16.xpose.msra.mxu0 0
        %877 = vmatprep.subr.bf16.mxu0 0
        %878 = vmatpush1.bf16.xpose.msra.mxu0 0
        %879 = vmatprep.subr.bf16.mxu0 0
        %880 = vmatpush1.bf16.xpose.msra.mxu0 0
        %881 = vmatprep.subr.bf16.mxu0 0
        %882 = vmatpush1.bf16.xpose.msra.mxu0 0
        %883 = vmatprep.mubr.bf16.mxu0 0
        %884 = vmatmul.mubr.bf16.gmra.mrb[0].mxu0 %v846
        %v885 = vpop.f32.mrb[0].mxu0
        %v886 = vadd.f32 %v839, %v885
        %v887 = vpop.f32.mrb[0].mxu0
        %v888 = vpop.f32.mrb[0].mxu0
        %v889 = vpop.f32.mrb[0].mxu0
        %890 = vdwg.mxu0
        %vm891 = vcmask 64512
        %v892 = vsel %vm891, %v886, -inf
        %893 = vmax.xlane.f32.xlu0 %v892
        %v894 = vpop.xlane.xlu0 %893
        %v895 = vsub.f32 %v886, %v894
        %v896 = vmul.f32 %v895, 1.442695
        %v897 = vpow.pop %v896
        %v898 = vsel %vm891, %v897, 0.0
        %899 = vadd.xlane.f32.xlu0 %v898
        %v900 = vpop.xlane.xlu0 %899
        %v901 = vrcp.pop %v900
        %v902 = vmul.f32 %v897, %v901
        %v903 = vpack.c.bf16 %v902, %v902
        %904 = vrot.lane.b32.xlu0 %v833, 32
        %v905 = vpop.permute.xlu0 %904
        %v907 = vsel %vm891, %v903, 0
        %vm909 = vcmask 1043456
        %v911 = vsel %vm909, %v905, 0
        %913 = vmatprep.subr.bf16.mxu0 0
        %914 = vmatpush1.bf16.msra.mxu0 %v911
        %915 = vmatprep.subr.bf16.mxu0 0
        %916 = vmatpush1.bf16.msra.mxu0 0
        %917 = vmatprep.subr.bf16.mxu0 0
        %918 = vmatpush1.bf16.msra.mxu0 0
        %919 = vmatprep.subr.bf16.mxu0 0
        %920 = vmatpush1.bf16.msra.mxu0 0
        %921 = vmatprep.subr.bf16.mxu0 0
        %922 = vmatpush1.bf16.msra.mxu0 0
        %923 = vmatprep.subr.bf16.mxu0 0
        %924 = vmatpush1.bf16.msra.mxu0 0
        %925 = vmatprep.subr.bf16.mxu0 0
        %926 = vmatpush1.bf16.msra.mxu0 0
        %927 = vmatprep.subr.bf16.mxu0 0
        %928 = vmatpush1.bf16.msra.mxu0 0
        %929 = vmatprep.subr.bf16.mxu0 0
        %930 = vmatpush1.bf16.msra.mxu0 0
        %931 = vmatprep.subr.bf16.mxu0 0
        %932 = vmatpush1.bf16.msra.mxu0 0
        %933 = vmatprep.subr.bf16.mxu0 0
        %934 = vmatpush1.bf16.msra.mxu0 0
        %935 = vmatprep.subr.bf16.mxu0 0
        %936 = vmatpush1.bf16.msra.mxu0 0
        %937 = vmatprep.subr.bf16.mxu0 0
        %938 = vmatpush1.bf16.msra.mxu0 0
        %939 = vmatprep.subr.bf16.mxu0 0
        %940 = vmatpush1.bf16.msra.mxu0 0
        %941 = vmatprep.subr.bf16.mxu0 0
        %942 = vmatpush1.bf16.msra.mxu0 0
        %943 = vmatprep.subr.bf16.mxu0 0
        %944 = vmatpush1.bf16.msra.mxu0 0
        %945 = vmatprep.mubr.bf16.mxu0 0
        %946 = vmatmul.mubr.bf16.gmra.mrb[0].mxu0 %v907
        %v947 = vpop.f32.mrb[0].mxu0
        %v948 = vadd.f32 0.0, %v947
        %v949 = vpop.f32.mrb[0].mxu0
        %v950 = vpop.f32.mrb[0].mxu0
        %v951 = vpop.f32.mrb[0].mxu0
        %952 = vdwg.mxu0
        %v953 = vpack.c.bf16 %v948, %v948
        %954 = vrot.lane.b32.xlu0 %v833, 116
        %v955 = vpop.permute.xlu0 %954
        %956 = vrot.lane.b32.xlu0 %v833, 68
        %v957 = vpop.permute.xlu0 %956
        %v959 = vsel %vm844, %v955, 0
        %v962 = vsel %vm844, %v957, 0
        %964 = vmatprep.subr.bf16.mxu0 0
        %965 = vmatpush1.bf16.xpose.msra.mxu0 %v962
        %966 = vmatprep.subr.bf16.mxu0 0
        %967 = vmatpush1.bf16.xpose.msra.mxu0 0
        %968 = vmatprep.subr.bf16.mxu0 0
        %969 = vmatpush1.bf16.xpose.msra.mxu0 0
        %970 = vmatprep.subr.bf16.mxu0 0
        %971 = vmatpush1.bf16.xpose.msra.mxu0 0
        %972 = vmatprep.subr.bf16.mxu0 0
        %973 = vmatpush1.bf16.xpose.msra.mxu0 0
        %974 = vmatprep.subr.bf16.mxu0 0
        %975 = vmatpush1.bf16.xpose.msra.mxu0 0
        %976 = vmatprep.subr.bf16.mxu0 0
        %977 = vmatpush1.bf16.xpose.msra.mxu0 0
        %978 = vmatprep.subr.bf16.mxu0 0
        %979 = vmatpush1.bf16.xpose.msra.mxu0 0
        %980 = vmatprep.subr.bf16.mxu0 0
        %981 = vmatpush1.bf16.xpose.msra.mxu0 0
        %982 = vmatprep.subr.bf16.mxu0 0
        %983 = vmatpush1.bf16.xpose.msra.mxu0 0
        %984 = vmatprep.subr.bf16.mxu0 0
        %985 = vmatpush1.bf16.xpose.msra.mxu0 0
        %986 = vmatprep.subr.bf16.mxu0 0
        %987 = vmatpush1.bf16.xpose.msra.mxu0 0
        %988 = vmatprep.subr.bf16.mxu0 0
        %989 = vmatpush1.bf16.xpose.msra.mxu0 0
        %990 = vmatprep.subr.bf16.mxu0 0
        %991 = vmatpush1.bf16.xpose.msra.mxu0 0
        %992 = vmatprep.subr.bf16.mxu0 0
        %993 = vmatpush1.bf16.xpose.msra.mxu0 0
        %994 = vmatprep.subr.bf16.mxu0 0
        %995 = vmatpush1.bf16.xpose.msra.mxu0 0
        %996 = vmatprep.mubr.bf16.mxu0 0
        %997 = vmatmul.mubr.bf16.gmra.mrb[0].mxu0 %v959
        %v998 = vpop.f32.mrb[0].mxu0
        %v999 = vadd.f32 %v839, %v998
        %v1000 = vpop.f32.mrb[0].mxu0
        %v1001 = vpop.f32.mrb[0].mxu0
        %v1002 = vpop.f32.mrb[0].mxu0
        %1003 = vdwg.mxu0
        %v1004 = vsel %vm891, %v999, -inf
        %1005 = vmax.xlane.f32.xlu0 %v1004
        %v1006 = vpop.xlane.xlu0 %1005
        %v1007 = vsub.f32 %v999, %v1006
        %v1008 = vmul.f32 %v1007, 1.442695
        %v1009 = vpow.pop %v1008
        %v1010 = vsel %vm891, %v1009, 0.0
        %1011 = vadd.xlane.f32.xlu0 %v1010
        %v1012 = vpop.xlane.xlu0 %1011
        %v1013 = vrcp.pop %v1012
        %v1014 = vmul.f32 %v1009, %v1013
        %v1015 = vpack.c.bf16 %v1014, %v1014
        %1016 = vrot.lane.b32.xlu0 %v833, 20
        %v1017 = vpop.permute.xlu0 %1016
        %v1019 = vsel %vm891, %v1015, 0
        %v1022 = vsel %vm909, %v1017, 0
        %1024 = vmatprep.subr.bf16.mxu0 0
        %1025 = vmatpush1.bf16.msra.mxu0 %v1022
        %1026 = vmatprep.subr.bf16.mxu0 0
        %1027 = vmatpush1.bf16.msra.mxu0 0
        %1028 = vmatprep.subr.bf16.mxu0 0
        %1029 = vmatpush1.bf16.msra.mxu0 0
        %1030 = vmatprep.subr.bf16.mxu0 0
        %1031 = vmatpush1.bf16.msra.mxu0 0
        %1032 = vmatprep.subr.bf16.mxu0 0
        %1033 = vmatpush1.bf16.msra.mxu0 0
        %1034 = vmatprep.subr.bf16.mxu0 0
        %1035 = vmatpush1.bf16.msra.mxu0 0
        %1036 = vmatprep.subr.bf16.mxu0 0
        %1037 = vmatpush1.bf16.msra.mxu0 0
        %1038 = vmatprep.subr.bf16.mxu0 0
        %1039 = vmatpush1.bf16.msra.mxu0 0
        %1040 = vmatprep.subr.bf16.mxu0 0
        %1041 = vmatpush1.bf16.msra.mxu0 0
        %1042 = vmatprep.subr.bf16.mxu0 0
        %1043 = vmatpush1.bf16.msra.mxu0 0
        %1044 = vmatprep.subr.bf16.mxu0 0
        %1045 = vmatpush1.bf16.msra.mxu0 0
        %1046 = vmatprep.subr.bf16.mxu0 0
        %1047 = vmatpush1.bf16.msra.mxu0 0
        %1048 = vmatprep.subr.bf16.mxu0 0
        %1049 = vmatpush1.bf16.msra.mxu0 0
        %1050 = vmatprep.subr.bf16.mxu0 0
        %1051 = vmatpush1.bf16.msra.mxu0 0
        %1052 = vmatprep.subr.bf16.mxu0 0
        %1053 = vmatpush1.bf16.msra.mxu0 0
        %1054 = vmatprep.subr.bf16.mxu0 0
        %1055 = vmatpush1.bf16.msra.mxu0 0
        %1056 = vmatprep.mubr.bf16.mxu0 0
        %1057 = vmatmul.mubr.bf16.gmra.mrb[0].mxu0 %v1019
        %v1058 = vpop.f32.mrb[0].mxu0
        %v1059 = vadd.f32 0.0, %v1058
        %v1060 = vpop.f32.mrb[0].mxu0
        %v1061 = vpop.f32.mrb[0].mxu0
        %v1062 = vpop.f32.mrb[0].mxu0
        %1063 = vdwg.mxu0
        %v1064 = vpack.c.bf16 %v1059, %v1059
        %v1067 = vunpack.c.l.b16 %v719
        %v1068 = vunpack.c.l.b16 %v720
        %v1069 = vpack.c.b16 %v1068, %v1067
        %v1070 = vrot.slane %v1069, 2
        %v1072 = vsel %vm844, %v1064, 0
        %vm1074 = vcmask 1045504
        %v1076 = vsel %vm1074, %v1070, 0
        %1078 = vmatprep.subr.bf16.mxu0 0
        %1079 = vmatpush1.bf16.msra.mxu0 %v1076
        %1080 = vmatprep.subr.bf16.mxu0 0
        %1081 = vmatpush1.bf16.msra.mxu0 0
        %1082 = vmatprep.subr.bf16.mxu0 0
        %1083 = vmatpush1.bf16.msra.mxu0 0
        %1084 = vmatprep.subr.bf16.mxu0 0
        %1085 = vmatpush1.bf16.msra.mxu0 0
        %1086 = vmatprep.subr.bf16.mxu0 0
        %1087 = vmatpush1.bf16.msra.mxu0 0
        %1088 = vmatprep.subr.bf16.mxu0 0
        %1089 = vmatpush1.bf16.msra.mxu0 0
        %1090 = vmatprep.subr.bf16.mxu0 0
        %1091 = vmatpush1.bf16.msra.mxu0 0
        %1092 = vmatprep.subr.bf16.mxu0 0
        %1093 = vmatpush1.bf16.msra.mxu0 0
        %1094 = vmatprep.subr.bf16.mxu0 0
        %1095 = vmatpush1.bf16.msra.mxu0 0
        %1096 = vmatprep.subr.bf16.mxu0 0
        %1097 = vmatpush1.bf16.msra.mxu0 0
        %1098 = vmatprep.subr.bf16.mxu0 0
        %1099 = vmatpush1.bf16.msra.mxu0 0
        %1100 = vmatprep.subr.bf16.mxu0 0
        %1101 = vmatpush1.bf16.msra.mxu0 0
        %1102 = vmatprep.subr.bf16.mxu0 0
        %1103 = vmatpush1.bf16.msra.mxu0 0
        %1104 = vmatprep.subr.bf16.mxu0 0
        %1105 = vmatpush1.bf16.msra.mxu0 0
        %1106 = vmatprep.subr.bf16.mxu0 0
        %1107 = vmatpush1.bf16.msra.mxu0 0
        %1108 = vmatprep.subr.bf16.mxu0 0
        %1109 = vmatpush1.bf16.msra.mxu0 0
        %1110 = vmatprep.mubr.bf16.mxu0 0
        %1111 = vmatmul.mubr.bf16.gmra.mrb[0].mxu0 %v1072
        %v1112 = vpop.f32.mrb[0].mxu0
        %v1113 = vadd.f32 0.0, %v1112
        %v1114 = vpop.f32.mrb[0].mxu0
        %v1115 = vpop.f32.mrb[0].mxu0
        %v1116 = vpop.f32.mrb[0].mxu0
        %1117 = vdwg.mxu0
        %v1119 = vunpack.c.l.b16 %v718
        %v1120 = vpack.c.b16 %v1067, %v1119
        %v1122 = vsel %vm844, %v953, 0
        %v1125 = vsel %vm1074, %v1120, 0
        %1127 = vmatprep.subr.bf16.mxu0 0
        %1128 = vmatpush1.bf16.msra.mxu0 %v1125
        %1129 = vmatprep.subr.bf16.mxu0 0
        %1130 = vmatpush1.bf16.msra.mxu0 0
        %1131 = vmatprep.subr.bf16.mxu0 0
        %1132 = vmatpush1.bf16.msra.mxu0 0
        %1133 = vmatprep.subr.bf16.mxu0 0
        %1134 = vmatpush1.bf16.msra.mxu0 0
        %1135 = vmatprep.subr.bf16.mxu0 0
        %1136 = vmatpush1.bf16.msra.mxu0 0
        %1137 = vmatprep.subr.bf16.mxu0 0
        %1138 = vmatpush1.bf16.msra.mxu0 0
        %1139 = vmatprep.subr.bf16.mxu0 0
        %1140 = vmatpush1.bf16.msra.mxu0 0
        %1141 = vmatprep.subr.bf16.mxu0 0
        %1142 = vmatpush1.bf16.msra.mxu0 0
        %1143 = vmatprep.subr.bf16.mxu0 0
        %1144 = vmatpush1.bf16.msra.mxu0 0
        %1145 = vmatprep.subr.bf16.mxu0 0
        %1146 = vmatpush1.bf16.msra.mxu0 0
        %1147 = vmatprep.subr.bf16.mxu0 0
        %1148 = vmatpush1.bf16.msra.mxu0 0
        %1149 = vmatprep.subr.bf16.mxu0 0
        %1150 = vmatpush1.bf16.msra.mxu0 0
        %1151 = vmatprep.subr.bf16.mxu0 0
        %1152 = vmatpush1.bf16.msra.mxu0 0
        %1153 = vmatprep.subr.bf16.mxu0 0
        %1154 = vmatpush1.bf16.msra.mxu0 0
        %1155 = vmatprep.subr.bf16.mxu0 0
        %1156 = vmatpush1.bf16.msra.mxu0 0
        %1157 = vmatprep.subr.bf16.mxu0 0
        %1158 = vmatpush1.bf16.msra.mxu0 0
        %1159 = vmatprep.mubr.bf16.mxu0 0
        %1160 = vmatmul.mubr.bf16.gmra.mrb[0].mxu0 %v1122
        %v1161 = vpop.f32.mrb[0].mxu0
        %v1162 = vadd.f32 %v1113, %v1161
        %v1163 = vpop.f32.mrb[0].mxu0
        %v1164 = vpop.f32.mrb[0].mxu0
        %v1165 = vpop.f32.mrb[0].mxu0
        %1166 = vdwg.mxu0
        %1167 = vrot.lane.b32.xlu0 %v833, 104
        %v1168 = vpop.permute.xlu0 %1167
        %1169 = vrot.lane.b32.xlu0 %v833, 56
        %v1170 = vpop.permute.xlu0 %1169
        %v1172 = vsel %vm844, %v1168, 0
        %v1175 = vsel %vm844, %v1170, 0
        %1177 = vmatprep.subr.bf16.mxu0 0
        %1178 = vmatpush1.bf16.xpose.msra.mxu0 %v1175
        %1179 = vmatprep.subr.bf16.mxu0 0
        %1180 = vmatpush1.bf16.xpose.msra.mxu0 0
        %1181 = vmatprep.subr.bf16.mxu0 0
        %1182 = vmatpush1.bf16.xpose.msra.mxu0 0
        %1183 = vmatprep.subr.bf16.mxu0 0
        %1184 = vmatpush1.bf16.xpose.msra.mxu0 0
        %1185 = vmatprep.subr.bf16.mxu0 0
        %1186 = vmatpush1.bf16.xpose.msra.mxu0 0
        %1187 = vmatprep.subr.bf16.mxu0 0
        %1188 = vmatpush1.bf16.xpose.msra.mxu0 0
        %1189 = vmatprep.subr.bf16.mxu0 0
        %1190 = vmatpush1.bf16.xpose.msra.mxu0 0
        %1191 = vmatprep.subr.bf16.mxu0 0
        %1192 = vmatpush1.bf16.xpose.msra.mxu0 0
        %1193 = vmatprep.subr.bf16.mxu0 0
        %1194 = vmatpush1.bf16.xpose.msra.mxu0 0
        %1195 = vmatprep.subr.bf16.mxu0 0
        %1196 = vmatpush1.bf16.xpose.msra.mxu0 0
        %1197 = vmatprep.subr.bf16.mxu0 0
        %1198 = vmatpush1.bf16.xpose.msra.mxu0 0
        %1199 = vmatprep.subr.bf16.mxu0 0
        %1200 = vmatpush1.bf16.xpose.msra.mxu0 0
        %1201 = vmatprep.subr.bf16.mxu0 0
        %1202 = vmatpush1.bf16.xpose.msra.mxu0 0
        %1203 = vmatprep.subr.bf16.mxu0 0
        %1204 = vmatpush1.bf16.xpose.msra.mxu0 0
        %1205 = vmatprep.subr.bf16.mxu0 0
        %1206 = vmatpush1.bf16.xpose.msra.mxu0 0
        %1207 = vmatprep.subr.bf16.mxu0 0
        %1208 = vmatpush1.bf16.xpose.msra.mxu0 0
        %1209 = vmatprep.mubr.bf16.mxu0 0
        %1210 = vmatmul.mubr.bf16.gmra.mrb[0].mxu0 %v1172
        %v1211 = vpop.f32.mrb[0].mxu0
        %v1212 = vadd.f32 %v839, %v1211
        %v1213 = vpop.f32.mrb[0].mxu0
        %v1214 = vpop.f32.mrb[0].mxu0
        %v1215 = vpop.f32.mrb[0].mxu0
        %1216 = vdwg.mxu0
        %v1217 = vsel %vm891, %v1212, -inf
        %1218 = vmax.xlane.f32.xlu0 %v1217
        %v1219 = vpop.xlane.xlu0 %1218
        %v1220 = vsub.f32 %v1212, %v1219
        %v1221 = vmul.f32 %v1220, 1.442695
        %v1222 = vpow.pop %v1221
        %v1223 = vsel %vm891, %v1222, 0.0
        %1224 = vadd.xlane.f32.xlu0 %v1223
        %v1225 = vpop.xlane.xlu0 %1224
        %v1226 = vrcp.pop %v1225
        %v1227 = vmul.f32 %v1222, %v1226
        %v1228 = vpack.c.bf16 %v1227, %v1227
        %1230 = vrot.lane.b32.xlu0 %v833, 8
        %v1231 = vpop.permute.xlu0 %1230
        %1232 = vrot.lane.b32.xlu0 %v834, 8
        %v1233 = vpop.permute.xlu0 %1232
        %vm1234 = vcmask 64512
        %v1235 = vsel %vm1234, %v1231, %v1233
        %v1237 = vsel %vm891, %v1228, 0
        %v1240 = vsel %vm909, %v1235, 0
        %1242 = vmatprep.subr.bf16.mxu0 0
        %1243 = vmatpush1.bf16.msra.mxu0 %v1240
        %1244 = vmatprep.subr.bf16.mxu0 0
        %1245 = vmatpush1.bf16.msra.mxu0 0
        %1246 = vmatprep.subr.bf16.mxu0 0
        %1247 = vmatpush1.bf16.msra.mxu0 0
        %1248 = vmatprep.subr.bf16.mxu0 0
        %1249 = vmatpush1.bf16.msra.mxu0 0
        %1250 = vmatprep.subr.bf16.mxu0 0
        %1251 = vmatpush1.bf16.msra.mxu0 0
        %1252 = vmatprep.subr.bf16.mxu0 0
        %1253 = vmatpush1.bf16.msra.mxu0 0
        %1254 = vmatprep.subr.bf16.mxu0 0
        %1255 = vmatpush1.bf16.msra.mxu0 0
        %1256 = vmatprep.subr.bf16.mxu0 0
        %1257 = vmatpush1.bf16.msra.mxu0 0
        %1258 = vmatprep.subr.bf16.mxu0 0
        %1259 = vmatpush1.bf16.msra.mxu0 0
        %1260 = vmatprep.subr.bf16.mxu0 0
        %1261 = vmatpush1.bf16.msra.mxu0 0
        %1262 = vmatprep.subr.bf16.mxu0 0
        %1263 = vmatpush1.bf16.msra.mxu0 0
        %1264 = vmatprep.subr.bf16.mxu0 0
        %1265 = vmatpush1.bf16.msra.mxu0 0
        %1266 = vmatprep.subr.bf16.mxu0 0
        %1267 = vmatpush1.bf16.msra.mxu0 0
        %1268 = vmatprep.subr.bf16.mxu0 0
        %1269 = vmatpush1.bf16.msra.mxu0 0
        %1270 = vmatprep.subr.bf16.mxu0 0
        %1271 = vmatpush1.bf16.msra.mxu0 0
        %1272 = vmatprep.subr.bf16.mxu0 0
        %1273 = vmatpush1.bf16.msra.mxu0 0
        %1274 = vmatprep.mubr.bf16.mxu0 0
        %1275 = vmatmul.mubr.bf16.gmra.mrb[0].mxu0 %v1237
        %v1276 = vpop.f32.mrb[0].mxu0
        %v1277 = vadd.f32 0.0, %v1276
        %v1278 = vpop.f32.mrb[0].mxu0
        %v1279 = vpop.f32.mrb[0].mxu0
        %v1280 = vpop.f32.mrb[0].mxu0
        %1281 = vdwg.mxu0
        %v1282 = vpack.c.bf16 %v1277, %v1277
        %v1285 = vunpack.c.l.b16 %v721
        %v1286 = vunpack.c.l.b16 %v722
        %v1287 = vpack.c.b16 %v1286, %v1285
        %v1289 = vsel %vm844, %v1282, 0
        %v1292 = vsel %vm1074, %v1287, 0
        %1294 = vmatprep.subr.bf16.mxu0 0
        %1295 = vmatpush1.bf16.msra.mxu0 %v1292
        %1296 = vmatprep.subr.bf16.mxu0 0
        %1297 = vmatpush1.bf16.msra.mxu0 0
        %1298 = vmatprep.subr.bf16.mxu0 0
        %1299 = vmatpush1.bf16.msra.mxu0 0
        %1300 = vmatprep.subr.bf16.mxu0 0
        %1301 = vmatpush1.bf16.msra.mxu0 0
        %1302 = vmatprep.subr.bf16.mxu0 0
        %1303 = vmatpush1.bf16.msra.mxu0 0
        %1304 = vmatprep.subr.bf16.mxu0 0
        %1305 = vmatpush1.bf16.msra.mxu0 0
        %1306 = vmatprep.subr.bf16.mxu0 0
        %1307 = vmatpush1.bf16.msra.mxu0 0
        %1308 = vmatprep.subr.bf16.mxu0 0
        %1309 = vmatpush1.bf16.msra.mxu0 0
        %1310 = vmatprep.subr.bf16.mxu0 0
        %1311 = vmatpush1.bf16.msra.mxu0 0
        %1312 = vmatprep.subr.bf16.mxu0 0
        %1313 = vmatpush1.bf16.msra.mxu0 0
        %1314 = vmatprep.subr.bf16.mxu0 0
        %1315 = vmatpush1.bf16.msra.mxu0 0
        %1316 = vmatprep.subr.bf16.mxu0 0
        %1317 = vmatpush1.bf16.msra.mxu0 0
        %1318 = vmatprep.subr.bf16.mxu0 0
        %1319 = vmatpush1.bf16.msra.mxu0 0
        %1320 = vmatprep.subr.bf16.mxu0 0
        %1321 = vmatpush1.bf16.msra.mxu0 0
        %1322 = vmatprep.subr.bf16.mxu0 0
        %1323 = vmatpush1.bf16.msra.mxu0 0
        %1324 = vmatprep.subr.bf16.mxu0 0
        %1325 = vmatpush1.bf16.msra.mxu0 0
        %1326 = vmatprep.mubr.bf16.mxu0 0
        %1327 = vmatmul.mubr.bf16.gmra.mrb[0].mxu0 %v1289
        %v1328 = vpop.f32.mrb[0].mxu0
        %v1329 = vadd.f32 0.0, %v1328
        %v1330 = vpop.f32.mrb[0].mxu0
        %v1331 = vpop.f32.mrb[0].mxu0
        %v1332 = vpop.f32.mrb[0].mxu0
        %1333 = vdwg.mxu0
        %v1334 = vadd.f32 %v1162, %v1329
        %1335 = vrot.lane.b32.xlu0 %v833, 92
        %v1336 = vpop.permute.xlu0 %1335
        %1337 = vrot.lane.b32.xlu0 %v833, 44
        %v1338 = vpop.permute.xlu0 %1337
        %v1340 = vsel %vm844, %v1336, 0
        %v1343 = vsel %vm844, %v1338, 0
        %1345 = vmatprep.subr.bf16.mxu0 0
        %1346 = vmatpush1.bf16.xpose.msra.mxu0 %v1343
        %1347 = vmatprep.subr.bf16.mxu0 0
        %1348 = vmatpush1.bf16.xpose.msra.mxu0 0
        %1349 = vmatprep.subr.bf16.mxu0 0
        %1350 = vmatpush1.bf16.xpose.msra.mxu0 0
        %1351 = vmatprep.subr.bf16.mxu0 0
        %1352 = vmatpush1.bf16.xpose.msra.mxu0 0
        %1353 = vmatprep.subr.bf16.mxu0 0
        %1354 = vmatpush1.bf16.xpose.msra.mxu0 0
        %1355 = vmatprep.subr.bf16.mxu0 0
        %1356 = vmatpush1.bf16.xpose.msra.mxu0 0
        %1357 = vmatprep.subr.bf16.mxu0 0
        %1358 = vmatpush1.bf16.xpose.msra.mxu0 0
        %1359 = vmatprep.subr.bf16.mxu0 0
        %1360 = vmatpush1.bf16.xpose.msra.mxu0 0
        %1361 = vmatprep.subr.bf16.mxu0 0
        %1362 = vmatpush1.bf16.xpose.msra.mxu0 0
        %1363 = vmatprep.subr.bf16.mxu0 0
        %1364 = vmatpush1.bf16.xpose.msra.mxu0 0
        %1365 = vmatprep.subr.bf16.mxu0 0
        %1366 = vmatpush1.bf16.xpose.msra.mxu0 0
        %1367 = vmatprep.subr.bf16.mxu0 0
        %1368 = vmatpush1.bf16.xpose.msra.mxu0 0
        %1369 = vmatprep.subr.bf16.mxu0 0
        %1370 = vmatpush1.bf16.xpose.msra.mxu0 0
        %1371 = vmatprep.subr.bf16.mxu0 0
        %1372 = vmatpush1.bf16.xpose.msra.mxu0 0
        %1373 = vmatprep.subr.bf16.mxu0 0
        %1374 = vmatpush1.bf16.xpose.msra.mxu0 0
        %1375 = vmatprep.subr.bf16.mxu0 0
        %1376 = vmatpush1.bf16.xpose.msra.mxu0 0
        %1377 = vmatprep.mubr.bf16.mxu0 0
        %1378 = vmatmul.mubr.bf16.gmra.mrb[0].mxu0 %v1340
        %v1379 = vpop.f32.mrb[0].mxu0
        %v1380 = vadd.f32 %v839, %v1379
        %v1381 = vpop.f32.mrb[0].mxu0
        %v1382 = vpop.f32.mrb[0].mxu0
        %v1383 = vpop.f32.mrb[0].mxu0
        %1384 = vdwg.mxu0
        %v1385 = vsel %vm891, %v1380, -inf
        %1386 = vmax.xlane.f32.xlu0 %v1385
        %v1387 = vpop.xlane.xlu0 %1386
        %v1388 = vsub.f32 %v1380, %v1387
        %v1389 = vmul.f32 %v1388, 1.442695
        %v1390 = vpow.pop %v1389
        %v1391 = vsel %vm891, %v1390, 0.0
        %1392 = vadd.xlane.f32.xlu0 %v1391
        %v1393 = vpop.xlane.xlu0 %1392
        %v1394 = vrcp.pop %v1393
        %v1395 = vmul.f32 %v1390, %v1394
        %v1396 = vpack.c.bf16 %v1395, %v1395
        %1397 = vrot.lane.b32.xlu0 %v834, 124
        %v1398 = vpop.permute.xlu0 %1397
        %v1400 = vsel %vm891, %v1396, 0
        %v1403 = vsel %vm909, %v1398, 0
        %1405 = vmatprep.subr.bf16.mxu0 0
        %1406 = vmatpush1.bf16.msra.mxu0 %v1403
        %1407 = vmatprep.subr.bf16.mxu0 0
        %1408 = vmatpush1.bf16.msra.mxu0 0
        %1409 = vmatprep.subr.bf16.mxu0 0
        %1410 = vmatpush1.bf16.msra.mxu0 0
        %1411 = vmatprep.subr.bf16.mxu0 0
        %1412 = vmatpush1.bf16.msra.mxu0 0
        %1413 = vmatprep.subr.bf16.mxu0 0
        %1414 = vmatpush1.bf16.msra.mxu0 0
        %1415 = vmatprep.subr.bf16.mxu0 0
        %1416 = vmatpush1.bf16.msra.mxu0 0
        %1417 = vmatprep.subr.bf16.mxu0 0
        %1418 = vmatpush1.bf16.msra.mxu0 0
        %1419 = vmatprep.subr.bf16.mxu0 0
        %1420 = vmatpush1.bf16.msra.mxu0 0
        %1421 = vmatprep.subr.bf16.mxu0 0
        %1422 = vmatpush1.bf16.msra.mxu0 0
        %1423 = vmatprep.subr.bf16.mxu0 0
        %1424 = vmatpush1.bf16.msra.mxu0 0
        %1425 = vmatprep.subr.bf16.mxu0 0
        %1426 = vmatpush1.bf16.msra.mxu0 0
        %1427 = vmatprep.subr.bf16.mxu0 0
        %1428 = vmatpush1.bf16.msra.mxu0 0
        %1429 = vmatprep.subr.bf16.mxu0 0
        %1430 = vmatpush1.bf16.msra.mxu0 0
        %1431 = vmatprep.subr.bf16.mxu0 0
        %1432 = vmatpush1.bf16.msra.mxu0 0
        %1433 = vmatprep.subr.bf16.mxu0 0
        %1434 = vmatpush1.bf16.msra.mxu0 0
        %1435 = vmatprep.subr.bf16.mxu0 0
        %1436 = vmatpush1.bf16.msra.mxu0 0
        %1437 = vmatprep.mubr.bf16.mxu0 0
        %1438 = vmatmul.mubr.bf16.gmra.mrb[0].mxu0 %v1400
        %v1439 = vpop.f32.mrb[0].mxu0
        %v1440 = vadd.f32 0.0, %v1439
        %v1441 = vpop.f32.mrb[0].mxu0
        %v1442 = vpop.f32.mrb[0].mxu0
        %v1443 = vpop.f32.mrb[0].mxu0
        %1444 = vdwg.mxu0
        %v1445 = vpack.c.bf16 %v1440, %v1440
        %v1447 = vunpack.c.l.b16 %v723
        %v1448 = vpack.c.b16 %v1447, %v1286
        %v1449 = vrot.slane %v1448, 2
        %v1451 = vsel %vm844, %v1445, 0
        %v1454 = vsel %vm1074, %v1449, 0
        %1456 = vmatprep.subr.bf16.mxu0 0
        %1457 = vmatpush1.bf16.msra.mxu0 %v1454
        %1458 = vmatprep.subr.bf16.mxu0 0
        %1459 = vmatpush1.bf16.msra.mxu0 0
        %1460 = vmatprep.subr.bf16.mxu0 0
        %1461 = vmatpush1.bf16.msra.mxu0 0
        %1462 = vmatprep.subr.bf16.mxu0 0
        %1463 = vmatpush1.bf16.msra.mxu0 0
        %1464 = vmatprep.subr.bf16.mxu0 0
        %1465 = vmatpush1.bf16.msra.mxu0 0
        %1466 = vmatprep.subr.bf16.mxu0 0
        %1467 = vmatpush1.bf16.msra.mxu0 0
        %1468 = vmatprep.subr.bf16.mxu0 0
        %1469 = vmatpush1.bf16.msra.mxu0 0
        %1470 = vmatprep.subr.bf16.mxu0 0
        %1471 = vmatpush1.bf16.msra.mxu0 0
        %1472 = vmatprep.subr.bf16.mxu0 0
        %1473 = vmatpush1.bf16.msra.mxu0 0
        %1474 = vmatprep.subr.bf16.mxu0 0
        %1475 = vmatpush1.bf16.msra.mxu0 0
        %1476 = vmatprep.subr.bf16.mxu0 0
        %1477 = vmatpush1.bf16.msra.mxu0 0
        %1478 = vmatprep.subr.bf16.mxu0 0
        %1479 = vmatpush1.bf16.msra.mxu0 0
        %1480 = vmatprep.subr.bf16.mxu0 0
        %1481 = vmatpush1.bf16.msra.mxu0 0
        %1482 = vmatprep.subr.bf16.mxu0 0
        %1483 = vmatpush1.bf16.msra.mxu0 0
        %1484 = vmatprep.subr.bf16.mxu0 0
        %1485 = vmatpush1.bf16.msra.mxu0 0
        %1486 = vmatprep.subr.bf16.mxu0 0
        %1487 = vmatpush1.bf16.msra.mxu0 0
        %1488 = vmatprep.mubr.bf16.mxu0 0
        %1489 = vmatmul.mubr.bf16.gmra.mrb[0].mxu0 %v1451
        %v1490 = vpop.f32.mrb[0].mxu0
        %v1491 = vadd.f32 0.0, %v1490
        %v1492 = vpop.f32.mrb[0].mxu0
        %v1493 = vpop.f32.mrb[0].mxu0
        %v1494 = vpop.f32.mrb[0].mxu0
        %1495 = vdwg.mxu0
        %v1496 = vadd.f32 %v1334, %v1491
        %v1497 = vadd.f32 %v709, %v1496
        %v1498 = vlaneseq
        %v1499 = vshrl.u32 %v1498, 7
        %v1500 = vsub.s32 0, %v1499
        %v1501 = vrot.slane %v746, %v1500
        %v1502 = vadd.f32 %v1497, %v1501
        %v1503 = vsel %vm685, %v1502, 0.0
        %1504 = vadd.xlane.f32.xlu0 %v1503
        %v1505 = vpop.xlane.xlu0 %1504
        %v1506 = vmul.f32 %v1505, %v689
        %v1507 = vsub.f32 %v1502, %v1506
        %v1508 = vmul.f32 %v1507, %v1507
        %v1509 = vsel %vm685, %v1508, 0.0
        %1510 = vadd.xlane.f32.xlu0 %v1509
        %v1511 = vpop.xlane.xlu0 %1510
        %v1512 = vmul.f32 %v1511, %v689
        %v1513 = vadd.f32 %v1512, 1e-05
        %v1514 = vrsqrt.pop %v1513
        %v1515 = vmul.f32 %v1507, %v1514
        %v1516 = vlaneseq
        %v1517 = vshrl.u32 %v1516, 7
        %v1518 = vsub.s32 1, %v1517
        %v1519 = vrot.slane %v746, %v1518
        %v1520 = vmul.f32 %v1515, %v1519
        %v1521 = vlaneseq
        %v1522 = vshrl.u32 %v1521, 7
        %v1523 = vsub.s32 2, %v1522
        %v1524 = vrot.slane %v746, %v1523
        %v1525 = vadd.f32 %v1520, %v1524
        %v1526 = vpack.c.bf16 %v1525, %v1525
        %v1527 = vlaneseq
        %v1528 = vshrl.u32 %v1527, 7
        %v1529 = vsub.s32 3, %v1528
        %v1530 = vrot.slane %v746, %v1529
        %v1537 = vunpack.c.l.b16 %v724
        %v1538 = vunpack.c.l.b16 %v725
        %v1539 = vunpack.c.l.b16 %v726
        %v1540 = vunpack.c.l.b16 %v727
        %v1541 = vunpack.c.l.b16 %v728
        %v1542 = vunpack.c.l.b16 %v729
        %v1543 = vpack.c.b16 %v1538, %v1537
        %v1544 = vpack.c.b16 %v1540, %v1539
        %v1545 = vpack.c.b16 %v1542, %v1541
        %v1550 = vsel %vm685, %v1526, 0
        %1552 = vmatprep.subr.bf16.mxu0 0
        %1553 = vmatpush1.bf16.msra.mxu0 %v1543
        %1554 = vmatprep.subr.bf16.mxu0 0
        %1555 = vmatpush1.bf16.msra.mxu0 %v1544
        %1556 = vmatprep.subr.bf16.mxu0 0
        %1557 = vmatpush1.bf16.msra.mxu0 %v1545
        %1558 = vmatprep.subr.bf16.mxu0 0
        %1559 = vmatpush1.bf16.msra.mxu0 0
        %1560 = vmatprep.subr.bf16.mxu0 0
        %1561 = vmatpush1.bf16.msra.mxu0 0
        %1562 = vmatprep.subr.bf16.mxu0 0
        %1563 = vmatpush1.bf16.msra.mxu0 0
        %1564 = vmatprep.subr.bf16.mxu0 0
        %1565 = vmatpush1.bf16.msra.mxu0 0
        %1566 = vmatprep.subr.bf16.mxu0 0
        %1567 = vmatpush1.bf16.msra.mxu0 0
        %1568 = vmatprep.subr.bf16.mxu0 0
        %1569 = vmatpush1.bf16.msra.mxu0 0
        %1570 = vmatprep.subr.bf16.mxu0 0
        %1571 = vmatpush1.bf16.msra.mxu0 0
        %1572 = vmatprep.subr.bf16.mxu0 0
        %1573 = vmatpush1.bf16.msra.mxu0 0
        %1574 = vmatprep.subr.bf16.mxu0 0
        %1575 = vmatpush1.bf16.msra.mxu0 0
        %1576 = vmatprep.subr.bf16.mxu0 0
        %1577 = vmatpush1.bf16.msra.mxu0 0
        %1578 = vmatprep.subr.bf16.mxu0 0
        %1579 = vmatpush1.bf16.msra.mxu0 0
        %1580 = vmatprep.subr.bf16.mxu0 0
        %1581 = vmatpush1.bf16.msra.mxu0 0
        %1582 = vmatprep.subr.bf16.mxu0 0
        %1583 = vmatpush1.bf16.msra.mxu0 0
        %1584 = vmatprep.mubr.bf16.mxu0 0
        %1585 = vmatmul.mubr.bf16.gmra.mrb[0].mxu0 %v1550
        %v1586 = vpop.f32.mrb[0].mxu0
        %v1587 = vadd.f32 %v1530, %v1586
        %v1588 = vpop.f32.mrb[0].mxu0
        %v1589 = vpop.f32.mrb[0].mxu0
        %v1590 = vpop.f32.mrb[0].mxu0
        %1591 = vdwg.mxu0
        %v1592 = vmax.f32 %v1587, 0.0
        %v1593 = vpack.c.bf16 %v1592, %v1592
        %v1594 = vlaneseq
        %v1595 = vshrl.u32 %v1594, 7
        %v1596 = vsub.s32 4, %v1595
        %v1597 = vrot.slane %v746, %v1596
        %v1614 = vunpack.c.l.b16 %v730
        %v1615 = vunpack.c.l.b16 %v731
        %v1616 = vunpack.c.l.b16 %v732
        %v1617 = vunpack.c.l.b16 %v733
        %v1618 = vunpack.c.l.b16 %v734
        %v1619 = vunpack.c.l.b16 %v735
        %v1620 = vunpack.c.l.b16 %v736
        %v1621 = vunpack.c.l.b16 %v737
        %v1622 = vunpack.c.l.b16 %v738
        %v1623 = vunpack.c.l.b16 %v739
        %v1624 = vunpack.c.l.b16 %v740
        %v1625 = vunpack.c.l.b16 %v741
        %v1626 = vunpack.c.l.b16 %v742
        %v1627 = vunpack.c.l.b16 %v743
        %v1628 = vunpack.c.l.b16 %v744
        %v1629 = vunpack.c.l.b16 %v745
        %v1630 = vpack.c.b16 %v1615, %v1614
        %v1631 = vpack.c.b16 %v1617, %v1616
        %v1632 = vpack.c.b16 %v1619, %v1618
        %v1633 = vpack.c.b16 %v1621, %v1620
        %v1634 = vpack.c.b16 %v1623, %v1622
        %v1635 = vpack.c.b16 %v1625, %v1624
        %v1636 = vpack.c.b16 %v1627, %v1626
        %v1637 = vpack.c.b16 %v1629, %v1628
        %1646 = vmatprep.subr.bf16.mxu0 0
        %1647 = vmatpush1.bf16.msra.mxu0 %v1630
        %1648 = vmatprep.subr.bf16.mxu0 0
        %1649 = vmatpush1.bf16.msra.mxu0 %v1631
        %1650 = vmatprep.subr.bf16.mxu0 0
        %1651 = vmatpush1.bf16.msra.mxu0 %v1632
        %1652 = vmatprep.subr.bf16.mxu0 0
        %1653 = vmatpush1.bf16.msra.mxu0 %v1633
        %1654 = vmatprep.subr.bf16.mxu0 0
        %1655 = vmatpush1.bf16.msra.mxu0 %v1634
        %1656 = vmatprep.subr.bf16.mxu0 0
        %1657 = vmatpush1.bf16.msra.mxu0 %v1635
        %1658 = vmatprep.subr.bf16.mxu0 0
        %1659 = vmatpush1.bf16.msra.mxu0 %v1636
        %1660 = vmatprep.subr.bf16.mxu0 0
        %1661 = vmatpush1.bf16.msra.mxu0 %v1637
        %1662 = vmatprep.subr.bf16.mxu0 0
        %1663 = vmatpush1.bf16.msra.mxu0 0
        %1664 = vmatprep.subr.bf16.mxu0 0
        %1665 = vmatpush1.bf16.msra.mxu0 0
        %1666 = vmatprep.subr.bf16.mxu0 0
        %1667 = vmatpush1.bf16.msra.mxu0 0
        %1668 = vmatprep.subr.bf16.mxu0 0
        %1669 = vmatpush1.bf16.msra.mxu0 0
        %1670 = vmatprep.subr.bf16.mxu0 0
        %1671 = vmatpush1.bf16.msra.mxu0 0
        %1672 = vmatprep.subr.bf16.mxu0 0
        %1673 = vmatpush1.bf16.msra.mxu0 0
        %1674 = vmatprep.subr.bf16.mxu0 0
        %1675 = vmatpush1.bf16.msra.mxu0 0
        %1676 = vmatprep.subr.bf16.mxu0 0
        %1677 = vmatpush1.bf16.msra.mxu0 0
        %1678 = vmatprep.mubr.bf16.mxu0 0
        %1679 = vmatmul.mubr.bf16.gmra.mrb[0].mxu0 %v1593
        %v1680 = vpop.f32.mrb[0].mxu0
        %v1681 = vadd.f32 %v1597, %v1680
        %v1682 = vpop.f32.mrb[0].mxu0
        %v1683 = vpop.f32.mrb[0].mxu0
        %v1684 = vpop.f32.mrb[0].mxu0
        %1685 = vdwg.mxu0
        %v1686 = vadd.f32 %v1525, %v1681
        %v1687 = vsel %vm685, %v1686, 0.0
        %1688 = vadd.xlane.f32.xlu0 %v1687
        %v1689 = vpop.xlane.xlu0 %1688
        %v1690 = vmul.f32 %v1689, %v689
        %v1691 = vsub.f32 %v1686, %v1690
        %v1692 = vmul.f32 %v1691, %v1691
        %v1693 = vsel %vm685, %v1692, 0.0
        %1694 = vadd.xlane.f32.xlu0 %v1693
        %v1695 = vpop.xlane.xlu0 %1694
        %v1696 = vmul.f32 %v1695, %v689
        %v1697 = vadd.f32 %v1696, 1e-05
        %v1698 = vrsqrt.pop %v1697
        %v1699 = vmul.f32 %v1691, %v1698
        %v1700 = vlaneseq
        %v1701 = vshrl.u32 %v1700, 7
        %v1702 = vsub.s32 5, %v1701
        %v1703 = vrot.slane %v746, %v1702
        %v1704 = vmul.f32 %v1699, %v1703
        %v1705 = vlaneseq
        %v1706 = vshrl.u32 %v1705, 7
        %v1707 = vsub.s32 6, %v1706
        %v1708 = vrot.slane %v746, %v1707
        %v1709 = vadd.f32 %v1704, %v1708
        %s1710 = scalar_lea.vmem %s3, 48
        %v1711 = vld [vmem:[%s1710] sm:$0xff]
        %v1712 = vld [vmem:[%s1710 + $0x8] sm:$0xff]
        %v1713 = vld [vmem:[%s1710 + $0x10] sm:$0xff]
        %v1714 = vld [vmem:[%s1710 + $0x18] sm:$0xff]
        %v1715 = vld [vmem:[%s1710 + $0x20] sm:$0xff]
        %v1716 = vld [vmem:[%s1710 + $0x28] sm:$0xff]
        %s1717 = scalar_lea.vmem [#allocation7], 2
        %v1718 = vld [vmem:[%s1717] sm:$0x3]
        %s1719 = scalar_lea.vmem %s5, 24
        %v1720 = vld [vmem:[%s1719] sm:$0xf]
        %v1721 = vld [vmem:[%s1719 + $0x4] sm:$0xf]
        %v1722 = vld [vmem:[%s1719 + $0x8] sm:$0xf]
        %v1723 = vld [vmem:[%s1719 + $0xc] sm:$0xf]
        %v1724 = vld [vmem:[%s1719 + $0x10] sm:$0xf]
        %v1725 = vld [vmem:[%s1719 + $0x14] sm:$0xf]
        %s1726 = scalar_lea.vmem %s6, 24
        %v1727 = vld [vmem:[%s1726] sm:$0xf]
        %v1728 = vld [vmem:[%s1726 + $0x4] sm:$0xf]
        %v1729 = vld [vmem:[%s1726 + $0x8] sm:$0xf]
        %v1730 = vld [vmem:[%s1726 + $0xc] sm:$0xf]
        %v1731 = vld [vmem:[%s1726 + $0x10] sm:$0xf]
        %v1732 = vld [vmem:[%s1726 + $0x14] sm:$0xf]
        %s1733 = scalar_lea.vmem %s7, 64
        %v1734 = vld [vmem:[%s1733] sm:$0xf]
        %v1735 = vld [vmem:[%s1733 + $0x4] sm:$0xf]
        %v1736 = vld [vmem:[%s1733 + $0x8] sm:$0xf]
        %v1737 = vld [vmem:[%s1733 + $0xc] sm:$0xf]
        %v1738 = vld [vmem:[%s1733 + $0x10] sm:$0xf]
        %v1739 = vld [vmem:[%s1733 + $0x14] sm:$0xf]
        %v1740 = vld [vmem:[%s1733 + $0x18] sm:$0xf]
        %v1741 = vld [vmem:[%s1733 + $0x1c] sm:$0xf]
        %v1742 = vld [vmem:[%s1733 + $0x20] sm:$0xf]
        %v1743 = vld [vmem:[%s1733 + $0x24] sm:$0xf]
        %v1744 = vld [vmem:[%s1733 + $0x28] sm:$0xf]
        %v1745 = vld [vmem:[%s1733 + $0x2c] sm:$0xf]
        %v1746 = vld [vmem:[%s1733 + $0x30] sm:$0xf]
        %v1747 = vld [vmem:[%s1733 + $0x34] sm:$0xf]
        %v1748 = vld [vmem:[%s1733 + $0x38] sm:$0xf]
        %v1749 = vld [vmem:[%s1733 + $0x3c] sm:$0xf]
        %s1750 = scalar_lea.vmem [#allocation8], 8
        %v1751 = vld [vmem:[%s1750] sm:$0xff]
        %v1752 = vpack.c.bf16 %v1709, %v1709
        %v1754 = vlaneseq
        %v1755 = vshrl.u32 %v1754, 7
        %v1756 = vsub.s32 0, %v1755
        %v1757 = vrot.slane %v1718, %v1756
        %v1758 = vlaneseq
        %v1759 = vshrl.u32 %v1758, 7
        %v1760 = vsub.s32 1, %v1759
        %v1761 = vrot.slane %v1718, %v1760
        %v1770 = vunpack.c.l.b16 %v1711
        %v1771 = vunpack.c.h.b16 %v1711
        %v1772 = vunpack.c.l.b16 %v1712
        %v1773 = vunpack.c.h.b16 %v1712
        %v1774 = vunpack.c.l.b16 %v1713
        %v1775 = vunpack.c.h.b16 %v1713
        %v1776 = vunpack.c.l.b16 %v1714
        %v1777 = vunpack.c.h.b16 %v1714
        %v1778 = vunpack.c.l.b16 %v1715
        %v1779 = vunpack.c.h.b16 %v1715
        %v1780 = vunpack.c.l.b16 %v1716
        %v1781 = vunpack.c.h.b16 %v1716
        %v1782 = vpack.c.b16 %v1772, %v1770
        %v1783 = vpack.c.b16 %v1773, %v1771
        %v1784 = vpack.c.b16 %v1776, %v1774
        %v1785 = vpack.c.b16 %v1777, %v1775
        %v1786 = vpack.c.b16 %v1780, %v1778
        %v1787 = vpack.c.b16 %v1781, %v1779
        %v1795 = vsel %vm685, %v1752, 0
        %1797 = vmatprep.subr.bf16.mxu0 %v1783
        %1798 = vmatpush1.bf16.msra.mxu0 %v1782
        %1799 = vmatprep.subr.bf16.mxu0 %v1785
        %1800 = vmatpush1.bf16.msra.mxu0 %v1784
        %1801 = vmatprep.subr.bf16.mxu0 %v1787
        %1802 = vmatpush1.bf16.msra.mxu0 %v1786
        %1803 = vmatprep.subr.bf16.mxu0 0
        %1804 = vmatpush1.bf16.msra.mxu0 0
        %1805 = vmatprep.subr.bf16.mxu0 0
        %1806 = vmatpush1.bf16.msra.mxu0 0
        %1807 = vmatprep.subr.bf16.mxu0 0
        %1808 = vmatpush1.bf16.msra.mxu0 0
        %1809 = vmatprep.subr.bf16.mxu0 0
        %1810 = vmatpush1.bf16.msra.mxu0 0
        %1811 = vmatprep.subr.bf16.mxu0 0
        %1812 = vmatpush1.bf16.msra.mxu0 0
        %1813 = vmatprep.subr.bf16.mxu0 0
        %1814 = vmatpush1.bf16.msra.mxu0 0
        %1815 = vmatprep.subr.bf16.mxu0 0
        %1816 = vmatpush1.bf16.msra.mxu0 0
        %1817 = vmatprep.subr.bf16.mxu0 0
        %1818 = vmatpush1.bf16.msra.mxu0 0
        %1819 = vmatprep.subr.bf16.mxu0 0
        %1820 = vmatpush1.bf16.msra.mxu0 0
        %1821 = vmatprep.subr.bf16.mxu0 0
        %1822 = vmatpush1.bf16.msra.mxu0 0
        %1823 = vmatprep.subr.bf16.mxu0 0
        %1824 = vmatpush1.bf16.msra.mxu0 0
        %1825 = vmatprep.subr.bf16.mxu0 0
        %1826 = vmatpush1.bf16.msra.mxu0 0
        %1827 = vmatprep.subr.bf16.mxu0 0
        %1828 = vmatpush1.bf16.msra.mxu0 0
        %1829 = vmatprep.mubr.bf16.mxu0 0
        %1830 = vmatmul.mubr.bf16.gmra.mrb[0].mxu0 %v1795
        %v1831 = vpop.f32.mrb[0].mxu0
        %v1832 = vadd.f32 %v1757, %v1831
        %v1833 = vpop.f32.mrb[0].mxu0
        %v1834 = vadd.f32 %v1761, %v1833
        %v1835 = vpop.f32.mrb[0].mxu0
        %v1836 = vpop.f32.mrb[0].mxu0
        %1837 = vdwg.mxu0
        %v1838 = vpack.c.bf16 %v1832, %v1832
        %v1839 = vpack.c.bf16 %v1834, %v1834
        %1841 = vrot.lane.b32.xlu0 %v1838, 80
        %v1842 = vpop.permute.xlu0 %1841
        %v1844 = vsel %vm844, %v1838, 0
        %v1847 = vsel %vm844, %v1842, 0
        %1849 = vmatprep.subr.bf16.mxu0 0
        %1850 = vmatpush1.bf16.xpose.msra.mxu0 %v1847
        %1851 = vmatprep.subr.bf16.mxu0 0
        %1852 = vmatpush1.bf16.xpose.msra.mxu0 0
        %1853 = vmatprep.subr.bf16.mxu0 0
        %1854 = vmatpush1.bf16.xpose.msra.mxu0 0
        %1855 = vmatprep.subr.bf16.mxu0 0
        %1856 = vmatpush1.bf16.xpose.msra.mxu0 0
        %1857 = vmatprep.subr.bf16.mxu0 0
        %1858 = vmatpush1.bf16.xpose.msra.mxu0 0
        %1859 = vmatprep.subr.bf16.mxu0 0
        %1860 = vmatpush1.bf16.xpose.msra.mxu0 0
        %1861 = vmatprep.subr.bf16.mxu0 0
        %1862 = vmatpush1.bf16.xpose.msra.mxu0 0
        %1863 = vmatprep.subr.bf16.mxu0 0
        %1864 = vmatpush1.bf16.xpose.msra.mxu0 0
        %1865 = vmatprep.subr.bf16.mxu0 0
        %1866 = vmatpush1.bf16.xpose.msra.mxu0 0
        %1867 = vmatprep.subr.bf16.mxu0 0
        %1868 = vmatpush1.bf16.xpose.msra.mxu0 0
        %1869 = vmatprep.subr.bf16.mxu0 0
        %1870 = vmatpush1.bf16.xpose.msra.mxu0 0
        %1871 = vmatprep.subr.bf16.mxu0 0
        %1872 = vmatpush1.bf16.xpose.msra.mxu0 0
        %1873 = vmatprep.subr.bf16.mxu0 0
        %1874 = vmatpush1.bf16.xpose.msra.mxu0 0
        %1875 = vmatprep.subr.bf16.mxu0 0
        %1876 = vmatpush1.bf16.xpose.msra.mxu0 0
        %1877 = vmatprep.subr.bf16.mxu0 0
        %1878 = vmatpush1.bf16.xpose.msra.mxu0 0
        %1879 = vmatprep.subr.bf16.mxu0 0
        %1880 = vmatpush1.bf16.xpose.msra.mxu0 0
        %1881 = vmatprep.mubr.bf16.mxu0 0
        %1882 = vmatmul.mubr.bf16.gmra.mrb[0].mxu0 %v1844
        %v1883 = vpop.f32.mrb[0].mxu0
        %v1884 = vadd.f32 %v839, %v1883
        %v1885 = vpop.f32.mrb[0].mxu0
        %v1886 = vpop.f32.mrb[0].mxu0
        %v1887 = vpop.f32.mrb[0].mxu0
        %1888 = vdwg.mxu0
        %v1889 = vsel %vm891, %v1884, -inf
        %1890 = vmax.xlane.f32.xlu0 %v1889
        %v1891 = vpop.xlane.xlu0 %1890
        %v1892 = vsub.f32 %v1884, %v1891
        %v1893 = vmul.f32 %v1892, 1.442695
        %v1894 = vpow.pop %v1893
        %v1895 = vsel %vm891, %v1894, 0.0
        %1896 = vadd.xlane.f32.xlu0 %v1895
        %v1897 = vpop.xlane.xlu0 %1896
        %v1898 = vrcp.pop %v1897
        %v1899 = vmul.f32 %v1894, %v1898
        %v1900 = vpack.c.bf16 %v1899, %v1899
        %1901 = vrot.lane.b32.xlu0 %v1838, 32
        %v1902 = vpop.permute.xlu0 %1901
        %v1904 = vsel %vm891, %v1900, 0
        %v1907 = vsel %vm909, %v1902, 0
        %1909 = vmatprep.subr.bf16.mxu0 0
        %1910 = vmatpush1.bf16.msra.mxu0 %v1907
        %1911 = vmatprep.subr.bf16.mxu0 0
        %1912 = vmatpush1.bf16.msra.mxu0 0
        %1913 = vmatprep.subr.bf16.mxu0 0
        %1914 = vmatpush1.bf16.msra.mxu0 0
        %1915 = vmatprep.subr.bf16.mxu0 0
        %1916 = vmatpush1.bf16.msra.mxu0 0
        %1917 = vmatprep.subr.bf16.mxu0 0
        %1918 = vmatpush1.bf16.msra.mxu0 0
        %1919 = vmatprep.subr.bf16.mxu0 0
        %1920 = vmatpush1.bf16.msra.mxu0 0
        %1921 = vmatprep.subr.bf16.mxu0 0
        %1922 = vmatpush1.bf16.msra.mxu0 0
        %1923 = vmatprep.subr.bf16.mxu0 0
        %1924 = vmatpush1.bf16.msra.mxu0 0
        %1925 = vmatprep.subr.bf16.mxu0 0
        %1926 = vmatpush1.bf16.msra.mxu0 0
        %1927 = vmatprep.subr.bf16.mxu0 0
        %1928 = vmatpush1.bf16.msra.mxu0 0
        %1929 = vmatprep.subr.bf16.mxu0 0
        %1930 = vmatpush1.bf16.msra.mxu0 0
        %1931 = vmatprep.subr.bf16.mxu0 0
        %1932 = vmatpush1.bf16.msra.mxu0 0
        %1933 = vmatprep.subr.bf16.mxu0 0
        %1934 = vmatpush1.bf16.msra.mxu0 0
        %1935 = vmatprep.subr.bf16.mxu0 0
        %1936 = vmatpush1.bf16.msra.mxu0 0
        %1937 = vmatprep.subr.bf16.mxu0 0
        %1938 = vmatpush1.bf16.msra.mxu0 0
        %1939 = vmatprep.subr.bf16.mxu0 0
        %1940 = vmatpush1.bf16.msra.mxu0 0
        %1941 = vmatprep.mubr.bf16.mxu0 0
        %1942 = vmatmul.mubr.bf16.gmra.mrb[0].mxu0 %v1904
        %v1943 = vpop.f32.mrb[0].mxu0
        %v1944 = vadd.f32 0.0, %v1943
        %v1945 = vpop.f32.mrb[0].mxu0
        %v1946 = vpop.f32.mrb[0].mxu0
        %v1947 = vpop.f32.mrb[0].mxu0
        %1948 = vdwg.mxu0
        %v1949 = vpack.c.bf16 %v1944, %v1944
        %1950 = vrot.lane.b32.xlu0 %v1838, 116
        %v1951 = vpop.permute.xlu0 %1950
        %1952 = vrot.lane.b32.xlu0 %v1838, 68
        %v1953 = vpop.permute.xlu0 %1952
        %v1955 = vsel %vm844, %v1951, 0
        %v1958 = vsel %vm844, %v1953, 0
        %1960 = vmatprep.subr.bf16.mxu0 0
        %1961 = vmatpush1.bf16.xpose.msra.mxu0 %v1958
        %1962 = vmatprep.subr.bf16.mxu0 0
        %1963 = vmatpush1.bf16.xpose.msra.mxu0 0
        %1964 = vmatprep.subr.bf16.mxu0 0
        %1965 = vmatpush1.bf16.xpose.msra.mxu0 0
        %1966 = vmatprep.subr.bf16.mxu0 0
        %1967 = vmatpush1.bf16.xpose.msra.mxu0 0
        %1968 = vmatprep.subr.bf16.mxu0 0
        %1969 = vmatpush1.bf16.xpose.msra.mxu0 0
        %1970 = vmatprep.subr.bf16.mxu0 0
        %1971 = vmatpush1.bf16.xpose.msra.mxu0 0
        %1972 = vmatprep.subr.bf16.mxu0 0
        %1973 = vmatpush1.bf16.xpose.msra.mxu0 0
        %1974 = vmatprep.subr.bf16.mxu0 0
        %1975 = vmatpush1.bf16.xpose.msra.mxu0 0
        %1976 = vmatprep.subr.bf16.mxu0 0
        %1977 = vmatpush1.bf16.xpose.msra.mxu0 0
        %1978 = vmatprep.subr.bf16.mxu0 0
        %1979 = vmatpush1.bf16.xpose.msra.mxu0 0
        %1980 = vmatprep.subr.bf16.mxu0 0
        %1981 = vmatpush1.bf16.xpose.msra.mxu0 0
        %1982 = vmatprep.subr.bf16.mxu0 0
        %1983 = vmatpush1.bf16.xpose.msra.mxu0 0
        %1984 = vmatprep.subr.bf16.mxu0 0
        %1985 = vmatpush1.bf16.xpose.msra.mxu0 0
        %1986 = vmatprep.subr.bf16.mxu0 0
        %1987 = vmatpush1.bf16.xpose.msra.mxu0 0
        %1988 = vmatprep.subr.bf16.mxu0 0
        %1989 = vmatpush1.bf16.xpose.msra.mxu0 0
        %1990 = vmatprep.subr.bf16.mxu0 0
        %1991 = vmatpush1.bf16.xpose.msra.mxu0 0
        %1992 = vmatprep.mubr.bf16.mxu0 0
        %1993 = vmatmul.mubr.bf16.gmra.mrb[0].mxu0 %v1955
        %v1994 = vpop.f32.mrb[0].mxu0
        %v1995 = vadd.f32 %v839, %v1994
        %v1996 = vpop.f32.mrb[0].mxu0
        %v1997 = vpop.f32.mrb[0].mxu0
        %v1998 = vpop.f32.mrb[0].mxu0
        %1999 = vdwg.mxu0
        %v2000 = vsel %vm891, %v1995, -inf
        %2001 = vmax.xlane.f32.xlu0 %v2000
        %v2002 = vpop.xlane.xlu0 %2001
        %v2003 = vsub.f32 %v1995, %v2002
        %v2004 = vmul.f32 %v2003, 1.442695
        %v2005 = vpow.pop %v2004
        %v2006 = vsel %vm891, %v2005, 0.0
        %2007 = vadd.xlane.f32.xlu0 %v2006
        %v2008 = vpop.xlane.xlu0 %2007
        %v2009 = vrcp.pop %v2008
        %v2010 = vmul.f32 %v2005, %v2009
        %v2011 = vpack.c.bf16 %v2010, %v2010
        %2012 = vrot.lane.b32.xlu0 %v1838, 20
        %v2013 = vpop.permute.xlu0 %2012
        %v2015 = vsel %vm891, %v2011, 0
        %v2018 = vsel %vm909, %v2013, 0
        %2020 = vmatprep.subr.bf16.mxu0 0
        %2021 = vmatpush1.bf16.msra.mxu0 %v2018
        %2022 = vmatprep.subr.bf16.mxu0 0
        %2023 = vmatpush1.bf16.msra.mxu0 0
        %2024 = vmatprep.subr.bf16.mxu0 0
        %2025 = vmatpush1.bf16.msra.mxu0 0
        %2026 = vmatprep.subr.bf16.mxu0 0
        %2027 = vmatpush1.bf16.msra.mxu0 0
        %2028 = vmatprep.subr.bf16.mxu0 0
        %2029 = vmatpush1.bf16.msra.mxu0 0
        %2030 = vmatprep.subr.bf16.mxu0 0
        %2031 = vmatpush1.bf16.msra.mxu0 0
        %2032 = vmatprep.subr.bf16.mxu0 0
        %2033 = vmatpush1.bf16.msra.mxu0 0
        %2034 = vmatprep.subr.bf16.mxu0 0
        %2035 = vmatpush1.bf16.msra.mxu0 0
        %2036 = vmatprep.subr.bf16.mxu0 0
        %2037 = vmatpush1.bf16.msra.mxu0 0
        %2038 = vmatprep.subr.bf16.mxu0 0
        %2039 = vmatpush1.bf16.msra.mxu0 0
        %2040 = vmatprep.subr.bf16.mxu0 0
        %2041 = vmatpush1.bf16.msra.mxu0 0
        %2042 = vmatprep.subr.bf16.mxu0 0
        %2043 = vmatpush1.bf16.msra.mxu0 0
        %2044 = vmatprep.subr.bf16.mxu0 0
        %2045 = vmatpush1.bf16.msra.mxu0 0
        %2046 = vmatprep.subr.bf16.mxu0 0
        %2047 = vmatpush1.bf16.msra.mxu0 0
        %2048 = vmatprep.subr.bf16.mxu0 0
        %2049 = vmatpush1.bf16.msra.mxu0 0
        %2050 = vmatprep.subr.bf16.mxu0 0
        %2051 = vmatpush1.bf16.msra.mxu0 0
        %2052 = vmatprep.mubr.bf16.mxu0 0
        %2053 = vmatmul.mubr.bf16.gmra.mrb[0].mxu0 %v2015
        %v2054 = vpop.f32.mrb[0].mxu0
        %v2055 = vadd.f32 0.0, %v2054
        %v2056 = vpop.f32.mrb[0].mxu0
        %v2057 = vpop.f32.mrb[0].mxu0
        %v2058 = vpop.f32.mrb[0].mxu0
        %2059 = vdwg.mxu0
        %v2060 = vpack.c.bf16 %v2055, %v2055
        %v2063 = vunpack.c.l.b16 %v1721
        %v2064 = vunpack.c.l.b16 %v1722
        %v2065 = vpack.c.b16 %v2064, %v2063
        %v2066 = vrot.slane %v2065, 2
        %v2068 = vsel %vm844, %v2060, 0
        %v2071 = vsel %vm1074, %v2066, 0
        %2073 = vmatprep.subr.bf16.mxu0 0
        %2074 = vmatpush1.bf16.msra.mxu0 %v2071
        %2075 = vmatprep.subr.bf16.mxu0 0
        %2076 = vmatpush1.bf16.msra.mxu0 0
        %2077 = vmatprep.subr.bf16.mxu0 0
        %2078 = vmatpush1.bf16.msra.mxu0 0
        %2079 = vmatprep.subr.bf16.mxu0 0
        %2080 = vmatpush1.bf16.msra.mxu0 0
        %2081 = vmatprep.subr.bf16.mxu0 0
        %2082 = vmatpush1.bf16.msra.mxu0 0
        %2083 = vmatprep.subr.bf16.mxu0 0
        %2084 = vmatpush1.bf16.msra.mxu0 0
        %2085 = vmatprep.subr.bf16.mxu0 0
        %2086 = vmatpush1.bf16.msra.mxu0 0
        %2087 = vmatprep.subr.bf16.mxu0 0
        %2088 = vmatpush1.bf16.msra.mxu0 0
        %2089 = vmatprep.subr.bf16.mxu0 0
        %2090 = vmatpush1.bf16.msra.mxu0 0
        %2091 = vmatprep.subr.bf16.mxu0 0
        %2092 = vmatpush1.bf16.msra.mxu0 0
        %2093 = vmatprep.subr.bf16.mxu0 0
        %2094 = vmatpush1.bf16.msra.mxu0 0
        %2095 = vmatprep.subr.bf16.mxu0 0
        %2096 = vmatpush1.bf16.msra.mxu0 0
        %2097 = vmatprep.subr.bf16.mxu0 0
        %2098 = vmatpush1.bf16.msra.mxu0 0
        %2099 = vmatprep.subr.bf16.mxu0 0
        %2100 = vmatpush1.bf16.msra.mxu0 0
        %2101 = vmatprep.subr.bf16.mxu0 0
        %2102 = vmatpush1.bf16.msra.mxu0 0
        %2103 = vmatprep.subr.bf16.mxu0 0
        %2104 = vmatpush1.bf16.msra.mxu0 0
        %2105 = vmatprep.mubr.bf16.mxu0 0
        %2106 = vmatmul.mubr.bf16.gmra.mrb[0].mxu0 %v2068
        %v2107 = vpop.f32.mrb[0].mxu0
        %v2108 = vadd.f32 0.0, %v2107
        %v2109 = vpop.f32.mrb[0].mxu0
        %v2110 = vpop.f32.mrb[0].mxu0
        %v2111 = vpop.f32.mrb[0].mxu0
        %2112 = vdwg.mxu0
        %v2114 = vunpack.c.l.b16 %v1720
        %v2115 = vpack.c.b16 %v2063, %v2114
        %v2117 = vsel %vm844, %v1949, 0
        %v2120 = vsel %vm1074, %v2115, 0
        %2122 = vmatprep.subr.bf16.mxu0 0
        %2123 = vmatpush1.bf16.msra.mxu0 %v2120
        %2124 = vmatprep.subr.bf16.mxu0 0
        %2125 = vmatpush1.bf16.msra.mxu0 0
        %2126 = vmatprep.subr.bf16.mxu0 0
        %2127 = vmatpush1.bf16.msra.mxu0 0
        %2128 = vmatprep.subr.bf16.mxu0 0
        %2129 = vmatpush1.bf16.msra.mxu0 0
        %2130 = vmatprep.subr.bf16.mxu0 0
        %2131 = vmatpush1.bf16.msra.mxu0 0
        %2132 = vmatprep.subr.bf16.mxu0 0
        %2133 = vmatpush1.bf16.msra.mxu0 0
        %2134 = vmatprep.subr.bf16.mxu0 0
        %2135 = vmatpush1.bf16.msra.mxu0 0
        %2136 = vmatprep.subr.bf16.mxu0 0
        %2137 = vmatpush1.bf16.msra.mxu0 0
        %2138 = vmatprep.subr.bf16.mxu0 0
        %2139 = vmatpush1.bf16.msra.mxu0 0
        %2140 = vmatprep.subr.bf16.mxu0 0
        %2141 = vmatpush1.bf16.msra.mxu0 0
        %2142 = vmatprep.subr.bf16.mxu0 0
        %2143 = vmatpush1.bf16.msra.mxu0 0
        %2144 = vmatprep.subr.bf16.mxu0 0
        %2145 = vmatpush1.bf16.msra.mxu0 0
        %2146 = vmatprep.subr.bf16.mxu0 0
        %2147 = vmatpush1.bf16.msra.mxu0 0
        %2148 = vmatprep.subr.bf16.mxu0 0
        %2149 = vmatpush1.bf16.msra.mxu0 0
        %2150 = vmatprep.subr.bf16.mxu0 0
        %2151 = vmatpush1.bf16.msra.mxu0 0
        %2152 = vmatprep.subr.bf16.mxu0 0
        %2153 = vmatpush1.bf16.msra.mxu0 0
        %2154 = vmatprep.mubr.bf16.mxu0 0
        %2155 = vmatmul.mubr.bf16.gmra.mrb[0].mxu0 %v2117
        %v2156 = vpop.f32.mrb[0].mxu0
        %v2157 = vadd.f32 %v2108, %v2156
        %v2158 = vpop.f32.mrb[0].mxu0
        %v2159 = vpop.f32.mrb[0].mxu0
        %v2160 = vpop.f32.mrb[0].mxu0
        %2161 = vdwg.mxu0
        %2162 = vrot.lane.b32.xlu0 %v1838, 104
        %v2163 = vpop.permute.xlu0 %2162
        %2164 = vrot.lane.b32.xlu0 %v1838, 56
        %v2165 = vpop.permute.xlu0 %2164
        %v2167 = vsel %vm844, %v2163, 0
        %v2170 = vsel %vm844, %v2165, 0
        %2172 = vmatprep.subr.bf16.mxu0 0
        %2173 = vmatpush1.bf16.xpose.msra.mxu0 %v2170
        %2174 = vmatprep.subr.bf16.mxu0 0
        %2175 = vmatpush1.bf16.xpose.msra.mxu0 0
        %2176 = vmatprep.subr.bf16.mxu0 0
        %2177 = vmatpush1.bf16.xpose.msra.mxu0 0
        %2178 = vmatprep.subr.bf16.mxu0 0
        %2179 = vmatpush1.bf16.xpose.msra.mxu0 0
        %2180 = vmatprep.subr.bf16.mxu0 0
        %2181 = vmatpush1.bf16.xpose.msra.mxu0 0
        %2182 = vmatprep.subr.bf16.mxu0 0
        %2183 = vmatpush1.bf16.xpose.msra.mxu0 0
        %2184 = vmatprep.subr.bf16.mxu0 0
        %2185 = vmatpush1.bf16.xpose.msra.mxu0 0
        %2186 = vmatprep.subr.bf16.mxu0 0
        %2187 = vmatpush1.bf16.xpose.msra.mxu0 0
        %2188 = vmatprep.subr.bf16.mxu0 0
        %2189 = vmatpush1.bf16.xpose.msra.mxu0 0
        %2190 = vmatprep.subr.bf16.mxu0 0
        %2191 = vmatpush1.bf16.xpose.msra.mxu0 0
        %2192 = vmatprep.subr.bf16.mxu0 0
        %2193 = vmatpush1.bf16.xpose.msra.mxu0 0
        %2194 = vmatprep.subr.bf16.mxu0 0
        %2195 = vmatpush1.bf16.xpose.msra.mxu0 0
        %2196 = vmatprep.subr.bf16.mxu0 0
        %2197 = vmatpush1.bf16.xpose.msra.mxu0 0
        %2198 = vmatprep.subr.bf16.mxu0 0
        %2199 = vmatpush1.bf16.xpose.msra.mxu0 0
        %2200 = vmatprep.subr.bf16.mxu0 0
        %2201 = vmatpush1.bf16.xpose.msra.mxu0 0
        %2202 = vmatprep.subr.bf16.mxu0 0
        %2203 = vmatpush1.bf16.xpose.msra.mxu0 0
        %2204 = vmatprep.mubr.bf16.mxu0 0
        %2205 = vmatmul.mubr.bf16.gmra.mrb[0].mxu0 %v2167
        %v2206 = vpop.f32.mrb[0].mxu0
        %v2207 = vadd.f32 %v839, %v2206
        %v2208 = vpop.f32.mrb[0].mxu0
        %v2209 = vpop.f32.mrb[0].mxu0
        %v2210 = vpop.f32.mrb[0].mxu0
        %2211 = vdwg.mxu0
        %v2212 = vsel %vm891, %v2207, -inf
        %2213 = vmax.xlane.f32.xlu0 %v2212
        %v2214 = vpop.xlane.xlu0 %2213
        %v2215 = vsub.f32 %v2207, %v2214
        %v2216 = vmul.f32 %v2215, 1.442695
        %v2217 = vpow.pop %v2216
        %v2218 = vsel %vm891, %v2217, 0.0
        %2219 = vadd.xlane.f32.xlu0 %v2218
        %v2220 = vpop.xlane.xlu0 %2219
        %v2221 = vrcp.pop %v2220
        %v2222 = vmul.f32 %v2217, %v2221
        %v2223 = vpack.c.bf16 %v2222, %v2222
        %2225 = vrot.lane.b32.xlu0 %v1838, 8
        %v2226 = vpop.permute.xlu0 %2225
        %2227 = vrot.lane.b32.xlu0 %v1839, 8
        %v2228 = vpop.permute.xlu0 %2227
        %v2229 = vsel %vm1234, %v2226, %v2228
        %v2231 = vsel %vm891, %v2223, 0
        %v2234 = vsel %vm909, %v2229, 0
        %2236 = vmatprep.subr.bf16.mxu0 0
        %2237 = vmatpush1.bf16.msra.mxu0 %v2234
        %2238 = vmatprep.subr.bf16.mxu0 0
        %2239 = vmatpush1.bf16.msra.mxu0 0
        %2240 = vmatprep.subr.bf16.mxu0 0
        %2241 = vmatpush1.bf16.msra.mxu0 0
        %2242 = vmatprep.subr.bf16.mxu0 0
        %2243 = vmatpush1.bf16.msra.mxu0 0
        %2244 = vmatprep.subr.bf16.mxu0 0
        %2245 = vmatpush1.bf16.msra.mxu0 0
        %2246 = vmatprep.subr.bf16.mxu0 0
        %2247 = vmatpush1.bf16.msra.mxu0 0
        %2248 = vmatprep.subr.bf16.mxu0 0
        %2249 = vmatpush1.bf16.msra.mxu0 0
        %2250 = vmatprep.subr.bf16.mxu0 0
        %2251 = vmatpush1.bf16.msra.mxu0 0
        %2252 = vmatprep.subr.bf16.mxu0 0
        %2253 = vmatpush1.bf16.msra.mxu0 0
        %2254 = vmatprep.subr.bf16.mxu0 0
        %2255 = vmatpush1.bf16.msra.mxu0 0
        %2256 = vmatprep.subr.bf16.mxu0 0
        %2257 = vmatpush1.bf16.msra.mxu0 0
        %2258 = vmatprep.subr.bf16.mxu0 0
        %2259 = vmatpush1.bf16.msra.mxu0 0
        %2260 = vmatprep.subr.bf16.mxu0 0
        %2261 = vmatpush1.bf16.msra.mxu0 0
        %2262 = vmatprep.subr.bf16.mxu0 0
        %2263 = vmatpush1.bf16.msra.mxu0 0
        %2264 = vmatprep.subr.bf16.mxu0 0
        %2265 = vmatpush1.bf16.msra.mxu0 0
        %2266 = vmatprep.subr.bf16.mxu0 0
        %2267 = vmatpush1.bf16.msra.mxu0 0
        %2268 = vmatprep.mubr.bf16.mxu0 0
        %2269 = vmatmul.mubr.bf16.gmra.mrb[0].mxu0 %v2231
        %v2270 = vpop.f32.mrb[0].mxu0
        %v2271 = vadd.f32 0.0, %v2270
        %v2272 = vpop.f32.mrb[0].mxu0
        %v2273 = vpop.f32.mrb[0].mxu0
        %v2274 = vpop.f32.mrb[0].mxu0
        %2275 = vdwg.mxu0
        %v2276 = vpack.c.bf16 %v2271, %v2271
        %v2279 = vunpack.c.l.b16 %v1723
        %v2280 = vunpack.c.l.b16 %v1724
        %v2281 = vpack.c.b16 %v2280, %v2279
        %v2283 = vsel %vm844, %v2276, 0
        %v2286 = vsel %vm1074, %v2281, 0
        %2288 = vmatprep.subr.bf16.mxu0 0
        %2289 = vmatpush1.bf16.msra.mxu0 %v2286
        %2290 = vmatprep.subr.bf16.mxu0 0
        %2291 = vmatpush1.bf16.msra.mxu0 0
        %2292 = vmatprep.subr.bf16.mxu0 0
        %2293 = vmatpush1.bf16.msra.mxu0 0
        %2294 = vmatprep.subr.bf16.mxu0 0
        %2295 = vmatpush1.bf16.msra.mxu0 0
        %2296 = vmatprep.subr.bf16.mxu0 0
        %2297 = vmatpush1.bf16.msra.mxu0 0
        %2298 = vmatprep.subr.bf16.mxu0 0
        %2299 = vmatpush1.bf16.msra.mxu0 0
        %2300 = vmatprep.subr.bf16.mxu0 0
        %2301 = vmatpush1.bf16.msra.mxu0 0
        %2302 = vmatprep.subr.bf16.mxu0 0
        %2303 = vmatpush1.bf16.msra.mxu0 0
        %2304 = vmatprep.subr.bf16.mxu0 0
        %2305 = vmatpush1.bf16.msra.mxu0 0
        %2306 = vmatprep.subr.bf16.mxu0 0
        %2307 = vmatpush1.bf16.msra.mxu0 0
        %2308 = vmatprep.subr.bf16.mxu0 0
        %2309 = vmatpush1.bf16.msra.mxu0 0
        %2310 = vmatprep.subr.bf16.mxu0 0
        %2311 = vmatpush1.bf16.msra.mxu0 0
        %2312 = vmatprep.subr.bf16.mxu0 0
        %2313 = vmatpush1.bf16.msra.mxu0 0
        %2314 = vmatprep.subr.bf16.mxu0 0
        %2315 = vmatpush1.bf16.msra.mxu0 0
        %2316 = vmatprep.subr.bf16.mxu0 0
        %2317 = vmatpush1.bf16.msra.mxu0 0
        %2318 = vmatprep.subr.bf16.mxu0 0
        %2319 = vmatpush1.bf16.msra.mxu0 0
        %2320 = vmatprep.mubr.bf16.mxu0 0
        %2321 = vmatmul.mubr.bf16.gmra.mrb[0].mxu0 %v2283
        %v2322 = vpop.f32.mrb[0].mxu0
        %v2323 = vadd.f32 0.0, %v2322
        %v2324 = vpop.f32.mrb[0].mxu0
        %v2325 = vpop.f32.mrb[0].mxu0
        %v2326 = vpop.f32.mrb[0].mxu0
        %2327 = vdwg.mxu0
        %v2328 = vadd.f32 %v2157, %v2323
        %2329 = vrot.lane.b32.xlu0 %v1838, 92
        %v2330 = vpop.permute.xlu0 %2329
        %2331 = vrot.lane.b32.xlu0 %v1838, 44
        %v2332 = vpop.permute.xlu0 %2331
        %v2334 = vsel %vm844, %v2330, 0
        %v2337 = vsel %vm844, %v2332, 0
        %2339 = vmatprep.subr.bf16.mxu0 0
        %2340 = vmatpush1.bf16.xpose.msra.mxu0 %v2337
        %2341 = vmatprep.subr.bf16.mxu0 0
        %2342 = vmatpush1.bf16.xpose.msra.mxu0 0
        %2343 = vmatprep.subr.bf16.mxu0 0
        %2344 = vmatpush1.bf16.xpose.msra.mxu0 0
        %2345 = vmatprep.subr.bf16.mxu0 0
        %2346 = vmatpush1.bf16.xpose.msra.mxu0 0
        %2347 = vmatprep.subr.bf16.mxu0 0
        %2348 = vmatpush1.bf16.xpose.msra.mxu0 0
        %2349 = vmatprep.subr.bf16.mxu0 0
        %2350 = vmatpush1.bf16.xpose.msra.mxu0 0
        %2351 = vmatprep.subr.bf16.mxu0 0
        %2352 = vmatpush1.bf16.xpose.msra.mxu0 0
        %2353 = vmatprep.subr.bf16.mxu0 0
        %2354 = vmatpush1.bf16.xpose.msra.mxu0 0
        %2355 = vmatprep.subr.bf16.mxu0 0
        %2356 = vmatpush1.bf16.xpose.msra.mxu0 0
        %2357 = vmatprep.subr.bf16.mxu0 0
        %2358 = vmatpush1.bf16.xpose.msra.mxu0 0
        %2359 = vmatprep.subr.bf16.mxu0 0
        %2360 = vmatpush1.bf16.xpose.msra.mxu0 0
        %2361 = vmatprep.subr.bf16.mxu0 0
        %2362 = vmatpush1.bf16.xpose.msra.mxu0 0
        %2363 = vmatprep.subr.bf16.mxu0 0
        %2364 = vmatpush1.bf16.xpose.msra.mxu0 0
        %2365 = vmatprep.subr.bf16.mxu0 0
        %2366 = vmatpush1.bf16.xpose.msra.mxu0 0
        %2367 = vmatprep.subr.bf16.mxu0 0
        %2368 = vmatpush1.bf16.xpose.msra.mxu0 0
        %2369 = vmatprep.subr.bf16.mxu0 0
        %2370 = vmatpush1.bf16.xpose.msra.mxu0 0
        %2371 = vmatprep.mubr.bf16.mxu0 0
        %2372 = vmatmul.mubr.bf16.gmra.mrb[0].mxu0 %v2334
        %v2373 = vpop.f32.mrb[0].mxu0
        %v2374 = vadd.f32 %v839, %v2373
        %v2375 = vpop.f32.mrb[0].mxu0
        %v2376 = vpop.f32.mrb[0].mxu0
        %v2377 = vpop.f32.mrb[0].mxu0
        %2378 = vdwg.mxu0
        %v2379 = vsel %vm891, %v2374, -inf
        %2380 = vmax.xlane.f32.xlu0 %v2379
        %v2381 = vpop.xlane.xlu0 %2380
        %v2382 = vsub.f32 %v2374, %v2381
        %v2383 = vmul.f32 %v2382, 1.442695
        %v2384 = vpow.pop %v2383
        %v2385 = vsel %vm891, %v2384, 0.0
        %2386 = vadd.xlane.f32.xlu0 %v2385
        %v2387 = vpop.xlane.xlu0 %2386
        %v2388 = vrcp.pop %v2387
        %v2389 = vmul.f32 %v2384, %v2388
        %v2390 = vpack.c.bf16 %v2389, %v2389
        %2391 = vrot.lane.b32.xlu0 %v1839, 124
        %v2392 = vpop.permute.xlu0 %2391
        %v2394 = vsel %vm891, %v2390, 0
        %v2397 = vsel %vm909, %v2392, 0
        %2399 = vmatprep.subr.bf16.mxu0 0
        %2400 = vmatpush1.bf16.msra.mxu0 %v2397
        %2401 = vmatprep.subr.bf16.mxu0 0
        %2402 = vmatpush1.bf16.msra.mxu0 0
        %2403 = vmatprep.subr.bf16.mxu0 0
        %2404 = vmatpush1.bf16.msra.mxu0 0
        %2405 = vmatprep.subr.bf16.mxu0 0
        %2406 = vmatpush1.bf16.msra.mxu0 0
        %2407 = vmatprep.subr.bf16.mxu0 0
        %2408 = vmatpush1.bf16.msra.mxu0 0
        %2409 = vmatprep.subr.bf16.mxu0 0
        %2410 = vmatpush1.bf16.msra.mxu0 0
        %2411 = vmatprep.subr.bf16.mxu0 0
        %2412 = vmatpush1.bf16.msra.mxu0 0
        %2413 = vmatprep.subr.bf16.mxu0 0
        %2414 = vmatpush1.bf16.msra.mxu0 0
        %2415 = vmatprep.subr.bf16.mxu0 0
        %2416 = vmatpush1.bf16.msra.mxu0 0
        %2417 = vmatprep.subr.bf16.mxu0 0
        %2418 = vmatpush1.bf16.msra.mxu0 0
        %2419 = vmatprep.subr.bf16.mxu0 0
        %2420 = vmatpush1.bf16.msra.mxu0 0
        %2421 = vmatprep.subr.bf16.mxu0 0
        %2422 = vmatpush1.bf16.msra.mxu0 0
        %2423 = vmatprep.subr.bf16.mxu0 0
        %2424 = vmatpush1.bf16.msra.mxu0 0
        %2425 = vmatprep.subr.bf16.mxu0 0
        %2426 = vmatpush1.bf16.msra.mxu0 0
        %2427 = vmatprep.subr.bf16.mxu0 0
        %2428 = vmatpush1.bf16.msra.mxu0 0
        %2429 = vmatprep.subr.bf16.mxu0 0
        %2430 = vmatpush1.bf16.msra.mxu0 0
        %2431 = vmatprep.mubr.bf16.mxu0 0
        %2432 = vmatmul.mubr.bf16.gmra.mrb[0].mxu0 %v2394
        %v2433 = vpop.f32.mrb[0].mxu0
        %v2434 = vadd.f32 0.0, %v2433
        %v2435 = vpop.f32.mrb[0].mxu0
        %v2436 = vpop.f32.mrb[0].mxu0
        %v2437 = vpop.f32.mrb[0].mxu0
        %2438 = vdwg.mxu0
        %v2439 = vpack.c.bf16 %v2434, %v2434
        %v2441 = vunpack.c.l.b16 %v1725
        %v2442 = vpack.c.b16 %v2441, %v2280
        %v2443 = vrot.slane %v2442, 2
        %v2445 = vsel %vm844, %v2439, 0
        %v2448 = vsel %vm1074, %v2443, 0
        %2450 = vmatprep.subr.bf16.mxu0 0
        %2451 = vmatpush1.bf16.msra.mxu0 %v2448
        %2452 = vmatprep.subr.bf16.mxu0 0
        %2453 = vmatpush1.bf16.msra.mxu0 0
        %2454 = vmatprep.subr.bf16.mxu0 0
        %2455 = vmatpush1.bf16.msra.mxu0 0
        %2456 = vmatprep.subr.bf16.mxu0 0
        %2457 = vmatpush1.bf16.msra.mxu0 0
        %2458 = vmatprep.subr.bf16.mxu0 0
        %2459 = vmatpush1.bf16.msra.mxu0 0
        %2460 = vmatprep.subr.bf16.mxu0 0
        %2461 = vmatpush1.bf16.msra.mxu0 0
        %2462 = vmatprep.subr.bf16.mxu0 0
        %2463 = vmatpush1.bf16.msra.mxu0 0
        %2464 = vmatprep.subr.bf16.mxu0 0
        %2465 = vmatpush1.bf16.msra.mxu0 0
        %2466 = vmatprep.subr.bf16.mxu0 0
        %2467 = vmatpush1.bf16.msra.mxu0 0
        %2468 = vmatprep.subr.bf16.mxu0 0
        %2469 = vmatpush1.bf16.msra.mxu0 0
        %2470 = vmatprep.subr.bf16.mxu0 0
        %2471 = vmatpush1.bf16.msra.mxu0 0
        %2472 = vmatprep.subr.bf16.mxu0 0
        %2473 = vmatpush1.bf16.msra.mxu0 0
        %2474 = vmatprep.subr.bf16.mxu0 0
        %2475 = vmatpush1.bf16.msra.mxu0 0
        %2476 = vmatprep.subr.bf16.mxu0 0
        %2477 = vmatpush1.bf16.msra.mxu0 0
        %2478 = vmatprep.subr.bf16.mxu0 0
        %2479 = vmatpush1.bf16.msra.mxu0 0
        %2480 = vmatprep.subr.bf16.mxu0 0
        %2481 = vmatpush1.bf16.msra.mxu0 0
        %2482 = vmatprep.mubr.bf16.mxu0 0
        %2483 = vmatmul.mubr.bf16.gmra.mrb[0].mxu0 %v2445
        %v2484 = vpop.f32.mrb[0].mxu0
        %v2485 = vadd.f32 0.0, %v2484
        %v2486 = vpop.f32.mrb[0].mxu0
        %v2487 = vpop.f32.mrb[0].mxu0
        %v2488 = vpop.f32.mrb[0].mxu0
        %2489 = vdwg.mxu0
        %v2490 = vadd.f32 %v2328, %v2485
        %v2491 = vadd.f32 %v1709, %v2490
        %v2492 = vlaneseq
        %v2493 = vshrl.u32 %v2492, 7
        %v2494 = vsub.s32 0, %v2493
        %v2495 = vrot.slane %v1751, %v2494
        %v2496 = vadd.f32 %v2491, %v2495
        %v2497 = vsel %vm685, %v2496, 0.0
        %2498 = vadd.xlane.f32.xlu0 %v2497
        %v2499 = vpop.xlane.xlu0 %2498
        %v2500 = vmul.f32 %v2499, %v689
        %v2501 = vsub.f32 %v2496, %v2500
        %v2502 = vmul.f32 %v2501, %v2501
        %v2503 = vsel %vm685, %v2502, 0.0
        %2504 = vadd.xlane.f32.xlu0 %v2503
        %v2505 = vpop.xlane.xlu0 %2504
        %v2506 = vmul.f32 %v2505, %v689
        %v2507 = vadd.f32 %v2506, 1e-05
        %v2508 = vrsqrt.pop %v2507
        %v2509 = vmul.f32 %v2501, %v2508
        %v2510 = vlaneseq
        %v2511 = vshrl.u32 %v2510, 7
        %v2512 = vsub.s32 1, %v2511
        %v2513 = vrot.slane %v1751, %v2512
        %v2514 = vmul.f32 %v2509, %v2513
        %v2515 = vlaneseq
        %v2516 = vshrl.u32 %v2515, 7
        %v2517 = vsub.s32 2, %v2516
        %v2518 = vrot.slane %v1751, %v2517
        %v2519 = vadd.f32 %v2514, %v2518
        %v2520 = vpack.c.bf16 %v2519, %v2519
        %v2521 = vlaneseq
        %v2522 = vshrl.u32 %v2521, 7
        %v2523 = vsub.s32 3, %v2522
        %v2524 = vrot.slane %v1751, %v2523
        %v2531 = vunpack.c.l.b16 %v1727
        %v2532 = vunpack.c.l.b16 %v1728
        %v2533 = vunpack.c.l.b16 %v1729
        %v2534 = vunpack.c.l.b16 %v1730
        %v2535 = vunpack.c.l.b16 %v1731
        %v2536 = vunpack.c.l.b16 %v1732
        %v2537 = vpack.c.b16 %v2532, %v2531
        %v2538 = vpack.c.b16 %v2534, %v2533
        %v2539 = vpack.c.b16 %v2536, %v2535
        %v2544 = vsel %vm685, %v2520, 0
        %2546 = vmatprep.subr.bf16.mxu0 0
        %2547 = vmatpush1.bf16.msra.mxu0 %v2537
        %2548 = vmatprep.subr.bf16.mxu0 0
        %2549 = vmatpush1.bf16.msra.mxu0 %v2538
        %2550 = vmatprep.subr.bf16.mxu0 0
        %2551 = vmatpush1.bf16.msra.mxu0 %v2539
        %2552 = vmatprep.subr.bf16.mxu0 0
        %2553 = vmatpush1.bf16.msra.mxu0 0
        %2554 = vmatprep.subr.bf16.mxu0 0
        %2555 = vmatpush1.bf16.msra.mxu0 0
        %2556 = vmatprep.subr.bf16.mxu0 0
        %2557 = vmatpush1.bf16.msra.mxu0 0
        %2558 = vmatprep.subr.bf16.mxu0 0
        %2559 = vmatpush1.bf16.msra.mxu0 0
        %2560 = vmatprep.subr.bf16.mxu0 0
        %2561 = vmatpush1.bf16.msra.mxu0 0
        %2562 = vmatprep.subr.bf16.mxu0 0
        %2563 = vmatpush1.bf16.msra.mxu0 0
        %2564 = vmatprep.subr.bf16.mxu0 0
        %2565 = vmatpush1.bf16.msra.mxu0 0
        %2566 = vmatprep.subr.bf16.mxu0 0
        %2567 = vmatpush1.bf16.msra.mxu0 0
        %2568 = vmatprep.subr.bf16.mxu0 0
        %2569 = vmatpush1.bf16.msra.mxu0 0
        %2570 = vmatprep.subr.bf16.mxu0 0
        %2571 = vmatpush1.bf16.msra.mxu0 0
        %2572 = vmatprep.subr.bf16.mxu0 0
        %2573 = vmatpush1.bf16.msra.mxu0 0
        %2574 = vmatprep.subr.bf16.mxu0 0
        %2575 = vmatpush1.bf16.msra.mxu0 0
        %2576 = vmatprep.subr.bf16.mxu0 0
        %2577 = vmatpush1.bf16.msra.mxu0 0
        %2578 = vmatprep.mubr.bf16.mxu0 0
        %2579 = vmatmul.mubr.bf16.gmra.mrb[0].mxu0 %v2544
        %v2580 = vpop.f32.mrb[0].mxu0
        %v2581 = vadd.f32 %v2524, %v2580
        %v2582 = vpop.f32.mrb[0].mxu0
        %v2583 = vpop.f32.mrb[0].mxu0
        %v2584 = vpop.f32.mrb[0].mxu0
        %2585 = vdwg.mxu0
        %v2586 = vmax.f32 %v2581, 0.0
        %v2587 = vpack.c.bf16 %v2586, %v2586
        %v2588 = vlaneseq
        %v2589 = vshrl.u32 %v2588, 7
        %v2590 = vsub.s32 4, %v2589
        %v2591 = vrot.slane %v1751, %v2590
        %v2608 = vunpack.c.l.b16 %v1734
        %v2609 = vunpack.c.l.b16 %v1735
        %v2610 = vunpack.c.l.b16 %v1736
        %v2611 = vunpack.c.l.b16 %v1737
        %v2612 = vunpack.c.l.b16 %v1738
        %v2613 = vunpack.c.l.b16 %v1739
        %v2614 = vunpack.c.l.b16 %v1740
        %v2615 = vunpack.c.l.b16 %v1741
        %v2616 = vunpack.c.l.b16 %v1742
        %v2617 = vunpack.c.l.b16 %v1743
        %v2618 = vunpack.c.l.b16 %v1744
        %v2619 = vunpack.c.l.b16 %v1745
        %v2620 = vunpack.c.l.b16 %v1746
        %v2621 = vunpack.c.l.b16 %v1747
        %v2622 = vunpack.c.l.b16 %v1748
        %v2623 = vunpack.c.l.b16 %v1749
        %v2624 = vpack.c.b16 %v2609, %v2608
        %v2625 = vpack.c.b16 %v2611, %v2610
        %v2626 = vpack.c.b16 %v2613, %v2612
        %v2627 = vpack.c.b16 %v2615, %v2614
        %v2628 = vpack.c.b16 %v2617, %v2616
        %v2629 = vpack.c.b16 %v2619, %v2618
        %v2630 = vpack.c.b16 %v2621, %v2620
        %v2631 = vpack.c.b16 %v2623, %v2622
        %2640 = vmatprep.subr.bf16.mxu0 0
        %2641 = vmatpush1.bf16.msra.mxu0 %v2624
        %2642 = vmatprep.subr.bf16.mxu0 0
        %2643 = vmatpush1.bf16.msra.mxu0 %v2625
        %2644 = vmatprep.subr.bf16.mxu0 0
        %2645 = vmatpush1.bf16.msra.mxu0 %v2626
        %2646 = vmatprep.subr.bf16.mxu0 0
        %2647 = vmatpush1.bf16.msra.mxu0 %v2627
        %2648 = vmatprep.subr.bf16.mxu0 0
        %2649 = vmatpush1.bf16.msra.mxu0 %v2628
        %2650 = vmatprep.subr.bf16.mxu0 0
        %2651 = vmatpush1.bf16.msra.mxu0 %v2629
        %2652 = vmatprep.subr.bf16.mxu0 0
        %2653 = vmatpush1.bf16.msra.mxu0 %v2630
        %2654 = vmatprep.subr.bf16.mxu0 0
        %2655 = vmatpush1.bf16.msra.mxu0 %v2631
        %2656 = vmatprep.subr.bf16.mxu0 0
        %2657 = vmatpush1.bf16.msra.mxu0 0
        %2658 = vmatprep.subr.bf16.mxu0 0
        %2659 = vmatpush1.bf16.msra.mxu0 0
        %2660 = vmatprep.subr.bf16.mxu0 0
        %2661 = vmatpush1.bf16.msra.mxu0 0
        %2662 = vmatprep.subr.bf16.mxu0 0
        %2663 = vmatpush1.bf16.msra.mxu0 0
        %2664 = vmatprep.subr.bf16.mxu0 0
        %2665 = vmatpush1.bf16.msra.mxu0 0
        %2666 = vmatprep.subr.bf16.mxu0 0
        %2667 = vmatpush1.bf16.msra.mxu0 0
        %2668 = vmatprep.subr.bf16.mxu0 0
        %2669 = vmatpush1.bf16.msra.mxu0 0
        %2670 = vmatprep.subr.bf16.mxu0 0
        %2671 = vmatpush1.bf16.msra.mxu0 0
        %2672 = vmatprep.mubr.bf16.mxu0 0
        %2673 = vmatmul.mubr.bf16.gmra.mrb[0].mxu0 %v2587
        %v2674 = vpop.f32.mrb[0].mxu0
        %v2675 = vadd.f32 %v2591, %v2674
        %v2676 = vpop.f32.mrb[0].mxu0
        %v2677 = vpop.f32.mrb[0].mxu0
        %v2678 = vpop.f32.mrb[0].mxu0
        %2679 = vdwg.mxu0
        %v2680 = vadd.f32 %v2519, %v2675
        %v2681 = vsel %vm685, %v2680, 0.0
        %2682 = vadd.xlane.f32.xlu0 %v2681
        %v2683 = vpop.xlane.xlu0 %2682
        %v2684 = vmul.f32 %v2683, %v689
        %v2685 = vsub.f32 %v2680, %v2684
        %v2686 = vmul.f32 %v2685, %v2685
        %v2687 = vsel %vm685, %v2686, 0.0
        %2688 = vadd.xlane.f32.xlu0 %v2687
        %v2689 = vpop.xlane.xlu0 %2688
        %v2690 = vmul.f32 %v2689, %v689
        %v2691 = vadd.f32 %v2690, 1e-05
        %v2692 = vrsqrt.pop %v2691
        %v2693 = vmul.f32 %v2685, %v2692
        %v2694 = vlaneseq
        %v2695 = vshrl.u32 %v2694, 7
        %v2696 = vsub.s32 5, %v2695
        %v2697 = vrot.slane %v1751, %v2696
        %v2698 = vmul.f32 %v2693, %v2697
        %v2699 = vlaneseq
        %v2700 = vshrl.u32 %v2699, 7
        %v2701 = vsub.s32 6, %v2700
        %v2702 = vrot.slane %v1751, %v2701
        %v2703 = vadd.f32 %v2698, %v2702
        %2704 = vst.msk [vmem:[%s433] sm:$0xff] %vm685, %v2703
        %vm2705 = vcmp.eq.f32.partialorder %v710, 0.0
        %v2706 = vsel %vm2705, 1, 0
        %v2707 = vcvt.s32.f32 %v2706
        %vm2708 = vcmask 57344
        %v2709 = vsel %vm2708, %v2707, 0.0
        %2710 = vadd.xlane.f32.xlu0 %v2709
        %v2711 = vpop.xlane.xlu0 %2710
        %v2712 = vmax.f32 %v2711, 1e-06
        %v2713 = vpack.c.bf16 %v2707, %v2707
        %v2714 = vpack.c.bf16 %v2703, %v2703
        %v2716 = vsel %vm891, %v2713, 0
        %v2719 = vsel %vm909, %v2714, 0
        %2721 = vmatprep.subr.bf16.mxu0 0
        %2722 = vmatpush1.bf16.msra.mxu0 %v2719
        %2723 = vmatprep.subr.bf16.mxu0 0
        %2724 = vmatpush1.bf16.msra.mxu0 0
        %2725 = vmatprep.subr.bf16.mxu0 0
        %2726 = vmatpush1.bf16.msra.mxu0 0
        %2727 = vmatprep.subr.bf16.mxu0 0
        %2728 = vmatpush1.bf16.msra.mxu0 0
        %2729 = vmatprep.subr.bf16.mxu0 0
        %2730 = vmatpush1.bf16.msra.mxu0 0
        %2731 = vmatprep.subr.bf16.mxu0 0
        %2732 = vmatpush1.bf16.msra.mxu0 0
        %2733 = vmatprep.subr.bf16.mxu0 0
        %2734 = vmatpush1.bf16.msra.mxu0 0
        %2735 = vmatprep.subr.bf16.mxu0 0
        %2736 = vmatpush1.bf16.msra.mxu0 0
        %2737 = vmatprep.subr.bf16.mxu0 0
        %2738 = vmatpush1.bf16.msra.mxu0 0
        %2739 = vmatprep.subr.bf16.mxu0 0
        %2740 = vmatpush1.bf16.msra.mxu0 0
        %2741 = vmatprep.subr.bf16.mxu0 0
        %2742 = vmatpush1.bf16.msra.mxu0 0
        %2743 = vmatprep.subr.bf16.mxu0 0
        %2744 = vmatpush1.bf16.msra.mxu0 0
        %2745 = vmatprep.subr.bf16.mxu0 0
        %2746 = vmatpush1.bf16.msra.mxu0 0
        %2747 = vmatprep.subr.bf16.mxu0 0
        %2748 = vmatpush1.bf16.msra.mxu0 0
        %2749 = vmatprep.subr.bf16.mxu0 0
        %2750 = vmatpush1.bf16.msra.mxu0 0
        %2751 = vmatprep.subr.bf16.mxu0 0
        %2752 = vmatpush1.bf16.msra.mxu0 0
        %2753 = vmatprep.mubr.bf16.mxu0 0
        %2754 = vmatmul.mubr.bf16.gmra.mrb[0].mxu0 %v2716
        %v2755 = vpop.f32.mrb[0].mxu0
        %v2756 = vadd.f32 0.0, %v2755
        %v2757 = vpop.f32.mrb[0].mxu0
        %v2758 = vpop.f32.mrb[0].mxu0
        %v2759 = vpop.f32.mrb[0].mxu0
        %2760 = vdwg.mxu0
        %v2761 = vrcp.pop %v2712
        %v2762 = vmul.f32 %v2756, %v2761
        %vm2763 = vcmask 385024
        %2764 = vst.msk [vmem:[%s439] sm:$0x1] %vm2763, %v2762
        %s2765 = sand.u32 %s240, 1
        %s2766 = scalar_lea.sflag [#allocation4], %s2765
        %s2767 = sand.u32 %s240, 1
        %s2768 = smul.addr %s2767, 8
        %s2769 = scalar_lea.vmem [#allocation10], %s2768
        %s2770 = sand.u32 %s266, 1
        %s2771 = scalar_lea.sflag [#allocation12], %s2770
        %s2772 = sand.u32 %s266, 1
        %s2773 = scalar_lea.vmem [#allocation11], %s2772
        // Predicated region
        $region73: #{tpu_custom_call.1} parent=55 // pred_check
          %p2774 = pneg %p250
        $region74: #{tpu_custom_call.1} parent=55 // pred_check_branch
          %2776 = sbr.rel (%p2774) target = $region76
        $region75: #{tpu_custom_call.1} parent=55 // pred_region
          %s2778 = ssub.s32 128, 128
          %2779 = vsyncadd %s2766, %s2778
          %s2780 = smul.addr %s33, 128
          %s2781 = scalar_lea.hbm %s9, %s2780
          %s2783 = sshll.u32 %s2769, 4
          %s2784 = int_to_ptr.vmem [resolvable:$true] %s2783
          %2786 = dma.vmem_to_hbm [thread:$0]  %s2784, 128, %s2781, %s2766
        $region76: #{tpu_custom_call.1} parent=55 // pred_fallthru
          _
        // Predicated region
        $region77: #{tpu_custom_call.1} parent=55 // pred_check
          %p2787 = pneg %p276
        $region78: #{tpu_custom_call.1} parent=55 // pred_check_branch
          %2789 = sbr.rel (%p2787) target = $region80
        $region79: #{tpu_custom_call.1} parent=55 // pred_region
          %s2791 = ssub.s32 16, 16
          %2792 = vsyncadd %s2771, %s2791
          %s2793 = smul.addr %s33, 16
          %s2794 = scalar_lea.hbm %s10, %s2793
          %s2796 = sshll.u32 %s2773, 4
          %s2797 = int_to_ptr.vmem [resolvable:$true] %s2796
          %2799 = dma.vmem_to_hbm [thread:$0]  %s2797, 16, %s2794, %s2771
        $region80: #{tpu_custom_call.1} parent=55 // pred_fallthru
          _
      $region56: #{tpu_custom_call.1} parent=5 // pred_fallthru
        _
      %p2800 = scmp.le.s32.totalorder 2, %s28
      // Predicated region
      $region81: #{tpu_custom_call.1} parent=5 // pred_check
        %p2801 = pneg %p2800
      $region82: #{tpu_custom_call.1} parent=5 // pred_check_branch
        %2803 = sbr.rel (%p2801) target = $region84
      $region83: #{tpu_custom_call.1} parent=5 // pred_region
        %s2804 = ssub.s32 %s28, 2
        // Predicated region
        $region85: #{tpu_custom_call.1} parent=83 // pred_check
          %p2805 = pneg %p256
        $region86: #{tpu_custom_call.1} parent=83 // pred_check_branch
          %2807 = sbr.rel (%p2805) target = $region88
        $region87: #{tpu_custom_call.1} parent=83 // pred_region
          %s2808 = sand.u32 %s241, 1
          %s2809 = scalar_lea.sflag [#allocation4], %s2808
          %s2810 = sand.u32 %s241, 1
          %s2811 = smul.addr %s2810, 8
          %s2812 = scalar_lea.vmem [#allocation10], %s2811
          %2813 = dma.done %s2809, 128
        $region88: #{tpu_custom_call.1} parent=83 // pred_fallthru
          _
        // Predicated region
        $region89: #{tpu_custom_call.1} parent=83 // pred_check
          %p2814 = pneg %p282
        $region90: #{tpu_custom_call.1} parent=83 // pred_check_branch
          %2816 = sbr.rel (%p2814) target = $region92
        $region91: #{tpu_custom_call.1} parent=83 // pred_region
          %s2817 = sand.u32 %s267, 1
          %s2818 = scalar_lea.sflag [#allocation12], %s2817
          %s2819 = sand.u32 %s267, 1
          %s2820 = scalar_lea.vmem [#allocation11], %s2819
          %2821 = dma.done %s2818, 16
        $region92: #{tpu_custom_call.1} parent=83 // pred_fallthru
          _
      $region84: #{tpu_custom_call.1} parent=5 // pred_fallthru
        _
    $region6: #{tpu_custom_call.1} parent=1 // loop_footer
      %s32 = sadd.s32 1, %s28
    $region7: #{tpu_custom_call.1} parent=1 // loop_footer_branch
      %27 = sbr.rel target = $region3
    $region8: #{tpu_custom_call.1} parent=1 // loop_exit
      _
    %2822 = vsyncpa [#allocation3], 1
    %s2823 = scalar_lea.sflag [#allocation3], 1
    %2824 = vsyncpa %s2823, 1
    %2825 = vsyncpa [#allocation6], 1
    %2826 = vsyncpa [#allocation9], 1
    %2827 = vsyncpa [#allocation4], 1
    %s2828 = scalar_lea.sflag [#allocation4], 1
    %2829 = vsyncpa %s2828, 1
    %2830 = vsyncpa [#allocation12], 1
    %s2831 = scalar_lea.sflag [#allocation12], 1
    %2832 = vsyncpa %s2831, 1

</llo_original>
